<compile_context>
chip_gen: v6e
topology: v6e:2x2x1
jax: 0.10.0
libtpu: 0.0.40
codegen_flags: <defaults>
</compile_context>

<pallas_src>
import functools

import numpy as np
import jax
import jax.numpy as jnp
from jax import lax
from jax.experimental import pallas as pl
from jax.experimental.pallas import tpu as pltpu

NEG_SLOPE = 0.2
_TAPS = tuple((dh, dw) for dh in (-1, 0, 1) for dw in (-1, 0, 1))


def _leaky(v):
    return jnp.where(v >= 0, v, NEG_SLOPE * v)


# ----------------------------------------------------------------------------
# Pallas kernel: Bt images per grid step, whole forward fused.
# Activations live as (C, H*W) per image: lane-dense, H*W a multiple of 128.
# ----------------------------------------------------------------------------
def _feature_extraction_kernel(x_ref, mask_ref, w1_ref, w2_ref, w4_ref,
                               ha_ref, hb_ref, sf_ref, hf_ref, b4_ref,
                               out_ref, patches_ref, *, W, Bt, mm_dtype):
    C = x_ref.shape[1]
    HW = x_ref.shape[2]

    # Hoist grid/tap-invariant loads once (reused across 3 convs and Bt images).
    masks = [mask_ref[t] for t in range(9)]          # each (1, HW), f32
    ha = ha_ref[...]
    hb = hb_ref[...]
    sfv = sf_ref[...]
    hfv = hf_ref[...]
    b4 = b4_ref[...]

    def conv3x3(acts, wmat):
        # im2col via XLU rolls of the flattened (h*W + w) lane axis.
        # For tap (dh, dw), the source pixel of lane l = h*W + w is lane l + dh*W + dw
        # whenever (h+dh, w+dw) is inside the image; the per-tap mask zeroes every
        # out-of-bounds lane, so roll wraparound never leaks into the sum.
        for b in range(Bt):
            v = acts[b]                              # (C, HW) f32
            for t, (dh, dw) in enumerate(_TAPS):
                shift = (-(dh * W + dw)) % HW        # win[:, l] = v[:, l + dh*W + dw]
                win = pltpu.roll(v, shift, axis=1) if shift else v
                if dh != 0 or dw != 0:
                    win = win * masks[t]             # (1, HW) sublane-broadcast
                # Direct store into persistent patches scratch (no concatenate temp).
                patches_ref[t * C:(t + 1) * C, b * HW:(b + 1) * HW] = win.astype(mm_dtype)
        # One MXU matmul per conv: K = 9*C, N = Bt*HW (f32 accumulation).
        return jnp.dot(wmat, patches_ref[...], preferred_element_type=jnp.float32)

    xs = [x_ref[b] for b in range(Bt)]

    # _Res_Blocka #1: LeakyReLU(BN_a(conv1(x))) + x
    #   (BN scale folded into W1 rows on host; conv bias folded into ha.)
    c1 = conv3x3(xs, w1_ref[...])
    ys = [_leaky(c1[:, b * HW:(b + 1) * HW] + ha) + xs[b] for b in range(Bt)]

    # _Res_Blocka #2 (same folding), then FeatureExtraction.bn1 applied as z*sf + hf.
    c2 = conv3x3(ys, w2_ref[...])
    zs = [(_leaky(c2[:, b * HW:(b + 1) * HW] + hb) + ys[b]) * sfv + hfv
          for b in range(Bt)]

    # Head: conv4 (+ bias) -> LeakyReLU.
    c3 = conv3x3(zs, w4_ref[...])
    for b in range(Bt):
        out_ref[b] = _leaky(c3[:, b * HW:(b + 1) * HW] + b4).astype(out_ref.dtype)


# ----------------------------------------------------------------------------
# Host-side glue: weight_norm + BN/bias folding, layout prep, pallas_call.
# ----------------------------------------------------------------------------
def _weight_norm_hwio(v, g):
    # PyTorch weight_norm with default dim=0: w = g * v / ||v|| per output channel.
    norm = jnp.sqrt(jnp.sum(v * v, axis=(1, 2, 3), keepdims=True))
    w = v * (g.reshape(-1, 1, 1, 1) / norm)                      # (Cout, Cin, 3, 3)
    return jnp.transpose(w, (2, 3, 1, 0)).astype(jnp.float32)    # (3, 3, Cin, Cout)


def _as_matmul_weight(w_hwio):
    kh, kw, cin, cout = w_hwio.shape
    # K ordering (kh, kw, cin) matches the kernel's tap/patch-row ordering.
    return jnp.transpose(w_hwio.reshape(kh * kw * cin, cout))    # (Cout, 9*Cin)


def _fold_bn(gamma, beta, mean, var, eps=1e-5):
    scale = gamma / jnp.sqrt(var + eps)
    shift = beta - mean * scale
    return scale.astype(jnp.float32), shift.astype(jnp.float32)


def _tap_masks(H, W):
    # Per-tap validity mask over the flattened h*W+w axis (1.0 valid, 0.0 zero-pad).
    h = np.arange(H).reshape(H, 1)
    w = np.arange(W).reshape(1, W)
    rows = []
    for dh in (-1, 0, 1):
        for dw in (-1, 0, 1):
            ok = (h + dh >= 0) & (h + dh < H) & (w + dw >= 0) & (w + dw < W)
            rows.append(np.broadcast_to(ok, (H, W)).reshape(H * W))
    return jnp.asarray(np.stack(rows).astype(np.float32)[:, None, :])   # (9, 1, H*W)


def _pick_block_images(B, cap=8):
    bt = min(B, cap)
    while B % bt:
        bt -= 1
    return bt


def feature_extraction_forward(x_nchw, params, *, matmul_dtype=jnp.float32,
                               block_images=None):
    x = x_nchw.astype(jnp.float32)
    B, C, H, W = x.shape
    HW = H * W
    Bt = block_images if block_images is not None else _pick_block_images(B)
    assert B % Bt == 0, (B, Bt)
    xf = x.reshape(B, C, HW)          # per-image CHW kept flat: lane dim = H*W (dense)

    w1 = _as_matmul_weight(_weight_norm_hwio(params["conv1_v"], params["conv1_g"]))
    w2 = _as_matmul_weight(_weight_norm_hwio(params["conv2_v"], params["conv2_g"]))
    w4 = _as_matmul_weight(_weight_norm_hwio(params["conv4_v"], params["conv4_g"]))

    sa, ta = _fold_bn(*params["bn_a"])
    sb, tb = _fold_bn(*params["bn_b"])
    sf, hf = _fold_bn(*params["bn_fe"])

    # Exact folds: sa*(W1@p + b1) + ta == (diag(sa) W1)@p + (sa*b1 + ta)   (same for #2).
    w1 = (sa[:, None] * w1).astype(matmul_dtype)
    w2 = (sb[:, None] * w2).astype(matmul_dtype)
    w4 = w4.astype(matmul_dtype)
    ha = sa * params["conv1_b"].astype(jnp.float32) + ta
    hb = sb * params["conv2_b"].astype(jnp.float32) + tb
    b4 = params["conv4_b"].astype(jnp.float32)

    col = lambda v: v.reshape(C, 1).astype(jnp.float32)
    masks = _tap_masks(H, W)

    img_spec = pl.BlockSpec((Bt, C, HW), lambda i: (i, 0, 0))
    msk_spec = pl.BlockSpec((9, 1, HW), lambda i: (0, 0, 0))
    w_spec = pl.BlockSpec((C, 9 * C), lambda i: (0, 0))
    v_spec = pl.BlockSpec((C, 1), lambda i: (0, 0))

    out = pl.pallas_call(
        functools.partial(_feature_extraction_kernel, W=W, Bt=Bt,
                          mm_dtype=matmul_dtype),
        out_shape=jax.ShapeDtypeStruct((B, C, HW), jnp.float32),
        grid=(B // Bt,),
        in_specs=[img_spec, msk_spec, w_spec, w_spec, w_spec,
                  v_spec, v_spec, v_spec, v_spec, v_spec],
        out_specs=img_spec,
        scratch_shapes=[pltpu.VMEM((9 * C, Bt * HW), matmul_dtype)],
        # Batch blocks are independent: let Mosaic shard them across the two
        # TensorCores on v7x (harmless no-op on single-TC v5e/v6e).
        compiler_params=pltpu.CompilerParams(dimension_semantics=("parallel",)),
    )(xf, masks, w1, w2, w4, col(ha), col(hb), col(sf), col(hf), col(b4))

    return out.reshape(B, C, H, W)


# ----------------------------------------------------------------------------
# Pure-JAX reference (for correctness check)
# ----------------------------------------------------------------------------
def _conv_ref(x_nhwc, w_hwio, b):
    y = lax.conv_general_dilated(x_nhwc, w_hwio, (1, 1), "SAME",
                                 dimension_numbers=("NHWC", "HWIO", "NHWC"))
    return y + b.reshape(1, 1, 1, -1)


def feature_extraction_ref(x_nchw, params):
    x = jnp.transpose(x_nchw, (0, 2, 3, 1)).astype(jnp.float32)
    w1 = _weight_norm_hwio(params["conv1_v"], params["conv1_g"])
    w2 = _weight_norm_hwio(params["conv2_v"], params["conv2_g"])
    w4 = _weight_norm_hwio(params["conv4_v"], params["conv4_g"])
    sa, ta = _fold_bn(*params["bn_a"])
    sb, tb = _fold_bn(*params["bn_b"])
    sf, hf = _fold_bn(*params["bn_fe"])

    def bn(v, s, t):
        return v * s.reshape(1, 1, 1, -1) + t.reshape(1, 1, 1, -1)

    y = _leaky(bn(_conv_ref(x, w1, params["conv1_b"]), sa, ta)) + x
    z = _leaky(bn(_conv_ref(y, w2, params["conv2_b"]), sb, tb)) + y
    z = bn(z, sf, hf)
    o = _leaky(_conv_ref(z, w4, params["conv4_b"]))
    return jnp.transpose(o, (0, 3, 1, 2))


# ----------------------------------------------------------------------------
# Deterministic parameter init (synthetic; shapes from FeatureExtraction.__init__)
# ----------------------------------------------------------------------------
def init_params(key, numf):
    ks = list(jax.random.split(key, 21))
    it = iter(ks)

    def conv_params():
        v = 0.1 * jax.random.normal(next(it), (numf, numf, 3, 3), jnp.float32)
        g = jax.random.uniform(next(it), (numf,), jnp.float32, 0.5, 1.5)
        b = 0.1 * jax.random.normal(next(it), (numf,), jnp.float32)
        return v, g, b

    def bn_params():
        gamma = jax.random.uniform(next(it), (numf,), jnp.float32, 0.5, 1.5)
        beta = 0.1 * jax.random.normal(next(it), (numf,), jnp.float32)
        mean = 0.1 * jax.random.normal(next(it), (numf,), jnp.float32)
        var = jax.random.uniform(next(it), (numf,), jnp.float32, 0.5, 1.5)
        return gamma, beta, mean, var

    p = {}
    p["conv1_v"], p["conv1_g"], p["conv1_b"] = conv_params()  # body[0].res_conv
    p["conv2_v"], p["conv2_g"], p["conv2_b"] = conv_params()  # body[1].res_conv
    p["conv4_v"], p["conv4_g"], p["conv4_b"] = conv_params()  # conv4
    p["bn_a"] = bn_params()   # body[0].bn1
    p["bn_b"] = bn_params()   # body[1].bn1
    p["bn_fe"] = bn_params()  # FeatureExtraction.bn1
    return p


if __name__ == "__main__":
    B, numf, H, W = 2, 32, 16, 16
    key = jax.random.PRNGKey(0)
    k_x, k_p = jax.random.split(key)
    # PyTorch convention: NCHW input with in_ch == numf channels.
    x = jax.random.normal(k_x, (B, numf, H, W), jnp.float32)
    params = init_params(k_p, numf)

    ref = feature_extraction_ref(x, params)

    # f32 MXU operands: bit-for-bit comparable to the f32 reference.
    out = jax.block_until_ready(feature_extraction_forward(x, params))
    assert out.shape == (B, numf, H, W), out.shape
    max_err = float(jnp.max(jnp.abs(out - ref)))
    assert max_err < 1e-3, f"f32 max abs error {max_err}"

    # bf16 MXU operands (recommended on v6e/v7x); loose sanity tolerance only.
    out_bf16 = jax.block_until_ready(
        feature_extraction_forward(x, params, matmul_dtype=jnp.bfloat16))
    bf16_err = float(jnp.max(jnp.abs(out_bf16 - ref)))
    assert bf16_err < 0.25, f"bf16 max abs error {bf16_err}"

    print("KERNEL_OK")
</pallas_src>

<mosaic_0001>
module attributes {stable_mosaic.version = 11 : i64} {
  func.func @_feature_extraction_kernel(%arg0: i32, %arg1: memref<2x32x256xf32, #tpu.memory_space<vmem>>, %arg2: memref<9x1x256xf32, #tpu.memory_space<vmem>>, %arg3: memref<32x288xf32, #tpu.memory_space<vmem>>, %arg4: memref<32x288xf32, #tpu.memory_space<vmem>>, %arg5: memref<32x288xf32, #tpu.memory_space<vmem>>, %arg6: memref<32x1xf32, #tpu.memory_space<vmem>>, %arg7: memref<32x1xf32, #tpu.memory_space<vmem>>, %arg8: memref<32x1xf32, #tpu.memory_space<vmem>>, %arg9: memref<32x1xf32, #tpu.memory_space<vmem>>, %arg10: memref<32x1xf32, #tpu.memory_space<vmem>>, %arg11: memref<2x32x256xf32, #tpu.memory_space<vmem>>, %arg12: memref<288x512xf32, #tpu.memory_space<vmem>>) attributes {dimension_semantics = [#tpu.dimension_semantics<parallel>], iteration_bounds = array<i64: 1>, scalar_prefetch = 0 : i64, scratch_operands = 1 : i64, tpu.core_type = #tpu.core_type<tc>, window_params = [{transform_indices = @transform_0, window_bounds = array<i64: 2, 32, 256>}, {pipeline_mode = #tpu.pipeline_mode<synchronous>, transform_indices = @transform_1, window_bounds = array<i64: 9, 1, 256>}, {pipeline_mode = #tpu.pipeline_mode<synchronous>, transform_indices = @transform_2, window_bounds = array<i64: 32, 288>}, {pipeline_mode = #tpu.pipeline_mode<synchronous>, transform_indices = @transform_3, window_bounds = array<i64: 32, 288>}, {pipeline_mode = #tpu.pipeline_mode<synchronous>, transform_indices = @transform_4, window_bounds = array<i64: 32, 288>}, {pipeline_mode = #tpu.pipeline_mode<synchronous>, transform_indices = @transform_5, window_bounds = array<i64: 32, 1>}, {pipeline_mode = #tpu.pipeline_mode<synchronous>, transform_indices = @transform_6, window_bounds = array<i64: 32, 1>}, {pipeline_mode = #tpu.pipeline_mode<synchronous>, transform_indices = @transform_7, window_bounds = array<i64: 32, 1>}, {pipeline_mode = #tpu.pipeline_mode<synchronous>, transform_indices = @transform_8, window_bounds = array<i64: 32, 1>}, {pipeline_mode = #tpu.pipeline_mode<synchronous>, transform_indices = @transform_9, window_bounds = array<i64: 32, 1>}, {transform_indices = @transform_10, window_bounds = array<i64: 2, 32, 256>}]} {
    %c0 = arith.constant 0 : index
    %c0_0 = arith.constant 0 : index
    %c0_1 = arith.constant 0 : index
    %0 = vector.load %arg2[%c0, %c0_0, %c0_1] : memref<9x1x256xf32, #tpu.memory_space<vmem>>, vector<1x1x256xf32>
    %1 = vector.shape_cast %0 : vector<1x1x256xf32> to vector<1x256xf32>
    %c1 = arith.constant 1 : index
    %c0_2 = arith.constant 0 : index
    %c0_3 = arith.constant 0 : index
    %2 = vector.load %arg2[%c1, %c0_2, %c0_3] : memref<9x1x256xf32, #tpu.memory_space<vmem>>, vector<1x1x256xf32>
    %3 = vector.shape_cast %2 : vector<1x1x256xf32> to vector<1x256xf32>
    %c2 = arith.constant 2 : index
    %c0_4 = arith.constant 0 : index
    %c0_5 = arith.constant 0 : index
    %4 = vector.load %arg2[%c2, %c0_4, %c0_5] : memref<9x1x256xf32, #tpu.memory_space<vmem>>, vector<1x1x256xf32>
    %5 = vector.shape_cast %4 : vector<1x1x256xf32> to vector<1x256xf32>
    %c3 = arith.constant 3 : index
    %c0_6 = arith.constant 0 : index
    %c0_7 = arith.constant 0 : index
    %6 = vector.load %arg2[%c3, %c0_6, %c0_7] : memref<9x1x256xf32, #tpu.memory_space<vmem>>, vector<1x1x256xf32>
    %7 = vector.shape_cast %6 : vector<1x1x256xf32> to vector<1x256xf32>
    %c5 = arith.constant 5 : index
    %c0_8 = arith.constant 0 : index
    %c0_9 = arith.constant 0 : index
    %8 = vector.load %arg2[%c5, %c0_8, %c0_9] : memref<9x1x256xf32, #tpu.memory_space<vmem>>, vector<1x1x256xf32>
    %9 = vector.shape_cast %8 : vector<1x1x256xf32> to vector<1x256xf32>
    %c6 = arith.constant 6 : index
    %c0_10 = arith.constant 0 : index
    %c0_11 = arith.constant 0 : index
    %10 = vector.load %arg2[%c6, %c0_10, %c0_11] : memref<9x1x256xf32, #tpu.memory_space<vmem>>, vector<1x1x256xf32>
    %11 = vector.shape_cast %10 : vector<1x1x256xf32> to vector<1x256xf32>
    %c7 = arith.constant 7 : index
    %c0_12 = arith.constant 0 : index
    %c0_13 = arith.constant 0 : index
    %12 = vector.load %arg2[%c7, %c0_12, %c0_13] : memref<9x1x256xf32, #tpu.memory_space<vmem>>, vector<1x1x256xf32>
    %13 = vector.shape_cast %12 : vector<1x1x256xf32> to vector<1x256xf32>
    %c8 = arith.constant 8 : index
    %c0_14 = arith.constant 0 : index
    %c0_15 = arith.constant 0 : index
    %14 = vector.load %arg2[%c8, %c0_14, %c0_15] : memref<9x1x256xf32, #tpu.memory_space<vmem>>, vector<1x1x256xf32>
    %15 = vector.shape_cast %14 : vector<1x1x256xf32> to vector<1x256xf32>
    %c0_16 = arith.constant 0 : index
    %c0_17 = arith.constant 0 : index
    %16 = vector.load %arg6[%c0_16, %c0_17] : memref<32x1xf32, #tpu.memory_space<vmem>>, vector<32x1xf32>
    %c0_18 = arith.constant 0 : index
    %c0_19 = arith.constant 0 : index
    %17 = vector.load %arg7[%c0_18, %c0_19] : memref<32x1xf32, #tpu.memory_space<vmem>>, vector<32x1xf32>
    %c0_20 = arith.constant 0 : index
    %c0_21 = arith.constant 0 : index
    %18 = vector.load %arg8[%c0_20, %c0_21] : memref<32x1xf32, #tpu.memory_space<vmem>>, vector<32x1xf32>
    %c0_22 = arith.constant 0 : index
    %c0_23 = arith.constant 0 : index
    %19 = vector.load %arg9[%c0_22, %c0_23] : memref<32x1xf32, #tpu.memory_space<vmem>>, vector<32x1xf32>
    %c0_24 = arith.constant 0 : index
    %c0_25 = arith.constant 0 : index
    %20 = vector.load %arg10[%c0_24, %c0_25] : memref<32x1xf32, #tpu.memory_space<vmem>>, vector<32x1xf32>
    %c0_26 = arith.constant 0 : index
    %c0_27 = arith.constant 0 : index
    %c0_28 = arith.constant 0 : index
    %21 = vector.load %arg1[%c0_26, %c0_27, %c0_28] : memref<2x32x256xf32, #tpu.memory_space<vmem>>, vector<1x32x256xf32>
    %22 = vector.shape_cast %21 : vector<1x32x256xf32> to vector<32x256xf32>
    %c1_29 = arith.constant 1 : index
    %c0_30 = arith.constant 0 : index
    %c0_31 = arith.constant 0 : index
    %23 = vector.load %arg1[%c1_29, %c0_30, %c0_31] : memref<2x32x256xf32, #tpu.memory_space<vmem>>, vector<1x32x256xf32>
    %24 = vector.shape_cast %23 : vector<1x32x256xf32> to vector<32x256xf32>
    %c0_32 = arith.constant 0 : index
    %c0_33 = arith.constant 0 : index
    %25 = vector.load %arg3[%c0_32, %c0_33] : memref<32x288xf32, #tpu.memory_space<vmem>>, vector<32x288xf32>
    %c17_i32 = arith.constant 17 : i32
    %26 = tpu.dynamic_rotate %22 by %c17_i32 dim 1 : vector<32x256xf32>, i32 -> vector<32x256xf32>
    %27 = vector.broadcast %1 : vector<1x256xf32> to vector<32x256xf32>
    %28 = arith.mulf %26, %27 : vector<32x256xf32>
    %c0_34 = arith.constant 0 : index
    %c0_35 = arith.constant 0 : index
    %29 = vector.load %arg12[%c0_34, %c0_35] : memref<288x512xf32, #tpu.memory_space<vmem>>, vector<32x256xf32>
    tpu.vector_store %arg12[%c0_34, %c0_35], %28 {strides = array<i32>} : memref<288x512xf32, #tpu.memory_space<vmem>>, vector<32x256xf32>,
    %c16_i32 = arith.constant 16 : i32
    %30 = tpu.dynamic_rotate %22 by %c16_i32 dim 1 : vector<32x256xf32>, i32 -> vector<32x256xf32>
    %31 = vector.broadcast %3 : vector<1x256xf32> to vector<32x256xf32>
    %32 = arith.mulf %30, %31 : vector<32x256xf32>
    %c32 = arith.constant 32 : index
    %c0_36 = arith.constant 0 : index
    %33 = vector.load %arg12[%c32, %c0_36] : memref<288x512xf32, #tpu.memory_space<vmem>>, vector<32x256xf32>
    tpu.vector_store %arg12[%c32, %c0_36], %32 {strides = array<i32>} : memref<288x512xf32, #tpu.memory_space<vmem>>, vector<32x256xf32>,
    %c15_i32 = arith.constant 15 : i32
    %34 = tpu.dynamic_rotate %22 by %c15_i32 dim 1 : vector<32x256xf32>, i32 -> vector<32x256xf32>
    %35 = vector.broadcast %5 : vector<1x256xf32> to vector<32x256xf32>
    %36 = arith.mulf %34, %35 : vector<32x256xf32>
    %c64 = arith.constant 64 : index
    %c0_37 = arith.constant 0 : index
    %37 = vector.load %arg12[%c64, %c0_37] : memref<288x512xf32, #tpu.memory_space<vmem>>, vector<32x256xf32>
    tpu.vector_store %arg12[%c64, %c0_37], %36 {strides = array<i32>} : memref<288x512xf32, #tpu.memory_space<vmem>>, vector<32x256xf32>,
    %c1_i32 = arith.constant 1 : i32
    %38 = tpu.dynamic_rotate %22 by %c1_i32 dim 1 : vector<32x256xf32>, i32 -> vector<32x256xf32>
    %39 = vector.broadcast %7 : vector<1x256xf32> to vector<32x256xf32>
    %40 = arith.mulf %38, %39 : vector<32x256xf32>
    %c96 = arith.constant 96 : index
    %c0_38 = arith.constant 0 : index
    %41 = vector.load %arg12[%c96, %c0_38] : memref<288x512xf32, #tpu.memory_space<vmem>>, vector<32x256xf32>
    tpu.vector_store %arg12[%c96, %c0_38], %40 {strides = array<i32>} : memref<288x512xf32, #tpu.memory_space<vmem>>, vector<32x256xf32>,
    %c128 = arith.constant 128 : index
    %c0_39 = arith.constant 0 : index
    %42 = vector.load %arg12[%c128, %c0_39] : memref<288x512xf32, #tpu.memory_space<vmem>>, vector<32x256xf32>
    tpu.vector_store %arg12[%c128, %c0_39], %22 {strides = array<i32>} : memref<288x512xf32, #tpu.memory_space<vmem>>, vector<32x256xf32>,
    %c255_i32 = arith.constant 255 : i32
    %43 = tpu.dynamic_rotate %22 by %c255_i32 dim 1 : vector<32x256xf32>, i32 -> vector<32x256xf32>
    %44 = vector.broadcast %9 : vector<1x256xf32> to vector<32x256xf32>
    %45 = arith.mulf %43, %44 : vector<32x256xf32>
    %c160 = arith.constant 160 : index
    %c0_40 = arith.constant 0 : index
    %46 = vector.load %arg12[%c160, %c0_40] : memref<288x512xf32, #tpu.memory_space<vmem>>, vector<32x256xf32>
    tpu.vector_store %arg12[%c160, %c0_40], %45 {strides = array<i32>} : memref<288x512xf32, #tpu.memory_space<vmem>>, vector<32x256xf32>,
    %c241_i32 = arith.constant 241 : i32
    %47 = tpu.dynamic_rotate %22 by %c241_i32 dim 1 : vector<32x256xf32>, i32 -> vector<32x256xf32>
    %48 = vector.broadcast %11 : vector<1x256xf32> to vector<32x256xf32>
    %49 = arith.mulf %47, %48 : vector<32x256xf32>
    %c192 = arith.constant 192 : index
    %c0_41 = arith.constant 0 : index
    %50 = vector.load %arg12[%c192, %c0_41] : memref<288x512xf32, #tpu.memory_space<vmem>>, vector<32x256xf32>
    tpu.vector_store %arg12[%c192, %c0_41], %49 {strides = array<i32>} : memref<288x512xf32, #tpu.memory_space<vmem>>, vector<32x256xf32>,
    %c240_i32 = arith.constant 240 : i32
    %51 = tpu.dynamic_rotate %22 by %c240_i32 dim 1 : vector<32x256xf32>, i32 -> vector<32x256xf32>
    %52 = vector.broadcast %13 : vector<1x256xf32> to vector<32x256xf32>
    %53 = arith.mulf %51, %52 : vector<32x256xf32>
    %c224 = arith.constant 224 : index
    %c0_42 = arith.constant 0 : index
    %54 = vector.load %arg12[%c224, %c0_42] : memref<288x512xf32, #tpu.memory_space<vmem>>, vector<32x256xf32>
    tpu.vector_store %arg12[%c224, %c0_42], %53 {strides = array<i32>} : memref<288x512xf32, #tpu.memory_space<vmem>>, vector<32x256xf32>,
    %c239_i32 = arith.constant 239 : i32
    %55 = tpu.dynamic_rotate %22 by %c239_i32 dim 1 : vector<32x256xf32>, i32 -> vector<32x256xf32>
    %56 = vector.broadcast %15 : vector<1x256xf32> to vector<32x256xf32>
    %57 = arith.mulf %55, %56 : vector<32x256xf32>
    %c256 = arith.constant 256 : index
    %c0_43 = arith.constant 0 : index
    %58 = vector.load %arg12[%c256, %c0_43] : memref<288x512xf32, #tpu.memory_space<vmem>>, vector<32x256xf32>
    tpu.vector_store %arg12[%c256, %c0_43], %57 {strides = array<i32>} : memref<288x512xf32, #tpu.memory_space<vmem>>, vector<32x256xf32>,
    %c17_i32_44 = arith.constant 17 : i32
    %59 = tpu.dynamic_rotate %24 by %c17_i32_44 dim 1 : vector<32x256xf32>, i32 -> vector<32x256xf32>
    %60 = vector.broadcast %1 : vector<1x256xf32> to vector<32x256xf32>
    %61 = arith.mulf %59, %60 : vector<32x256xf32>
    %c0_45 = arith.constant 0 : index
    %c256_46 = arith.constant 256 : index
    %62 = vector.load %arg12[%c0_45, %c256_46] : memref<288x512xf32, #tpu.memory_space<vmem>>, vector<32x256xf32>
    tpu.vector_store %arg12[%c0_45, %c256_46], %61 {strides = array<i32>} : memref<288x512xf32, #tpu.memory_space<vmem>>, vector<32x256xf32>,
    %c16_i32_47 = arith.constant 16 : i32
    %63 = tpu.dynamic_rotate %24 by %c16_i32_47 dim 1 : vector<32x256xf32>, i32 -> vector<32x256xf32>
    %64 = vector.broadcast %3 : vector<1x256xf32> to vector<32x256xf32>
    %65 = arith.mulf %63, %64 : vector<32x256xf32>
    %c32_48 = arith.constant 32 : index
    %c256_49 = arith.constant 256 : index
    %66 = vector.load %arg12[%c32_48, %c256_49] : memref<288x512xf32, #tpu.memory_space<vmem>>, vector<32x256xf32>
    tpu.vector_store %arg12[%c32_48, %c256_49], %65 {strides = array<i32>} : memref<288x512xf32, #tpu.memory_space<vmem>>, vector<32x256xf32>,
    %c15_i32_50 = arith.constant 15 : i32
    %67 = tpu.dynamic_rotate %24 by %c15_i32_50 dim 1 : vector<32x256xf32>, i32 -> vector<32x256xf32>
    %68 = vector.broadcast %5 : vector<1x256xf32> to vector<32x256xf32>
    %69 = arith.mulf %67, %68 : vector<32x256xf32>
    %c64_51 = arith.constant 64 : index
    %c256_52 = arith.constant 256 : index
    %70 = vector.load %arg12[%c64_51, %c256_52] : memref<288x512xf32, #tpu.memory_space<vmem>>, vector<32x256xf32>
    tpu.vector_store %arg12[%c64_51, %c256_52], %69 {strides = array<i32>} : memref<288x512xf32, #tpu.memory_space<vmem>>, vector<32x256xf32>,
    %c1_i32_53 = arith.constant 1 : i32
    %71 = tpu.dynamic_rotate %24 by %c1_i32_53 dim 1 : vector<32x256xf32>, i32 -> vector<32x256xf32>
    %72 = vector.broadcast %7 : vector<1x256xf32> to vector<32x256xf32>
    %73 = arith.mulf %71, %72 : vector<32x256xf32>
    %c96_54 = arith.constant 96 : index
    %c256_55 = arith.constant 256 : index
    %74 = vector.load %arg12[%c96_54, %c256_55] : memref<288x512xf32, #tpu.memory_space<vmem>>, vector<32x256xf32>
    tpu.vector_store %arg12[%c96_54, %c256_55], %73 {strides = array<i32>} : memref<288x512xf32, #tpu.memory_space<vmem>>, vector<32x256xf32>,
    %c128_56 = arith.constant 128 : index
    %c256_57 = arith.constant 256 : index
    %75 = vector.load %arg12[%c128_56, %c256_57] : memref<288x512xf32, #tpu.memory_space<vmem>>, vector<32x256xf32>
    tpu.vector_store %arg12[%c128_56, %c256_57], %24 {strides = array<i32>} : memref<288x512xf32, #tpu.memory_space<vmem>>, vector<32x256xf32>,
    %c255_i32_58 = arith.constant 255 : i32
    %76 = tpu.dynamic_rotate %24 by %c255_i32_58 dim 1 : vector<32x256xf32>, i32 -> vector<32x256xf32>
    %77 = vector.broadcast %9 : vector<1x256xf32> to vector<32x256xf32>
    %78 = arith.mulf %76, %77 : vector<32x256xf32>
    %c160_59 = arith.constant 160 : index
    %c256_60 = arith.constant 256 : index
    %79 = vector.load %arg12[%c160_59, %c256_60] : memref<288x512xf32, #tpu.memory_space<vmem>>, vector<32x256xf32>
    tpu.vector_store %arg12[%c160_59, %c256_60], %78 {strides = array<i32>} : memref<288x512xf32, #tpu.memory_space<vmem>>, vector<32x256xf32>,
    %c241_i32_61 = arith.constant 241 : i32
    %80 = tpu.dynamic_rotate %24 by %c241_i32_61 dim 1 : vector<32x256xf32>, i32 -> vector<32x256xf32>
    %81 = vector.broadcast %11 : vector<1x256xf32> to vector<32x256xf32>
    %82 = arith.mulf %80, %81 : vector<32x256xf32>
    %c192_62 = arith.constant 192 : index
    %c256_63 = arith.constant 256 : index
    %83 = vector.load %arg12[%c192_62, %c256_63] : memref<288x512xf32, #tpu.memory_space<vmem>>, vector<32x256xf32>
    tpu.vector_store %arg12[%c192_62, %c256_63], %82 {strides = array<i32>} : memref<288x512xf32, #tpu.memory_space<vmem>>, vector<32x256xf32>,
    %c240_i32_64 = arith.constant 240 : i32
    %84 = tpu.dynamic_rotate %24 by %c240_i32_64 dim 1 : vector<32x256xf32>, i32 -> vector<32x256xf32>
    %85 = vector.broadcast %13 : vector<1x256xf32> to vector<32x256xf32>
    %86 = arith.mulf %84, %85 : vector<32x256xf32>
    %c224_65 = arith.constant 224 : index
    %c256_66 = arith.constant 256 : index
    %87 = vector.load %arg12[%c224_65, %c256_66] : memref<288x512xf32, #tpu.memory_space<vmem>>, vector<32x256xf32>
    tpu.vector_store %arg12[%c224_65, %c256_66], %86 {strides = array<i32>} : memref<288x512xf32, #tpu.memory_space<vmem>>, vector<32x256xf32>,
    %c239_i32_67 = arith.constant 239 : i32
    %88 = tpu.dynamic_rotate %24 by %c239_i32_67 dim 1 : vector<32x256xf32>, i32 -> vector<32x256xf32>
    %89 = vector.broadcast %15 : vector<1x256xf32> to vector<32x256xf32>
    %90 = arith.mulf %88, %89 : vector<32x256xf32>
    %c256_68 = arith.constant 256 : index
    %c256_69 = arith.constant 256 : index
    %91 = vector.load %arg12[%c256_68, %c256_69] : memref<288x512xf32, #tpu.memory_space<vmem>>, vector<32x256xf32>
    tpu.vector_store %arg12[%c256_68, %c256_69], %90 {strides = array<i32>} : memref<288x512xf32, #tpu.memory_space<vmem>>, vector<32x256xf32>,
    %c0_70 = arith.constant 0 : index
    %c0_71 = arith.constant 0 : index
    %92 = vector.load %arg12[%c0_70, %c0_71] : memref<288x512xf32, #tpu.memory_space<vmem>>, vector<288x512xf32>
    %cst = arith.constant dense<0.000000e+00> : vector<32x512xf32>
    %93 = tpu.matmul %25, %92, %cst {dimension_numbers = #tpu.dot_dimension_numbers<[1], [0], [0], [1], [0, 0, 1, 1], [], []>} : vector<32x288xf32>, vector<288x512xf32>, vector<32x512xf32> -> vector<32x512xf32>
    %94 = vector.extract_strided_slice %93 {offsets = [0, 0], sizes = [32, 256], strides = [1, 1]} : vector<32x512xf32> to vector<32x256xf32>
    %95 = vector.broadcast %16 : vector<32x1xf32> to vector<32x256xf32>
    %96 = arith.addf %94, %95 : vector<32x256xf32>
    %cst_72 = arith.constant 0.000000e+00 : f32
    %97 = vector.broadcast %cst_72 : f32 to vector<32x256xf32>
    %98 = arith.cmpf oge, %96, %97 : vector<32x256xf32>
    %cst_73 = arith.constant 2.000000e-01 : f32
    %99 = vector.broadcast %cst_73 : f32 to vector<32x256xf32>
    %100 = arith.mulf %99, %96 : vector<32x256xf32>
    %101 = arith.select %98, %96, %100 : vector<32x256xi1>, vector<32x256xf32>
    %102 = arith.addf %101, %22 : vector<32x256xf32>
    %103 = vector.extract_strided_slice %93 {offsets = [0, 256], sizes = [32, 256], strides = [1, 1]} : vector<32x512xf32> to vector<32x256xf32>
    %104 = vector.broadcast %16 : vector<32x1xf32> to vector<32x256xf32>
    %105 = arith.addf %103, %104 : vector<32x256xf32>
    %cst_74 = arith.constant 0.000000e+00 : f32
    %106 = vector.broadcast %cst_74 : f32 to vector<32x256xf32>
    %107 = arith.cmpf oge, %105, %106 : vector<32x256xf32>
    %cst_75 = arith.constant 2.000000e-01 : f32
    %108 = vector.broadcast %cst_75 : f32 to vector<32x256xf32>
    %109 = arith.mulf %108, %105 : vector<32x256xf32>
    %110 = arith.select %107, %105, %109 : vector<32x256xi1>, vector<32x256xf32>
    %111 = arith.addf %110, %24 : vector<32x256xf32>
    %c0_76 = arith.constant 0 : index
    %c0_77 = arith.constant 0 : index
    %112 = vector.load %arg4[%c0_76, %c0_77] : memref<32x288xf32, #tpu.memory_space<vmem>>, vector<32x288xf32>
    %c17_i32_78 = arith.constant 17 : i32
    %113 = tpu.dynamic_rotate %102 by %c17_i32_78 dim 1 : vector<32x256xf32>, i32 -> vector<32x256xf32>
    %114 = vector.broadcast %1 : vector<1x256xf32> to vector<32x256xf32>
    %115 = arith.mulf %113, %114 : vector<32x256xf32>
    %c0_79 = arith.constant 0 : index
    %c0_80 = arith.constant 0 : index
    %116 = vector.load %arg12[%c0_79, %c0_80] : memref<288x512xf32, #tpu.memory_space<vmem>>, vector<32x256xf32>
    tpu.vector_store %arg12[%c0_79, %c0_80], %115 {strides = array<i32>} : memref<288x512xf32, #tpu.memory_space<vmem>>, vector<32x256xf32>,
    %c16_i32_81 = arith.constant 16 : i32
    %117 = tpu.dynamic_rotate %102 by %c16_i32_81 dim 1 : vector<32x256xf32>, i32 -> vector<32x256xf32>
    %118 = vector.broadcast %3 : vector<1x256xf32> to vector<32x256xf32>
    %119 = arith.mulf %117, %118 : vector<32x256xf32>
    %c32_82 = arith.constant 32 : index
    %c0_83 = arith.constant 0 : index
    %120 = vector.load %arg12[%c32_82, %c0_83] : memref<288x512xf32, #tpu.memory_space<vmem>>, vector<32x256xf32>
    tpu.vector_store %arg12[%c32_82, %c0_83], %119 {strides = array<i32>} : memref<288x512xf32, #tpu.memory_space<vmem>>, vector<32x256xf32>,
    %c15_i32_84 = arith.constant 15 : i32
    %121 = tpu.dynamic_rotate %102 by %c15_i32_84 dim 1 : vector<32x256xf32>, i32 -> vector<32x256xf32>
    %122 = vector.broadcast %5 : vector<1x256xf32> to vector<32x256xf32>
    %123 = arith.mulf %121, %122 : vector<32x256xf32>
    %c64_85 = arith.constant 64 : index
    %c0_86 = arith.constant 0 : index
    %124 = vector.load %arg12[%c64_85, %c0_86] : memref<288x512xf32, #tpu.memory_space<vmem>>, vector<32x256xf32>
    tpu.vector_store %arg12[%c64_85, %c0_86], %123 {strides = array<i32>} : memref<288x512xf32, #tpu.memory_space<vmem>>, vector<32x256xf32>,
    %c1_i32_87 = arith.constant 1 : i32
    %125 = tpu.dynamic_rotate %102 by %c1_i32_87 dim 1 : vector<32x256xf32>, i32 -> vector<32x256xf32>
    %126 = vector.broadcast %7 : vector<1x256xf32> to vector<32x256xf32>
    %127 = arith.mulf %125, %126 : vector<32x256xf32>
    %c96_88 = arith.constant 96 : index
    %c0_89 = arith.constant 0 : index
    %128 = vector.load %arg12[%c96_88, %c0_89] : memref<288x512xf32, #tpu.memory_space<vmem>>, vector<32x256xf32>
    tpu.vector_store %arg12[%c96_88, %c0_89], %127 {strides = array<i32>} : memref<288x512xf32, #tpu.memory_space<vmem>>, vector<32x256xf32>,
    %c128_90 = arith.constant 128 : index
    %c0_91 = arith.constant 0 : index
    %129 = vector.load %arg12[%c128_90, %c0_91] : memref<288x512xf32, #tpu.memory_space<vmem>>, vector<32x256xf32>
    tpu.vector_store %arg12[%c128_90, %c0_91], %102 {strides = array<i32>} : memref<288x512xf32, #tpu.memory_space<vmem>>, vector<32x256xf32>,
    %c255_i32_92 = arith.constant 255 : i32
    %130 = tpu.dynamic_rotate %102 by %c255_i32_92 dim 1 : vector<32x256xf32>, i32 -> vector<32x256xf32>
    %131 = vector.broadcast %9 : vector<1x256xf32> to vector<32x256xf32>
    %132 = arith.mulf %130, %131 : vector<32x256xf32>
    %c160_93 = arith.constant 160 : index
    %c0_94 = arith.constant 0 : index
    %133 = vector.load %arg12[%c160_93, %c0_94] : memref<288x512xf32, #tpu.memory_space<vmem>>, vector<32x256xf32>
    tpu.vector_store %arg12[%c160_93, %c0_94], %132 {strides = array<i32>} : memref<288x512xf32, #tpu.memory_space<vmem>>, vector<32x256xf32>,
    %c241_i32_95 = arith.constant 241 : i32
    %134 = tpu.dynamic_rotate %102 by %c241_i32_95 dim 1 : vector<32x256xf32>, i32 -> vector<32x256xf32>
    %135 = vector.broadcast %11 : vector<1x256xf32> to vector<32x256xf32>
    %136 = arith.mulf %134, %135 : vector<32x256xf32>
    %c192_96 = arith.constant 192 : index
    %c0_97 = arith.constant 0 : index
    %137 = vector.load %arg12[%c192_96, %c0_97] : memref<288x512xf32, #tpu.memory_space<vmem>>, vector<32x256xf32>
    tpu.vector_store %arg12[%c192_96, %c0_97], %136 {strides = array<i32>} : memref<288x512xf32, #tpu.memory_space<vmem>>, vector<32x256xf32>,
    %c240_i32_98 = arith.constant 240 : i32
    %138 = tpu.dynamic_rotate %102 by %c240_i32_98 dim 1 : vector<32x256xf32>, i32 -> vector<32x256xf32>
    %139 = vector.broadcast %13 : vector<1x256xf32> to vector<32x256xf32>
    %140 = arith.mulf %138, %139 : vector<32x256xf32>
    %c224_99 = arith.constant 224 : index
    %c0_100 = arith.constant 0 : index
    %141 = vector.load %arg12[%c224_99, %c0_100] : memref<288x512xf32, #tpu.memory_space<vmem>>, vector<32x256xf32>
    tpu.vector_store %arg12[%c224_99, %c0_100], %140 {strides = array<i32>} : memref<288x512xf32, #tpu.memory_space<vmem>>, vector<32x256xf32>,
    %c239_i32_101 = arith.constant 239 : i32
    %142 = tpu.dynamic_rotate %102 by %c239_i32_101 dim 1 : vector<32x256xf32>, i32 -> vector<32x256xf32>
    %143 = vector.broadcast %15 : vector<1x256xf32> to vector<32x256xf32>
    %144 = arith.mulf %142, %143 : vector<32x256xf32>
    %c256_102 = arith.constant 256 : index
    %c0_103 = arith.constant 0 : index
    %145 = vector.load %arg12[%c256_102, %c0_103] : memref<288x512xf32, #tpu.memory_space<vmem>>, vector<32x256xf32>
    tpu.vector_store %arg12[%c256_102, %c0_103], %144 {strides = array<i32>} : memref<288x512xf32, #tpu.memory_space<vmem>>, vector<32x256xf32>,
    %c17_i32_104 = arith.constant 17 : i32
    %146 = tpu.dynamic_rotate %111 by %c17_i32_104 dim 1 : vector<32x256xf32>, i32 -> vector<32x256xf32>
    %147 = vector.broadcast %1 : vector<1x256xf32> to vector<32x256xf32>
    %148 = arith.mulf %146, %147 : vector<32x256xf32>
    %c0_105 = arith.constant 0 : index
    %c256_106 = arith.constant 256 : index
    %149 = vector.load %arg12[%c0_105, %c256_106] : memref<288x512xf32, #tpu.memory_space<vmem>>, vector<32x256xf32>
    tpu.vector_store %arg12[%c0_105, %c256_106], %148 {strides = array<i32>} : memref<288x512xf32, #tpu.memory_space<vmem>>, vector<32x256xf32>,
    %c16_i32_107 = arith.constant 16 : i32
    %150 = tpu.dynamic_rotate %111 by %c16_i32_107 dim 1 : vector<32x256xf32>, i32 -> vector<32x256xf32>
    %151 = vector.broadcast %3 : vector<1x256xf32> to vector<32x256xf32>
    %152 = arith.mulf %150, %151 : vector<32x256xf32>
    %c32_108 = arith.constant 32 : index
    %c256_109 = arith.constant 256 : index
    %153 = vector.load %arg12[%c32_108, %c256_109] : memref<288x512xf32, #tpu.memory_space<vmem>>, vector<32x256xf32>
    tpu.vector_store %arg12[%c32_108, %c256_109], %152 {strides = array<i32>} : memref<288x512xf32, #tpu.memory_space<vmem>>, vector<32x256xf32>,
    %c15_i32_110 = arith.constant 15 : i32
    %154 = tpu.dynamic_rotate %111 by %c15_i32_110 dim 1 : vector<32x256xf32>, i32 -> vector<32x256xf32>
    %155 = vector.broadcast %5 : vector<1x256xf32> to vector<32x256xf32>
    %156 = arith.mulf %154, %155 : vector<32x256xf32>
    %c64_111 = arith.constant 64 : index
    %c256_112 = arith.constant 256 : index
    %157 = vector.load %arg12[%c64_111, %c256_112] : memref<288x512xf32, #tpu.memory_space<vmem>>, vector<32x256xf32>
    tpu.vector_store %arg12[%c64_111, %c256_112], %156 {strides = array<i32>} : memref<288x512xf32, #tpu.memory_space<vmem>>, vector<32x256xf32>,
    %c1_i32_113 = arith.constant 1 : i32
    %158 = tpu.dynamic_rotate %111 by %c1_i32_113 dim 1 : vector<32x256xf32>, i32 -> vector<32x256xf32>
    %159 = vector.broadcast %7 : vector<1x256xf32> to vector<32x256xf32>
    %160 = arith.mulf %158, %159 : vector<32x256xf32>
    %c96_114 = arith.constant 96 : index
    %c256_115 = arith.constant 256 : index
    %161 = vector.load %arg12[%c96_114, %c256_115] : memref<288x512xf32, #tpu.memory_space<vmem>>, vector<32x256xf32>
    tpu.vector_store %arg12[%c96_114, %c256_115], %160 {strides = array<i32>} : memref<288x512xf32, #tpu.memory_space<vmem>>, vector<32x256xf32>,
    %c128_116 = arith.constant 128 : index
    %c256_117 = arith.constant 256 : index
    %162 = vector.load %arg12[%c128_116, %c256_117] : memref<288x512xf32, #tpu.memory_space<vmem>>, vector<32x256xf32>
    tpu.vector_store %arg12[%c128_116, %c256_117], %111 {strides = array<i32>} : memref<288x512xf32, #tpu.memory_space<vmem>>, vector<32x256xf32>,
    %c255_i32_118 = arith.constant 255 : i32
    %163 = tpu.dynamic_rotate %111 by %c255_i32_118 dim 1 : vector<32x256xf32>, i32 -> vector<32x256xf32>
    %164 = vector.broadcast %9 : vector<1x256xf32> to vector<32x256xf32>
    %165 = arith.mulf %163, %164 : vector<32x256xf32>
    %c160_119 = arith.constant 160 : index
    %c256_120 = arith.constant 256 : index
    %166 = vector.load %arg12[%c160_119, %c256_120] : memref<288x512xf32, #tpu.memory_space<vmem>>, vector<32x256xf32>
    tpu.vector_store %arg12[%c160_119, %c256_120], %165 {strides = array<i32>} : memref<288x512xf32, #tpu.memory_space<vmem>>, vector<32x256xf32>,
    %c241_i32_121 = arith.constant 241 : i32
    %167 = tpu.dynamic_rotate %111 by %c241_i32_121 dim 1 : vector<32x256xf32>, i32 -> vector<32x256xf32>
    %168 = vector.broadcast %11 : vector<1x256xf32> to vector<32x256xf32>
    %169 = arith.mulf %167, %168 : vector<32x256xf32>
    %c192_122 = arith.constant 192 : index
    %c256_123 = arith.constant 256 : index
    %170 = vector.load %arg12[%c192_122, %c256_123] : memref<288x512xf32, #tpu.memory_space<vmem>>, vector<32x256xf32>
    tpu.vector_store %arg12[%c192_122, %c256_123], %169 {strides = array<i32>} : memref<288x512xf32, #tpu.memory_space<vmem>>, vector<32x256xf32>,
    %c240_i32_124 = arith.constant 240 : i32
    %171 = tpu.dynamic_rotate %111 by %c240_i32_124 dim 1 : vector<32x256xf32>, i32 -> vector<32x256xf32>
    %172 = vector.broadcast %13 : vector<1x256xf32> to vector<32x256xf32>
    %173 = arith.mulf %171, %172 : vector<32x256xf32>
    %c224_125 = arith.constant 224 : index
    %c256_126 = arith.constant 256 : index
    %174 = vector.load %arg12[%c224_125, %c256_126] : memref<288x512xf32, #tpu.memory_space<vmem>>, vector<32x256xf32>
    tpu.vector_store %arg12[%c224_125, %c256_126], %173 {strides = array<i32>} : memref<288x512xf32, #tpu.memory_space<vmem>>, vector<32x256xf32>,
    %c239_i32_127 = arith.constant 239 : i32
    %175 = tpu.dynamic_rotate %111 by %c239_i32_127 dim 1 : vector<32x256xf32>, i32 -> vector<32x256xf32>
    %176 = vector.broadcast %15 : vector<1x256xf32> to vector<32x256xf32>
    %177 = arith.mulf %175, %176 : vector<32x256xf32>
    %c256_128 = arith.constant 256 : index
    %c256_129 = arith.constant 256 : index
    %178 = vector.load %arg12[%c256_128, %c256_129] : memref<288x512xf32, #tpu.memory_space<vmem>>, vector<32x256xf32>
    tpu.vector_store %arg12[%c256_128, %c256_129], %177 {strides = array<i32>} : memref<288x512xf32, #tpu.memory_space<vmem>>, vector<32x256xf32>,
    %c0_130 = arith.constant 0 : index
    %c0_131 = arith.constant 0 : index
    %179 = vector.load %arg12[%c0_130, %c0_131] : memref<288x512xf32, #tpu.memory_space<vmem>>, vector<288x512xf32>
    %cst_132 = arith.constant dense<0.000000e+00> : vector<32x512xf32>
    %180 = tpu.matmul %112, %179, %cst_132 {dimension_numbers = #tpu.dot_dimension_numbers<[1], [0], [0], [1], [0, 0, 1, 1], [], []>} : vector<32x288xf32>, vector<288x512xf32>, vector<32x512xf32> -> vector<32x512xf32>
    %181 = vector.extract_strided_slice %180 {offsets = [0, 0], sizes = [32, 256], strides = [1, 1]} : vector<32x512xf32> to vector<32x256xf32>
    %182 = vector.broadcast %17 : vector<32x1xf32> to vector<32x256xf32>
    %183 = arith.addf %181, %182 : vector<32x256xf32>
    %cst_133 = arith.constant 0.000000e+00 : f32
    %184 = vector.broadcast %cst_133 : f32 to vector<32x256xf32>
    %185 = arith.cmpf oge, %183, %184 : vector<32x256xf32>
    %cst_134 = arith.constant 2.000000e-01 : f32
    %186 = vector.broadcast %cst_134 : f32 to vector<32x256xf32>
    %187 = arith.mulf %186, %183 : vector<32x256xf32>
    %188 = arith.select %185, %183, %187 : vector<32x256xi1>, vector<32x256xf32>
    %189 = arith.addf %188, %102 : vector<32x256xf32>
    %190 = vector.broadcast %18 : vector<32x1xf32> to vector<32x256xf32>
    %191 = arith.mulf %189, %190 : vector<32x256xf32>
    %192 = vector.broadcast %19 : vector<32x1xf32> to vector<32x256xf32>
    %193 = arith.addf %191, %192 : vector<32x256xf32>
    %194 = vector.extract_strided_slice %180 {offsets = [0, 256], sizes = [32, 256], strides = [1, 1]} : vector<32x512xf32> to vector<32x256xf32>
    %195 = vector.broadcast %17 : vector<32x1xf32> to vector<32x256xf32>
    %196 = arith.addf %194, %195 : vector<32x256xf32>
    %cst_135 = arith.constant 0.000000e+00 : f32
    %197 = vector.broadcast %cst_135 : f32 to vector<32x256xf32>
    %198 = arith.cmpf oge, %196, %197 : vector<32x256xf32>
    %cst_136 = arith.constant 2.000000e-01 : f32
    %199 = vector.broadcast %cst_136 : f32 to vector<32x256xf32>
    %200 = arith.mulf %199, %196 : vector<32x256xf32>
    %201 = arith.select %198, %196, %200 : vector<32x256xi1>, vector<32x256xf32>
    %202 = arith.addf %201, %111 : vector<32x256xf32>
    %203 = vector.broadcast %18 : vector<32x1xf32> to vector<32x256xf32>
    %204 = arith.mulf %202, %203 : vector<32x256xf32>
    %205 = vector.broadcast %19 : vector<32x1xf32> to vector<32x256xf32>
    %206 = arith.addf %204, %205 : vector<32x256xf32>
    %c0_137 = arith.constant 0 : index
    %c0_138 = arith.constant 0 : index
    %207 = vector.load %arg5[%c0_137, %c0_138] : memref<32x288xf32, #tpu.memory_space<vmem>>, vector<32x288xf32>
    %c17_i32_139 = arith.constant 17 : i32
    %208 = tpu.dynamic_rotate %193 by %c17_i32_139 dim 1 : vector<32x256xf32>, i32 -> vector<32x256xf32>
    %209 = vector.broadcast %1 : vector<1x256xf32> to vector<32x256xf32>
    %210 = arith.mulf %208, %209 : vector<32x256xf32>
    %c0_140 = arith.constant 0 : index
    %c0_141 = arith.constant 0 : index
    %211 = vector.load %arg12[%c0_140, %c0_141] : memref<288x512xf32, #tpu.memory_space<vmem>>, vector<32x256xf32>
    tpu.vector_store %arg12[%c0_140, %c0_141], %210 {strides = array<i32>} : memref<288x512xf32, #tpu.memory_space<vmem>>, vector<32x256xf32>,
    %c16_i32_142 = arith.constant 16 : i32
    %212 = tpu.dynamic_rotate %193 by %c16_i32_142 dim 1 : vector<32x256xf32>, i32 -> vector<32x256xf32>
    %213 = vector.broadcast %3 : vector<1x256xf32> to vector<32x256xf32>
    %214 = arith.mulf %212, %213 : vector<32x256xf32>
    %c32_143 = arith.constant 32 : index
    %c0_144 = arith.constant 0 : index
    %215 = vector.load %arg12[%c32_143, %c0_144] : memref<288x512xf32, #tpu.memory_space<vmem>>, vector<32x256xf32>
    tpu.vector_store %arg12[%c32_143, %c0_144], %214 {strides = array<i32>} : memref<288x512xf32, #tpu.memory_space<vmem>>, vector<32x256xf32>,
    %c15_i32_145 = arith.constant 15 : i32
    %216 = tpu.dynamic_rotate %193 by %c15_i32_145 dim 1 : vector<32x256xf32>, i32 -> vector<32x256xf32>
    %217 = vector.broadcast %5 : vector<1x256xf32> to vector<32x256xf32>
    %218 = arith.mulf %216, %217 : vector<32x256xf32>
    %c64_146 = arith.constant 64 : index
    %c0_147 = arith.constant 0 : index
    %219 = vector.load %arg12[%c64_146, %c0_147] : memref<288x512xf32, #tpu.memory_space<vmem>>, vector<32x256xf32>
    tpu.vector_store %arg12[%c64_146, %c0_147], %218 {strides = array<i32>} : memref<288x512xf32, #tpu.memory_space<vmem>>, vector<32x256xf32>,
    %c1_i32_148 = arith.constant 1 : i32
    %220 = tpu.dynamic_rotate %193 by %c1_i32_148 dim 1 : vector<32x256xf32>, i32 -> vector<32x256xf32>
    %221 = vector.broadcast %7 : vector<1x256xf32> to vector<32x256xf32>
    %222 = arith.mulf %220, %221 : vector<32x256xf32>
    %c96_149 = arith.constant 96 : index
    %c0_150 = arith.constant 0 : index
    %223 = vector.load %arg12[%c96_149, %c0_150] : memref<288x512xf32, #tpu.memory_space<vmem>>, vector<32x256xf32>
    tpu.vector_store %arg12[%c96_149, %c0_150], %222 {strides = array<i32>} : memref<288x512xf32, #tpu.memory_space<vmem>>, vector<32x256xf32>,
    %c128_151 = arith.constant 128 : index
    %c0_152 = arith.constant 0 : index
    %224 = vector.load %arg12[%c128_151, %c0_152] : memref<288x512xf32, #tpu.memory_space<vmem>>, vector<32x256xf32>
    tpu.vector_store %arg12[%c128_151, %c0_152], %193 {strides = array<i32>} : memref<288x512xf32, #tpu.memory_space<vmem>>, vector<32x256xf32>,
    %c255_i32_153 = arith.constant 255 : i32
    %225 = tpu.dynamic_rotate %193 by %c255_i32_153 dim 1 : vector<32x256xf32>, i32 -> vector<32x256xf32>
    %226 = vector.broadcast %9 : vector<1x256xf32> to vector<32x256xf32>
    %227 = arith.mulf %225, %226 : vector<32x256xf32>
    %c160_154 = arith.constant 160 : index
    %c0_155 = arith.constant 0 : index
    %228 = vector.load %arg12[%c160_154, %c0_155] : memref<288x512xf32, #tpu.memory_space<vmem>>, vector<32x256xf32>
    tpu.vector_store %arg12[%c160_154, %c0_155], %227 {strides = array<i32>} : memref<288x512xf32, #tpu.memory_space<vmem>>, vector<32x256xf32>,
    %c241_i32_156 = arith.constant 241 : i32
    %229 = tpu.dynamic_rotate %193 by %c241_i32_156 dim 1 : vector<32x256xf32>, i32 -> vector<32x256xf32>
    %230 = vector.broadcast %11 : vector<1x256xf32> to vector<32x256xf32>
    %231 = arith.mulf %229, %230 : vector<32x256xf32>
    %c192_157 = arith.constant 192 : index
    %c0_158 = arith.constant 0 : index
    %232 = vector.load %arg12[%c192_157, %c0_158] : memref<288x512xf32, #tpu.memory_space<vmem>>, vector<32x256xf32>
    tpu.vector_store %arg12[%c192_157, %c0_158], %231 {strides = array<i32>} : memref<288x512xf32, #tpu.memory_space<vmem>>, vector<32x256xf32>,
    %c240_i32_159 = arith.constant 240 : i32
    %233 = tpu.dynamic_rotate %193 by %c240_i32_159 dim 1 : vector<32x256xf32>, i32 -> vector<32x256xf32>
    %234 = vector.broadcast %13 : vector<1x256xf32> to vector<32x256xf32>
    %235 = arith.mulf %233, %234 : vector<32x256xf32>
    %c224_160 = arith.constant 224 : index
    %c0_161 = arith.constant 0 : index
    %236 = vector.load %arg12[%c224_160, %c0_161] : memref<288x512xf32, #tpu.memory_space<vmem>>, vector<32x256xf32>
    tpu.vector_store %arg12[%c224_160, %c0_161], %235 {strides = array<i32>} : memref<288x512xf32, #tpu.memory_space<vmem>>, vector<32x256xf32>,
    %c239_i32_162 = arith.constant 239 : i32
    %237 = tpu.dynamic_rotate %193 by %c239_i32_162 dim 1 : vector<32x256xf32>, i32 -> vector<32x256xf32>
    %238 = vector.broadcast %15 : vector<1x256xf32> to vector<32x256xf32>
    %239 = arith.mulf %237, %238 : vector<32x256xf32>
    %c256_163 = arith.constant 256 : index
    %c0_164 = arith.constant 0 : index
    %240 = vector.load %arg12[%c256_163, %c0_164] : memref<288x512xf32, #tpu.memory_space<vmem>>, vector<32x256xf32>
    tpu.vector_store %arg12[%c256_163, %c0_164], %239 {strides = array<i32>} : memref<288x512xf32, #tpu.memory_space<vmem>>, vector<32x256xf32>,
    %c17_i32_165 = arith.constant 17 : i32
    %241 = tpu.dynamic_rotate %206 by %c17_i32_165 dim 1 : vector<32x256xf32>, i32 -> vector<32x256xf32>
    %242 = vector.broadcast %1 : vector<1x256xf32> to vector<32x256xf32>
    %243 = arith.mulf %241, %242 : vector<32x256xf32>
    %c0_166 = arith.constant 0 : index
    %c256_167 = arith.constant 256 : index
    %244 = vector.load %arg12[%c0_166, %c256_167] : memref<288x512xf32, #tpu.memory_space<vmem>>, vector<32x256xf32>
    tpu.vector_store %arg12[%c0_166, %c256_167], %243 {strides = array<i32>} : memref<288x512xf32, #tpu.memory_space<vmem>>, vector<32x256xf32>,
    %c16_i32_168 = arith.constant 16 : i32
    %245 = tpu.dynamic_rotate %206 by %c16_i32_168 dim 1 : vector<32x256xf32>, i32 -> vector<32x256xf32>
    %246 = vector.broadcast %3 : vector<1x256xf32> to vector<32x256xf32>
    %247 = arith.mulf %245, %246 : vector<32x256xf32>
    %c32_169 = arith.constant 32 : index
    %c256_170 = arith.constant 256 : index
    %248 = vector.load %arg12[%c32_169, %c256_170] : memref<288x512xf32, #tpu.memory_space<vmem>>, vector<32x256xf32>
    tpu.vector_store %arg12[%c32_169, %c256_170], %247 {strides = array<i32>} : memref<288x512xf32, #tpu.memory_space<vmem>>, vector<32x256xf32>,
    %c15_i32_171 = arith.constant 15 : i32
    %249 = tpu.dynamic_rotate %206 by %c15_i32_171 dim 1 : vector<32x256xf32>, i32 -> vector<32x256xf32>
    %250 = vector.broadcast %5 : vector<1x256xf32> to vector<32x256xf32>
    %251 = arith.mulf %249, %250 : vector<32x256xf32>
    %c64_172 = arith.constant 64 : index
    %c256_173 = arith.constant 256 : index
    %252 = vector.load %arg12[%c64_172, %c256_173] : memref<288x512xf32, #tpu.memory_space<vmem>>, vector<32x256xf32>
    tpu.vector_store %arg12[%c64_172, %c256_173], %251 {strides = array<i32>} : memref<288x512xf32, #tpu.memory_space<vmem>>, vector<32x256xf32>,
    %c1_i32_174 = arith.constant 1 : i32
    %253 = tpu.dynamic_rotate %206 by %c1_i32_174 dim 1 : vector<32x256xf32>, i32 -> vector<32x256xf32>
    %254 = vector.broadcast %7 : vector<1x256xf32> to vector<32x256xf32>
    %255 = arith.mulf %253, %254 : vector<32x256xf32>
    %c96_175 = arith.constant 96 : index
    %c256_176 = arith.constant 256 : index
    %256 = vector.load %arg12[%c96_175, %c256_176] : memref<288x512xf32, #tpu.memory_space<vmem>>, vector<32x256xf32>
    tpu.vector_store %arg12[%c96_175, %c256_176], %255 {strides = array<i32>} : memref<288x512xf32, #tpu.memory_space<vmem>>, vector<32x256xf32>,
    %c128_177 = arith.constant 128 : index
    %c256_178 = arith.constant 256 : index
    %257 = vector.load %arg12[%c128_177, %c256_178] : memref<288x512xf32, #tpu.memory_space<vmem>>, vector<32x256xf32>
    tpu.vector_store %arg12[%c128_177, %c256_178], %206 {strides = array<i32>} : memref<288x512xf32, #tpu.memory_space<vmem>>, vector<32x256xf32>,
    %c255_i32_179 = arith.constant 255 : i32
    %258 = tpu.dynamic_rotate %206 by %c255_i32_179 dim 1 : vector<32x256xf32>, i32 -> vector<32x256xf32>
    %259 = vector.broadcast %9 : vector<1x256xf32> to vector<32x256xf32>
    %260 = arith.mulf %258, %259 : vector<32x256xf32>
    %c160_180 = arith.constant 160 : index
    %c256_181 = arith.constant 256 : index
    %261 = vector.load %arg12[%c160_180, %c256_181] : memref<288x512xf32, #tpu.memory_space<vmem>>, vector<32x256xf32>
    tpu.vector_store %arg12[%c160_180, %c256_181], %260 {strides = array<i32>} : memref<288x512xf32, #tpu.memory_space<vmem>>, vector<32x256xf32>,
    %c241_i32_182 = arith.constant 241 : i32
    %262 = tpu.dynamic_rotate %206 by %c241_i32_182 dim 1 : vector<32x256xf32>, i32 -> vector<32x256xf32>
    %263 = vector.broadcast %11 : vector<1x256xf32> to vector<32x256xf32>
    %264 = arith.mulf %262, %263 : vector<32x256xf32>
    %c192_183 = arith.constant 192 : index
    %c256_184 = arith.constant 256 : index
    %265 = vector.load %arg12[%c192_183, %c256_184] : memref<288x512xf32, #tpu.memory_space<vmem>>, vector<32x256xf32>
    tpu.vector_store %arg12[%c192_183, %c256_184], %264 {strides = array<i32>} : memref<288x512xf32, #tpu.memory_space<vmem>>, vector<32x256xf32>,
    %c240_i32_185 = arith.constant 240 : i32
    %266 = tpu.dynamic_rotate %206 by %c240_i32_185 dim 1 : vector<32x256xf32>, i32 -> vector<32x256xf32>
    %267 = vector.broadcast %13 : vector<1x256xf32> to vector<32x256xf32>
    %268 = arith.mulf %266, %267 : vector<32x256xf32>
    %c224_186 = arith.constant 224 : index
    %c256_187 = arith.constant 256 : index
    %269 = vector.load %arg12[%c224_186, %c256_187] : memref<288x512xf32, #tpu.memory_space<vmem>>, vector<32x256xf32>
    tpu.vector_store %arg12[%c224_186, %c256_187], %268 {strides = array<i32>} : memref<288x512xf32, #tpu.memory_space<vmem>>, vector<32x256xf32>,
    %c239_i32_188 = arith.constant 239 : i32
    %270 = tpu.dynamic_rotate %206 by %c239_i32_188 dim 1 : vector<32x256xf32>, i32 -> vector<32x256xf32>
    %271 = vector.broadcast %15 : vector<1x256xf32> to vector<32x256xf32>
    %272 = arith.mulf %270, %271 : vector<32x256xf32>
    %c256_189 = arith.constant 256 : index
    %c256_190 = arith.constant 256 : index
    %273 = vector.load %arg12[%c256_189, %c256_190] : memref<288x512xf32, #tpu.memory_space<vmem>>, vector<32x256xf32>
    tpu.vector_store %arg12[%c256_189, %c256_190], %272 {strides = array<i32>} : memref<288x512xf32, #tpu.memory_space<vmem>>, vector<32x256xf32>,
    %c0_191 = arith.constant 0 : index
    %c0_192 = arith.constant 0 : index
    %274 = vector.load %arg12[%c0_191, %c0_192] : memref<288x512xf32, #tpu.memory_space<vmem>>, vector<288x512xf32>
    %cst_193 = arith.constant dense<0.000000e+00> : vector<32x512xf32>
    %275 = tpu.matmul %207, %274, %cst_193 {dimension_numbers = #tpu.dot_dimension_numbers<[1], [0], [0], [1], [0, 0, 1, 1], [], []>} : vector<32x288xf32>, vector<288x512xf32>, vector<32x512xf32> -> vector<32x512xf32>
    %276 = vector.extract_strided_slice %275 {offsets = [0, 0], sizes = [32, 256], strides = [1, 1]} : vector<32x512xf32> to vector<32x256xf32>
    %277 = vector.broadcast %20 : vector<32x1xf32> to vector<32x256xf32>
    %278 = arith.addf %276, %277 : vector<32x256xf32>
    %cst_194 = arith.constant 0.000000e+00 : f32
    %279 = vector.broadcast %cst_194 : f32 to vector<32x256xf32>
    %280 = arith.cmpf oge, %278, %279 : vector<32x256xf32>
    %cst_195 = arith.constant 2.000000e-01 : f32
    %281 = vector.broadcast %cst_195 : f32 to vector<32x256xf32>
    %282 = arith.mulf %281, %278 : vector<32x256xf32>
    %283 = arith.select %280, %278, %282 : vector<32x256xi1>, vector<32x256xf32>
    %c0_196 = arith.constant 0 : index
    %c0_197 = arith.constant 0 : index
    %c0_198 = arith.constant 0 : index
    %284 = vector.load %arg11[%c0_196, %c0_197, %c0_198] : memref<2x32x256xf32, #tpu.memory_space<vmem>>, vector<1x32x256xf32>
    %285 = vector.shape_cast %284 : vector<1x32x256xf32> to vector<32x256xf32>
    %286 = vector.shape_cast %283 : vector<32x256xf32> to vector<1x32x256xf32>
    tpu.vector_store %arg11[%c0_196, %c0_197, %c0_198], %286 {strides = array<i32>} : memref<2x32x256xf32, #tpu.memory_space<vmem>>, vector<1x32x256xf32>,
    %287 = vector.extract_strided_slice %275 {offsets = [0, 256], sizes = [32, 256], strides = [1, 1]} : vector<32x512xf32> to vector<32x256xf32>
    %288 = vector.broadcast %20 : vector<32x1xf32> to vector<32x256xf32>
    %289 = arith.addf %287, %288 : vector<32x256xf32>
    %cst_199 = arith.constant 0.000000e+00 : f32
    %290 = vector.broadcast %cst_199 : f32 to vector<32x256xf32>
    %291 = arith.cmpf oge, %289, %290 : vector<32x256xf32>
    %cst_200 = arith.constant 2.000000e-01 : f32
    %292 = vector.broadcast %cst_200 : f32 to vector<32x256xf32>
    %293 = arith.mulf %292, %289 : vector<32x256xf32>
    %294 = arith.select %291, %289, %293 : vector<32x256xi1>, vector<32x256xf32>
    %c1_201 = arith.constant 1 : index
    %c0_202 = arith.constant 0 : index
    %c0_203 = arith.constant 0 : index
    %295 = vector.load %arg11[%c1_201, %c0_202, %c0_203] : memref<2x32x256xf32, #tpu.memory_space<vmem>>, vector<1x32x256xf32>
    %296 = vector.shape_cast %295 : vector<1x32x256xf32> to vector<32x256xf32>
    %297 = vector.shape_cast %294 : vector<32x256xf32> to vector<1x32x256xf32>
    tpu.vector_store %arg11[%c1_201, %c0_202, %c0_203], %297 {strides = array<i32>} : memref<2x32x256xf32, #tpu.memory_space<vmem>>, vector<1x32x256xf32>,
    return
  }
  func.func @transform_0(%arg0: i32) -> (i32, i32, i32) {
    %c0_i32 = arith.constant 0 : i32
    %c0_i32_0 = arith.constant 0 : i32
    %c0_i32_1 = arith.constant 0 : i32
    return %arg0, %c0_i32, %c0_i32_0 : i32, i32, i32
  }
  func.func @transform_1(%arg0: i32) -> (i32, i32, i32) {
    %c0_i32 = arith.constant 0 : i32
    %c0_i32_0 = arith.constant 0 : i32
    %c0_i32_1 = arith.constant 0 : i32
    %c0_i32_2 = arith.constant 0 : i32
    return %c0_i32, %c0_i32_0, %c0_i32_1 : i32, i32, i32
  }
  func.func @transform_2(%arg0: i32) -> (i32, i32) {
    %c0_i32 = arith.constant 0 : i32
    %c0_i32_0 = arith.constant 0 : i32
    %c0_i32_1 = arith.constant 0 : i32
    return %c0_i32, %c0_i32_0 : i32, i32
  }
  func.func @transform_3(%arg0: i32) -> (i32, i32) {
    %c0_i32 = arith.constant 0 : i32
    %c0_i32_0 = arith.constant 0 : i32
    %c0_i32_1 = arith.constant 0 : i32
    return %c0_i32, %c0_i32_0 : i32, i32
  }
  func.func @transform_4(%arg0: i32) -> (i32, i32) {
    %c0_i32 = arith.constant 0 : i32
    %c0_i32_0 = arith.constant 0 : i32
    %c0_i32_1 = arith.constant 0 : i32
    return %c0_i32, %c0_i32_0 : i32, i32
  }
  func.func @transform_5(%arg0: i32) -> (i32, i32) {
    %c0_i32 = arith.constant 0 : i32
    %c0_i32_0 = arith.constant 0 : i32
    %c0_i32_1 = arith.constant 0 : i32
    return %c0_i32, %c0_i32_0 : i32, i32
  }
  func.func @transform_6(%arg0: i32) -> (i32, i32) {
    %c0_i32 = arith.constant 0 : i32
    %c0_i32_0 = arith.constant 0 : i32
    %c0_i32_1 = arith.constant 0 : i32
    return %c0_i32, %c0_i32_0 : i32, i32
  }
  func.func @transform_7(%arg0: i32) -> (i32, i32) {
    %c0_i32 = arith.constant 0 : i32
    %c0_i32_0 = arith.constant 0 : i32
    %c0_i32_1 = arith.constant 0 : i32
    return %c0_i32, %c0_i32_0 : i32, i32
  }
  func.func @transform_8(%arg0: i32) -> (i32, i32) {
    %c0_i32 = arith.constant 0 : i32
    %c0_i32_0 = arith.constant 0 : i32
    %c0_i32_1 = arith.constant 0 : i32
    return %c0_i32, %c0_i32_0 : i32, i32
  }
  func.func @transform_9(%arg0: i32) -> (i32, i32) {
    %c0_i32 = arith.constant 0 : i32
    %c0_i32_0 = arith.constant 0 : i32
    %c0_i32_1 = arith.constant 0 : i32
    return %c0_i32, %c0_i32_0 : i32, i32
  }
  func.func @transform_10(%arg0: i32) -> (i32, i32, i32) {
    %c0_i32 = arith.constant 0 : i32
    %c0_i32_0 = arith.constant 0 : i32
    %c0_i32_1 = arith.constant 0 : i32
    return %arg0, %c0_i32, %c0_i32_0 : i32, i32, i32
  }
}

</mosaic_0001>

<llo_original>
// kernel: tpu_custom_call.1
$region0: #{tpu_custom_call.1}
  #allocation0 [shape = 'u32[]', space=smem, size = 0x4, offset = 0x4, fixed_abs, tag = 'smem constant byte address 0x4 - core index']
  #allocation1 [shape = 'u32[144,128]{1,0:T(1,128)}', space=vmem, size = 0x12000, scoped, tag = 'internal scratch']
  #allocation2 [shape = 'f32[288,512]{1,0:T(8,128)}', space=vmem, size = 0x90000, scoped, tag = 'scratch operand']
  %s0 = inlined_call_operand.vmem [shape: f32[2,32,256], index: 0, kind: input, shape index: {}]
  %s1 = inlined_call_operand.vmem [shape: f32[9,1,256], index: 1, kind: input, shape index: {}]
  %s2 = inlined_call_operand.hbm [shape: f32[32,288], index: 2, kind: input, shape index: {}]
  %s3 = inlined_call_operand.hbm [shape: f32[32,288], index: 3, kind: input, shape index: {}]
  %s4 = inlined_call_operand.hbm [shape: f32[32,288], index: 4, kind: input, shape index: {}]
  %s5 = inlined_call_operand.vmem [shape: f32[32,1], index: 5, kind: input, shape index: {}]
  %s6 = inlined_call_operand.vmem [shape: f32[32,1], index: 6, kind: input, shape index: {}]
  %s7 = inlined_call_operand.vmem [shape: f32[32,1], index: 7, kind: input, shape index: {}]
  %s8 = inlined_call_operand.vmem [shape: f32[32,1], index: 8, kind: input, shape index: {}]
  %s9 = inlined_call_operand.vmem [shape: f32[32,1], index: 9, kind: input, shape index: {}]
  %s10 = inlined_call_operand.hbm [shape: f32[2,32,256], index: 10, kind: output, shape index: {}]
  %s11 = sld [smem:[#allocation0]]
  $region62: #{tpu_custom_call.1} parent=0
    _
  %s13 = ssub.s32 1, %s11
  %s14 = scalar_select 0, %s13, %s11
  $region1: #{tpu_custom_call.1} parent=0
    #allocation3 [shape = 'u8[49152]{0}', space=vmem, size = 0xc000, scoped, tag = 'input window, operand 2, single buffered']
    #allocation4 [shape = 's32[1]{0}', space=sflag, size = 0x4, scoped, tag = 'scoped memory for tpu_custom_call.1']
    #allocation5 [shape = 's32[1]{0}', space=sflag, size = 0x4, scoped, tag = 'scoped memory for tpu_custom_call.1']
    #allocation6 [shape = 'u8[49152]{0}', space=vmem, size = 0xc000, scoped, tag = 'input window, operand 3, single buffered']
    #allocation7 [shape = 's32[1]{0}', space=sflag, size = 0x4, scoped, tag = 'scoped memory for tpu_custom_call.1']
    #allocation8 [shape = 'u8[49152]{0}', space=vmem, size = 0xc000, scoped, tag = 'input window, operand 4, single buffered']
    #allocation9 [shape = 'u8[65536]{0}', space=vmem, size = 0x10000, scoped, tag = 'output window, operand 0, single buffered']
    %15 = vsyncpa [#allocation4], 0
    %16 = vsyncpa [#allocation7], 0
    %17 = vsyncpa [#allocation5], 0
    // Predicated region
    $region2: #{tpu_custom_call.1} parent=1 // pred_check
      _
    $region3: #{tpu_custom_call.1} parent=1 // pred_check_branch
      %19 = sbr.rel (0) target = $region5
    $region4: #{tpu_custom_call.1} parent=1 // pred_region
      _
    $region5: #{tpu_custom_call.1} parent=1 // pred_fallthru
      _
    // Predicated region
    $region6: #{tpu_custom_call.1} parent=1 // pred_check
      _
    $region7: #{tpu_custom_call.1} parent=1 // pred_check_branch
      %21 = sbr.rel (0) target = $region9
    $region8: #{tpu_custom_call.1} parent=1 // pred_region
      _
    $region9: #{tpu_custom_call.1} parent=1 // pred_fallthru
      _
    // Predicated region
    $region10: #{tpu_custom_call.1} parent=1 // pred_check
      _
    $region11: #{tpu_custom_call.1} parent=1 // pred_check_branch
      %23 = sbr.rel (0) target = $region13
    $region12: #{tpu_custom_call.1} parent=1 // pred_region
      %s25 = ssub.s32 1536, 1536
      %26 = vsyncadd [#allocation4], %s25
      %s27 = sshll.u32 [#allocation3], 4
      %s28 = int_to_ptr.vmem [resolvable:$true] %s27
      %33 = dma.hbm_to_vmem [thread:$0]  %s2, 1536, %s28, [#allocation4], 384, 384, 24
    $region13: #{tpu_custom_call.1} parent=1 // pred_fallthru
      _
    // Predicated region
    $region14: #{tpu_custom_call.1} parent=1 // pred_check
      _
    $region15: #{tpu_custom_call.1} parent=1 // pred_check_branch
      %35 = sbr.rel (0) target = $region17
    $region16: #{tpu_custom_call.1} parent=1 // pred_region
      %s37 = ssub.s32 1536, 1536
      %38 = vsyncadd [#allocation7], %s37
      %s39 = sshll.u32 [#allocation6], 4
      %s40 = int_to_ptr.vmem [resolvable:$true] %s39
      %45 = dma.hbm_to_vmem [thread:$0]  %s3, 1536, %s40, [#allocation7], 384, 384, 24
    $region17: #{tpu_custom_call.1} parent=1 // pred_fallthru
      _
    // Predicated region
    $region18: #{tpu_custom_call.1} parent=1 // pred_check
      _
    $region19: #{tpu_custom_call.1} parent=1 // pred_check_branch
      %47 = sbr.rel (0) target = $region21
    $region20: #{tpu_custom_call.1} parent=1 // pred_region
      %s49 = ssub.s32 1536, 1536
      %50 = vsyncadd [#allocation7], %s49
      %s51 = sshll.u32 [#allocation8], 4
      %s52 = int_to_ptr.vmem [resolvable:$true] %s51
      %57 = dma.hbm_to_vmem [thread:$0]  %s4, 1536, %s52, [#allocation7], 384, 384, 24
    $region21: #{tpu_custom_call.1} parent=1 // pred_fallthru
      _
    // Predicated region
    $region22: #{tpu_custom_call.1} parent=1 // pred_check
      _
    $region23: #{tpu_custom_call.1} parent=1 // pred_check_branch
      %59 = sbr.rel (0) target = $region25
    $region24: #{tpu_custom_call.1} parent=1 // pred_region
      _
    $region25: #{tpu_custom_call.1} parent=1 // pred_fallthru
      _
    // Predicated region
    $region26: #{tpu_custom_call.1} parent=1 // pred_check
      _
    $region27: #{tpu_custom_call.1} parent=1 // pred_check_branch
      %61 = sbr.rel (0) target = $region29
    $region28: #{tpu_custom_call.1} parent=1 // pred_region
      _
    $region29: #{tpu_custom_call.1} parent=1 // pred_fallthru
      _
    // Predicated region
    $region30: #{tpu_custom_call.1} parent=1 // pred_check
      _
    $region31: #{tpu_custom_call.1} parent=1 // pred_check_branch
      %63 = sbr.rel (0) target = $region33
    $region32: #{tpu_custom_call.1} parent=1 // pred_region
      _
    $region33: #{tpu_custom_call.1} parent=1 // pred_fallthru
      _
    // Predicated region
    $region34: #{tpu_custom_call.1} parent=1 // pred_check
      _
    $region35: #{tpu_custom_call.1} parent=1 // pred_check_branch
      %65 = sbr.rel (0) target = $region37
    $region36: #{tpu_custom_call.1} parent=1 // pred_region
      _
    $region37: #{tpu_custom_call.1} parent=1 // pred_fallthru
      _
    // Predicated region
    $region38: #{tpu_custom_call.1} parent=1 // pred_check
      _
    $region39: #{tpu_custom_call.1} parent=1 // pred_check_branch
      %67 = sbr.rel (0) target = $region41
    $region40: #{tpu_custom_call.1} parent=1 // pred_region
      _
    $region41: #{tpu_custom_call.1} parent=1 // pred_fallthru
      _
    // Predicated region
    $region42: #{tpu_custom_call.1} parent=1 // pred_check
      _
    $region43: #{tpu_custom_call.1} parent=1 // pred_check_branch
      %69 = sbr.rel (0) target = $region45
    $region44: #{tpu_custom_call.1} parent=1 // pred_region
      %70 = dma.done [#allocation4], 1536
    $region45: #{tpu_custom_call.1} parent=1 // pred_fallthru
      _
    // Predicated region
    $region46: #{tpu_custom_call.1} parent=1 // pred_check
      _
    $region47: #{tpu_custom_call.1} parent=1 // pred_check_branch
      %72 = sbr.rel (0) target = $region49
    $region48: #{tpu_custom_call.1} parent=1 // pred_region
      %73 = dma.done [#allocation7], 1536
    $region49: #{tpu_custom_call.1} parent=1 // pred_fallthru
      _
    // Predicated region
    $region50: #{tpu_custom_call.1} parent=1 // pred_check
      _
    $region51: #{tpu_custom_call.1} parent=1 // pred_check_branch
      %75 = sbr.rel (0) target = $region53
    $region52: #{tpu_custom_call.1} parent=1 // pred_region
      %76 = dma.done [#allocation7], 1536
    $region53: #{tpu_custom_call.1} parent=1 // pred_fallthru
      _
    %v77 = vld [vmem:[%s1] sm:$0x3]
    %s78 = scalar_lea.vmem %s1, 2
    %v79 = vld [vmem:[%s78] sm:$0x3]
    %s80 = scalar_lea.vmem %s1, 4
    %v81 = vld [vmem:[%s80] sm:$0x3]
    %s82 = scalar_lea.vmem %s1, 6
    %v83 = vld [vmem:[%s82] sm:$0x3]
    %s84 = scalar_lea.vmem %s1, 10
    %v85 = vld [vmem:[%s84] sm:$0x3]
    %s86 = scalar_lea.vmem %s1, 12
    %v87 = vld [vmem:[%s86] sm:$0x3]
    %s88 = scalar_lea.vmem %s1, 14
    %v89 = vld [vmem:[%s88] sm:$0x3]
    %s90 = scalar_lea.vmem %s1, 16
    %v91 = vld [vmem:[%s90] sm:$0x3]
    %v92 = vld [vmem:[%s5] sm:$0xff]
    %v93 = vld [vmem:[%s5 + $0x8] sm:$0xff]
    %v94 = vld [vmem:[%s5 + $0x10] sm:$0xff]
    %v95 = vld [vmem:[%s5 + $0x18] sm:$0xff]
    %v96 = vld [vmem:[%s6] sm:$0xff]
    %v97 = vld [vmem:[%s6 + $0x8] sm:$0xff]
    %v98 = vld [vmem:[%s6 + $0x10] sm:$0xff]
    %v99 = vld [vmem:[%s6 + $0x18] sm:$0xff]
    %v100 = vld [vmem:[%s7] sm:$0xff]
    %v101 = vld [vmem:[%s7 + $0x8] sm:$0xff]
    %v102 = vld [vmem:[%s7 + $0x10] sm:$0xff]
    %v103 = vld [vmem:[%s7 + $0x18] sm:$0xff]
    %v104 = vld [vmem:[%s8] sm:$0xff]
    %v105 = vld [vmem:[%s8 + $0x8] sm:$0xff]
    %v106 = vld [vmem:[%s8 + $0x10] sm:$0xff]
    %v107 = vld [vmem:[%s8 + $0x18] sm:$0xff]
    %v108 = vld [vmem:[%s9] sm:$0xff]
    %v109 = vld [vmem:[%s9 + $0x8] sm:$0xff]
    %v110 = vld [vmem:[%s9 + $0x10] sm:$0xff]
    %v111 = vld [vmem:[%s9 + $0x18] sm:$0xff]
    %v112 = vld [vmem:[%s0] sm:$0xff]
    %v113 = vld [vmem:[%s0 + $0x8] sm:$0xff]
    %v114 = vld [vmem:[%s0 + $0x10] sm:$0xff]
    %v115 = vld [vmem:[%s0 + $0x18] sm:$0xff]
    %v116 = vld [vmem:[%s0 + $0x20] sm:$0xff]
    %v117 = vld [vmem:[%s0 + $0x28] sm:$0xff]
    %v118 = vld [vmem:[%s0 + $0x30] sm:$0xff]
    %v119 = vld [vmem:[%s0 + $0x38] sm:$0xff]
    %s120 = scalar_lea.vmem %s0, 64
    %v121 = vld [vmem:[%s120] sm:$0xff]
    %v122 = vld [vmem:[%s120 + $0x8] sm:$0xff]
    %v123 = vld [vmem:[%s120 + $0x10] sm:$0xff]
    %v124 = vld [vmem:[%s120 + $0x18] sm:$0xff]
    %v125 = vld [vmem:[%s120 + $0x20] sm:$0xff]
    %v126 = vld [vmem:[%s120 + $0x28] sm:$0xff]
    %v127 = vld [vmem:[%s120 + $0x30] sm:$0xff]
    %v128 = vld [vmem:[%s120 + $0x38] sm:$0xff]
    %v129 = vld [vmem:[#allocation3] sm:$0xff]
    %v130 = vld [vmem:[#allocation3 + $0x8] sm:$0xff]
    %v131 = vld [vmem:[#allocation3 + $0x10] sm:$0xff]
    %v132 = vld [vmem:[#allocation3 + $0x18] sm:$0xff]
    %v133 = vld [vmem:[#allocation3 + $0x20] sm:$0xff]
    %v134 = vld [vmem:[#allocation3 + $0x28] sm:$0xff]
    %v135 = vld [vmem:[#allocation3 + $0x30] sm:$0xff]
    %v136 = vld [vmem:[#allocation3 + $0x38] sm:$0xff]
    %v137 = vld [vmem:[#allocation3 + $0x40] sm:$0xff]
    %v138 = vld [vmem:[#allocation3 + $0x48] sm:$0xff]
    %v139 = vld [vmem:[#allocation3 + $0x50] sm:$0xff]
    %v140 = vld [vmem:[#allocation3 + $0x58] sm:$0xff]
    %141 = vrot.lane.b32.xlu0 %v112, 17
    %v142 = vpop.permute.xlu0 %141
    %143 = vrot.lane.b32.xlu0 %v114, 17
    %v144 = vpop.permute.xlu0 %143
    %145 = vrot.lane.b32.xlu0 %v116, 17
    %v146 = vpop.permute.xlu0 %145
    %147 = vrot.lane.b32.xlu0 %v118, 17
    %v148 = vpop.permute.xlu0 %147
    %149 = vrot.lane.b32.xlu0 %v113, 17
    %v150 = vpop.permute.xlu0 %149
    %151 = vrot.lane.b32.xlu0 %v115, 17
    %v152 = vpop.permute.xlu0 %151
    %153 = vrot.lane.b32.xlu0 %v117, 17
    %v154 = vpop.permute.xlu0 %153
    %155 = vrot.lane.b32.xlu0 %v119, 17
    %v156 = vpop.permute.xlu0 %155
    %v157 = vlaneseq
    %v158 = vand.u32 %v157, 127
    %vm159 = vcmp.lt.s32.totalorder %v158, 17
    %v160 = vsel %vm159, %v142, %v150
    %v161 = vsel %vm159, %v144, %v152
    %v162 = vsel %vm159, %v146, %v154
    %v163 = vsel %vm159, %v148, %v156
    %v164 = vsel %vm159, %v150, %v142
    %v165 = vsel %vm159, %v152, %v144
    %v166 = vsel %vm159, %v154, %v146
    %v167 = vsel %vm159, %v156, %v148
    %v169 = vlaneseq
    %v170 = vshrl.u32 %v169, 7
    %v171 = vsub.s32 0, %v170
    %v172 = vrot.slane %v77, %v171
    %v173 = vlaneseq
    %v174 = vshrl.u32 %v173, 7
    %v175 = vsub.s32 1, %v174
    %v176 = vrot.slane %v77, %v175
    %v179 = vmul.f32 %v164, %v172
    %v180 = vmul.f32 %v160, %v176
    %v181 = vmul.f32 %v165, %v172
    %v182 = vmul.f32 %v161, %v176
    %v183 = vmul.f32 %v166, %v172
    %v184 = vmul.f32 %v162, %v176
    %v185 = vmul.f32 %v167, %v172
    %v186 = vmul.f32 %v163, %v176
    %187 = vst [vmem:[#allocation2] sm:$0xff] %v179
    %188 = vst [vmem:[#allocation2 + $0x8] sm:$0xff] %v180
    %189 = vst [vmem:[#allocation2 + $0x20] sm:$0xff] %v181
    %190 = vst [vmem:[#allocation2 + $0x28] sm:$0xff] %v182
    %191 = vst [vmem:[#allocation2 + $0x40] sm:$0xff] %v183
    %192 = vst [vmem:[#allocation2 + $0x48] sm:$0xff] %v184
    %193 = vst [vmem:[#allocation2 + $0x60] sm:$0xff] %v185
    %194 = vst [vmem:[#allocation2 + $0x68] sm:$0xff] %v186
    %195 = vrot.lane.b32.xlu0 %v112, 16
    %v196 = vpop.permute.xlu0 %195
    %197 = vrot.lane.b32.xlu0 %v114, 16
    %v198 = vpop.permute.xlu0 %197
    %199 = vrot.lane.b32.xlu0 %v116, 16
    %v200 = vpop.permute.xlu0 %199
    %201 = vrot.lane.b32.xlu0 %v118, 16
    %v202 = vpop.permute.xlu0 %201
    %203 = vrot.lane.b32.xlu0 %v113, 16
    %v204 = vpop.permute.xlu0 %203
    %205 = vrot.lane.b32.xlu0 %v115, 16
    %v206 = vpop.permute.xlu0 %205
    %207 = vrot.lane.b32.xlu0 %v117, 16
    %v208 = vpop.permute.xlu0 %207
    %209 = vrot.lane.b32.xlu0 %v119, 16
    %v210 = vpop.permute.xlu0 %209
    %vm211 = vcmp.lt.s32.totalorder %v158, 16
    %v212 = vsel %vm211, %v196, %v204
    %v213 = vsel %vm211, %v198, %v206
    %v214 = vsel %vm211, %v200, %v208
    %v215 = vsel %vm211, %v202, %v210
    %v216 = vsel %vm211, %v204, %v196
    %v217 = vsel %vm211, %v206, %v198
    %v218 = vsel %vm211, %v208, %v200
    %v219 = vsel %vm211, %v210, %v202
    %v221 = vlaneseq
    %v222 = vshrl.u32 %v221, 7
    %v223 = vsub.s32 0, %v222
    %v224 = vrot.slane %v79, %v223
    %v225 = vlaneseq
    %v226 = vshrl.u32 %v225, 7
    %v227 = vsub.s32 1, %v226
    %v228 = vrot.slane %v79, %v227
    %v231 = vmul.f32 %v216, %v224
    %v232 = vmul.f32 %v212, %v228
    %v233 = vmul.f32 %v217, %v224
    %v234 = vmul.f32 %v213, %v228
    %v235 = vmul.f32 %v218, %v224
    %v236 = vmul.f32 %v214, %v228
    %v237 = vmul.f32 %v219, %v224
    %v238 = vmul.f32 %v215, %v228
    %239 = vst [vmem:[#allocation2 + $0x80] sm:$0xff] %v231
    %240 = vst [vmem:[#allocation2 + $0x88] sm:$0xff] %v232
    %241 = vst [vmem:[#allocation2 + $0xa0] sm:$0xff] %v233
    %242 = vst [vmem:[#allocation2 + $0xa8] sm:$0xff] %v234
    %243 = vst [vmem:[#allocation2 + $0xc0] sm:$0xff] %v235
    %244 = vst [vmem:[#allocation2 + $0xc8] sm:$0xff] %v236
    %245 = vst [vmem:[#allocation2 + $0xe0] sm:$0xff] %v237
    %246 = vst [vmem:[#allocation2 + $0xe8] sm:$0xff] %v238
    %247 = vrot.lane.b32.xlu0 %v112, 15
    %v248 = vpop.permute.xlu0 %247
    %249 = vrot.lane.b32.xlu0 %v114, 15
    %v250 = vpop.permute.xlu0 %249
    %251 = vrot.lane.b32.xlu0 %v116, 15
    %v252 = vpop.permute.xlu0 %251
    %253 = vrot.lane.b32.xlu0 %v118, 15
    %v254 = vpop.permute.xlu0 %253
    %255 = vrot.lane.b32.xlu0 %v113, 15
    %v256 = vpop.permute.xlu0 %255
    %257 = vrot.lane.b32.xlu0 %v115, 15
    %v258 = vpop.permute.xlu0 %257
    %259 = vrot.lane.b32.xlu0 %v117, 15
    %v260 = vpop.permute.xlu0 %259
    %261 = vrot.lane.b32.xlu0 %v119, 15
    %v262 = vpop.permute.xlu0 %261
    %vm263 = vcmp.lt.s32.totalorder %v158, 15
    %v264 = vsel %vm263, %v248, %v256
    %v265 = vsel %vm263, %v250, %v258
    %v266 = vsel %vm263, %v252, %v260
    %v267 = vsel %vm263, %v254, %v262
    %v268 = vsel %vm263, %v256, %v248
    %v269 = vsel %vm263, %v258, %v250
    %v270 = vsel %vm263, %v260, %v252
    %v271 = vsel %vm263, %v262, %v254
    %v273 = vlaneseq
    %v274 = vshrl.u32 %v273, 7
    %v275 = vsub.s32 0, %v274
    %v276 = vrot.slane %v81, %v275
    %v277 = vlaneseq
    %v278 = vshrl.u32 %v277, 7
    %v279 = vsub.s32 1, %v278
    %v280 = vrot.slane %v81, %v279
    %v283 = vmul.f32 %v268, %v276
    %v284 = vmul.f32 %v264, %v280
    %v285 = vmul.f32 %v269, %v276
    %v286 = vmul.f32 %v265, %v280
    %v287 = vmul.f32 %v270, %v276
    %v288 = vmul.f32 %v266, %v280
    %v289 = vmul.f32 %v271, %v276
    %v290 = vmul.f32 %v267, %v280
    %291 = vst [vmem:[#allocation2 + $0x100] sm:$0xff] %v283
    %292 = vst [vmem:[#allocation2 + $0x108] sm:$0xff] %v284
    %293 = vst [vmem:[#allocation2 + $0x120] sm:$0xff] %v285
    %294 = vst [vmem:[#allocation2 + $0x128] sm:$0xff] %v286
    %295 = vst [vmem:[#allocation2 + $0x140] sm:$0xff] %v287
    %296 = vst [vmem:[#allocation2 + $0x148] sm:$0xff] %v288
    %297 = vst [vmem:[#allocation2 + $0x160] sm:$0xff] %v289
    %298 = vst [vmem:[#allocation2 + $0x168] sm:$0xff] %v290
    %299 = vrot.lane.b32.xlu0 %v112, 1
    %v300 = vpop.permute.xlu0 %299
    %301 = vrot.lane.b32.xlu0 %v114, 1
    %v302 = vpop.permute.xlu0 %301
    %303 = vrot.lane.b32.xlu0 %v116, 1
    %v304 = vpop.permute.xlu0 %303
    %305 = vrot.lane.b32.xlu0 %v118, 1
    %v306 = vpop.permute.xlu0 %305
    %307 = vrot.lane.b32.xlu0 %v113, 1
    %v308 = vpop.permute.xlu0 %307
    %309 = vrot.lane.b32.xlu0 %v115, 1
    %v310 = vpop.permute.xlu0 %309
    %311 = vrot.lane.b32.xlu0 %v117, 1
    %v312 = vpop.permute.xlu0 %311
    %313 = vrot.lane.b32.xlu0 %v119, 1
    %v314 = vpop.permute.xlu0 %313
    %vm315 = vcmp.lt.s32.totalorder %v158, 1
    %v316 = vsel %vm315, %v300, %v308
    %v317 = vsel %vm315, %v302, %v310
    %v318 = vsel %vm315, %v304, %v312
    %v319 = vsel %vm315, %v306, %v314
    %v320 = vsel %vm315, %v308, %v300
    %v321 = vsel %vm315, %v310, %v302
    %v322 = vsel %vm315, %v312, %v304
    %v323 = vsel %vm315, %v314, %v306
    %v325 = vlaneseq
    %v326 = vshrl.u32 %v325, 7
    %v327 = vsub.s32 0, %v326
    %v328 = vrot.slane %v83, %v327
    %v329 = vlaneseq
    %v330 = vshrl.u32 %v329, 7
    %v331 = vsub.s32 1, %v330
    %v332 = vrot.slane %v83, %v331
    %v335 = vmul.f32 %v320, %v328
    %v336 = vmul.f32 %v316, %v332
    %v337 = vmul.f32 %v321, %v328
    %v338 = vmul.f32 %v317, %v332
    %v339 = vmul.f32 %v322, %v328
    %v340 = vmul.f32 %v318, %v332
    %v341 = vmul.f32 %v323, %v328
    %v342 = vmul.f32 %v319, %v332
    %343 = vst [vmem:[#allocation2 + $0x180] sm:$0xff] %v335
    %344 = vst [vmem:[#allocation2 + $0x188] sm:$0xff] %v336
    %345 = vst [vmem:[#allocation2 + $0x1a0] sm:$0xff] %v337
    %346 = vst [vmem:[#allocation2 + $0x1a8] sm:$0xff] %v338
    %347 = vst [vmem:[#allocation2 + $0x1c0] sm:$0xff] %v339
    %348 = vst [vmem:[#allocation2 + $0x1c8] sm:$0xff] %v340
    %349 = vst [vmem:[#allocation2 + $0x1e0] sm:$0xff] %v341
    %350 = vst [vmem:[#allocation2 + $0x1e8] sm:$0xff] %v342
    %351 = vst [vmem:[#allocation2 + $0x200] sm:$0xff] %v112
    %352 = vst [vmem:[#allocation2 + $0x208] sm:$0xff] %v113
    %353 = vst [vmem:[#allocation2 + $0x220] sm:$0xff] %v114
    %354 = vst [vmem:[#allocation2 + $0x228] sm:$0xff] %v115
    %355 = vst [vmem:[#allocation2 + $0x240] sm:$0xff] %v116
    %356 = vst [vmem:[#allocation2 + $0x248] sm:$0xff] %v117
    %357 = vst [vmem:[#allocation2 + $0x260] sm:$0xff] %v118
    %358 = vst [vmem:[#allocation2 + $0x268] sm:$0xff] %v119
    %359 = vrot.lane.b32.xlu0 %v112, 127
    %v360 = vpop.permute.xlu0 %359
    %361 = vrot.lane.b32.xlu0 %v114, 127
    %v362 = vpop.permute.xlu0 %361
    %363 = vrot.lane.b32.xlu0 %v116, 127
    %v364 = vpop.permute.xlu0 %363
    %365 = vrot.lane.b32.xlu0 %v118, 127
    %v366 = vpop.permute.xlu0 %365
    %367 = vrot.lane.b32.xlu0 %v113, 127
    %v368 = vpop.permute.xlu0 %367
    %369 = vrot.lane.b32.xlu0 %v115, 127
    %v370 = vpop.permute.xlu0 %369
    %371 = vrot.lane.b32.xlu0 %v117, 127
    %v372 = vpop.permute.xlu0 %371
    %373 = vrot.lane.b32.xlu0 %v119, 127
    %v374 = vpop.permute.xlu0 %373
    %vm375 = vcmp.lt.s32.totalorder %v158, 127
    %v376 = vsel %vm375, %v360, %v368
    %v377 = vsel %vm375, %v362, %v370
    %v378 = vsel %vm375, %v364, %v372
    %v379 = vsel %vm375, %v366, %v374
    %v380 = vsel %vm375, %v368, %v360
    %v381 = vsel %vm375, %v370, %v362
    %v382 = vsel %vm375, %v372, %v364
    %v383 = vsel %vm375, %v374, %v366
    %v385 = vlaneseq
    %v386 = vshrl.u32 %v385, 7
    %v387 = vsub.s32 0, %v386
    %v388 = vrot.slane %v85, %v387
    %v389 = vlaneseq
    %v390 = vshrl.u32 %v389, 7
    %v391 = vsub.s32 1, %v390
    %v392 = vrot.slane %v85, %v391
    %v395 = vmul.f32 %v376, %v388
    %v396 = vmul.f32 %v380, %v392
    %v397 = vmul.f32 %v377, %v388
    %v398 = vmul.f32 %v381, %v392
    %v399 = vmul.f32 %v378, %v388
    %v400 = vmul.f32 %v382, %v392
    %v401 = vmul.f32 %v379, %v388
    %v402 = vmul.f32 %v383, %v392
    %403 = vst [vmem:[#allocation2 + $0x280] sm:$0xff] %v395
    %404 = vst [vmem:[#allocation2 + $0x288] sm:$0xff] %v396
    %405 = vst [vmem:[#allocation2 + $0x2a0] sm:$0xff] %v397
    %406 = vst [vmem:[#allocation2 + $0x2a8] sm:$0xff] %v398
    %407 = vst [vmem:[#allocation2 + $0x2c0] sm:$0xff] %v399
    %408 = vst [vmem:[#allocation2 + $0x2c8] sm:$0xff] %v400
    %409 = vst [vmem:[#allocation2 + $0x2e0] sm:$0xff] %v401
    %410 = vst [vmem:[#allocation2 + $0x2e8] sm:$0xff] %v402
    %411 = vrot.lane.b32.xlu0 %v112, 113
    %v412 = vpop.permute.xlu0 %411
    %413 = vrot.lane.b32.xlu0 %v114, 113
    %v414 = vpop.permute.xlu0 %413
    %415 = vrot.lane.b32.xlu0 %v116, 113
    %v416 = vpop.permute.xlu0 %415
    %417 = vrot.lane.b32.xlu0 %v118, 113
    %v418 = vpop.permute.xlu0 %417
    %419 = vrot.lane.b32.xlu0 %v113, 113
    %v420 = vpop.permute.xlu0 %419
    %421 = vrot.lane.b32.xlu0 %v115, 113
    %v422 = vpop.permute.xlu0 %421
    %423 = vrot.lane.b32.xlu0 %v117, 113
    %v424 = vpop.permute.xlu0 %423
    %425 = vrot.lane.b32.xlu0 %v119, 113
    %v426 = vpop.permute.xlu0 %425
    %vm427 = vcmp.lt.s32.totalorder %v158, 113
    %v428 = vsel %vm427, %v412, %v420
    %v429 = vsel %vm427, %v414, %v422
    %v430 = vsel %vm427, %v416, %v424
    %v431 = vsel %vm427, %v418, %v426
    %v432 = vsel %vm427, %v420, %v412
    %v433 = vsel %vm427, %v422, %v414
    %v434 = vsel %vm427, %v424, %v416
    %v435 = vsel %vm427, %v426, %v418
    %v437 = vlaneseq
    %v438 = vshrl.u32 %v437, 7
    %v439 = vsub.s32 0, %v438
    %v440 = vrot.slane %v87, %v439
    %v441 = vlaneseq
    %v442 = vshrl.u32 %v441, 7
    %v443 = vsub.s32 1, %v442
    %v444 = vrot.slane %v87, %v443
    %v447 = vmul.f32 %v428, %v440
    %v448 = vmul.f32 %v432, %v444
    %v449 = vmul.f32 %v429, %v440
    %v450 = vmul.f32 %v433, %v444
    %v451 = vmul.f32 %v430, %v440
    %v452 = vmul.f32 %v434, %v444
    %v453 = vmul.f32 %v431, %v440
    %v454 = vmul.f32 %v435, %v444
    %455 = vst [vmem:[#allocation2 + $0x300] sm:$0xff] %v447
    %456 = vst [vmem:[#allocation2 + $0x308] sm:$0xff] %v448
    %457 = vst [vmem:[#allocation2 + $0x320] sm:$0xff] %v449
    %458 = vst [vmem:[#allocation2 + $0x328] sm:$0xff] %v450
    %459 = vst [vmem:[#allocation2 + $0x340] sm:$0xff] %v451
    %460 = vst [vmem:[#allocation2 + $0x348] sm:$0xff] %v452
    %461 = vst [vmem:[#allocation2 + $0x360] sm:$0xff] %v453
    %462 = vst [vmem:[#allocation2 + $0x368] sm:$0xff] %v454
    %463 = vrot.lane.b32.xlu0 %v112, 112
    %v464 = vpop.permute.xlu0 %463
    %465 = vrot.lane.b32.xlu0 %v114, 112
    %v466 = vpop.permute.xlu0 %465
    %467 = vrot.lane.b32.xlu0 %v116, 112
    %v468 = vpop.permute.xlu0 %467
    %469 = vrot.lane.b32.xlu0 %v118, 112
    %v470 = vpop.permute.xlu0 %469
    %471 = vrot.lane.b32.xlu0 %v113, 112
    %v472 = vpop.permute.xlu0 %471
    %473 = vrot.lane.b32.xlu0 %v115, 112
    %v474 = vpop.permute.xlu0 %473
    %475 = vrot.lane.b32.xlu0 %v117, 112
    %v476 = vpop.permute.xlu0 %475
    %477 = vrot.lane.b32.xlu0 %v119, 112
    %v478 = vpop.permute.xlu0 %477
    %vm479 = vcmp.lt.s32.totalorder %v158, 112
    %v480 = vsel %vm479, %v464, %v472
    %v481 = vsel %vm479, %v466, %v474
    %v482 = vsel %vm479, %v468, %v476
    %v483 = vsel %vm479, %v470, %v478
    %v484 = vsel %vm479, %v472, %v464
    %v485 = vsel %vm479, %v474, %v466
    %v486 = vsel %vm479, %v476, %v468
    %v487 = vsel %vm479, %v478, %v470
    %v489 = vlaneseq
    %v490 = vshrl.u32 %v489, 7
    %v491 = vsub.s32 0, %v490
    %v492 = vrot.slane %v89, %v491
    %v493 = vlaneseq
    %v494 = vshrl.u32 %v493, 7
    %v495 = vsub.s32 1, %v494
    %v496 = vrot.slane %v89, %v495
    %v499 = vmul.f32 %v480, %v492
    %v500 = vmul.f32 %v484, %v496
    %v501 = vmul.f32 %v481, %v492
    %v502 = vmul.f32 %v485, %v496
    %v503 = vmul.f32 %v482, %v492
    %v504 = vmul.f32 %v486, %v496
    %v505 = vmul.f32 %v483, %v492
    %v506 = vmul.f32 %v487, %v496
    %507 = vst [vmem:[#allocation2 + $0x380] sm:$0xff] %v499
    %508 = vst [vmem:[#allocation2 + $0x388] sm:$0xff] %v500
    %509 = vst [vmem:[#allocation2 + $0x3a0] sm:$0xff] %v501
    %510 = vst [vmem:[#allocation2 + $0x3a8] sm:$0xff] %v502
    %511 = vst [vmem:[#allocation2 + $0x3c0] sm:$0xff] %v503
    %512 = vst [vmem:[#allocation2 + $0x3c8] sm:$0xff] %v504
    %513 = vst [vmem:[#allocation2 + $0x3e0] sm:$0xff] %v505
    %514 = vst [vmem:[#allocation2 + $0x3e8] sm:$0xff] %v506
    %515 = vrot.lane.b32.xlu0 %v112, 111
    %v516 = vpop.permute.xlu0 %515
    %517 = vrot.lane.b32.xlu0 %v114, 111
    %v518 = vpop.permute.xlu0 %517
    %519 = vrot.lane.b32.xlu0 %v116, 111
    %v520 = vpop.permute.xlu0 %519
    %521 = vrot.lane.b32.xlu0 %v118, 111
    %v522 = vpop.permute.xlu0 %521
    %523 = vrot.lane.b32.xlu0 %v113, 111
    %v524 = vpop.permute.xlu0 %523
    %525 = vrot.lane.b32.xlu0 %v115, 111
    %v526 = vpop.permute.xlu0 %525
    %527 = vrot.lane.b32.xlu0 %v117, 111
    %v528 = vpop.permute.xlu0 %527
    %529 = vrot.lane.b32.xlu0 %v119, 111
    %v530 = vpop.permute.xlu0 %529
    %vm531 = vcmp.lt.s32.totalorder %v158, 111
    %v532 = vsel %vm531, %v516, %v524
    %v533 = vsel %vm531, %v518, %v526
    %v534 = vsel %vm531, %v520, %v528
    %v535 = vsel %vm531, %v522, %v530
    %v536 = vsel %vm531, %v524, %v516
    %v537 = vsel %vm531, %v526, %v518
    %v538 = vsel %vm531, %v528, %v520
    %v539 = vsel %vm531, %v530, %v522
    %v541 = vlaneseq
    %v542 = vshrl.u32 %v541, 7
    %v543 = vsub.s32 0, %v542
    %v544 = vrot.slane %v91, %v543
    %v545 = vlaneseq
    %v546 = vshrl.u32 %v545, 7
    %v547 = vsub.s32 1, %v546
    %v548 = vrot.slane %v91, %v547
    %v551 = vmul.f32 %v532, %v544
    %v552 = vmul.f32 %v536, %v548
    %v553 = vmul.f32 %v533, %v544
    %v554 = vmul.f32 %v537, %v548
    %v555 = vmul.f32 %v534, %v544
    %v556 = vmul.f32 %v538, %v548
    %v557 = vmul.f32 %v535, %v544
    %v558 = vmul.f32 %v539, %v548
    %559 = vst [vmem:[#allocation2 + $0x400] sm:$0xff] %v551
    %560 = vst [vmem:[#allocation2 + $0x408] sm:$0xff] %v552
    %561 = vst [vmem:[#allocation2 + $0x420] sm:$0xff] %v553
    %562 = vst [vmem:[#allocation2 + $0x428] sm:$0xff] %v554
    %563 = vst [vmem:[#allocation2 + $0x440] sm:$0xff] %v555
    %564 = vst [vmem:[#allocation2 + $0x448] sm:$0xff] %v556
    %565 = vst [vmem:[#allocation2 + $0x460] sm:$0xff] %v557
    %566 = vst [vmem:[#allocation2 + $0x468] sm:$0xff] %v558
    %567 = vrot.lane.b32.xlu0 %v121, 17
    %v568 = vpop.permute.xlu0 %567
    %569 = vrot.lane.b32.xlu0 %v123, 17
    %v570 = vpop.permute.xlu0 %569
    %571 = vrot.lane.b32.xlu0 %v125, 17
    %v572 = vpop.permute.xlu0 %571
    %573 = vrot.lane.b32.xlu0 %v127, 17
    %v574 = vpop.permute.xlu0 %573
    %575 = vrot.lane.b32.xlu0 %v122, 17
    %v576 = vpop.permute.xlu0 %575
    %577 = vrot.lane.b32.xlu0 %v124, 17
    %v578 = vpop.permute.xlu0 %577
    %579 = vrot.lane.b32.xlu0 %v126, 17
    %v580 = vpop.permute.xlu0 %579
    %581 = vrot.lane.b32.xlu0 %v128, 17
    %v582 = vpop.permute.xlu0 %581
    %v583 = vsel %vm159, %v568, %v576
    %v584 = vsel %vm159, %v570, %v578
    %v585 = vsel %vm159, %v572, %v580
    %v586 = vsel %vm159, %v574, %v582
    %v587 = vsel %vm159, %v576, %v568
    %v588 = vsel %vm159, %v578, %v570
    %v589 = vsel %vm159, %v580, %v572
    %v590 = vsel %vm159, %v582, %v574
    %v591 = vmul.f32 %v587, %v172
    %v592 = vmul.f32 %v583, %v176
    %v593 = vmul.f32 %v588, %v172
    %v594 = vmul.f32 %v584, %v176
    %v595 = vmul.f32 %v589, %v172
    %v596 = vmul.f32 %v585, %v176
    %v597 = vmul.f32 %v590, %v172
    %v598 = vmul.f32 %v586, %v176
    %599 = vst [vmem:[#allocation2 + $0x10] sm:$0xff] %v591
    %600 = vst [vmem:[#allocation2 + $0x18] sm:$0xff] %v592
    %601 = vst [vmem:[#allocation2 + $0x30] sm:$0xff] %v593
    %602 = vst [vmem:[#allocation2 + $0x38] sm:$0xff] %v594
    %603 = vst [vmem:[#allocation2 + $0x50] sm:$0xff] %v595
    %604 = vst [vmem:[#allocation2 + $0x58] sm:$0xff] %v596
    %605 = vst [vmem:[#allocation2 + $0x70] sm:$0xff] %v597
    %606 = vst [vmem:[#allocation2 + $0x78] sm:$0xff] %v598
    %607 = vrot.lane.b32.xlu0 %v121, 16
    %v608 = vpop.permute.xlu0 %607
    %609 = vrot.lane.b32.xlu0 %v123, 16
    %v610 = vpop.permute.xlu0 %609
    %611 = vrot.lane.b32.xlu0 %v125, 16
    %v612 = vpop.permute.xlu0 %611
    %613 = vrot.lane.b32.xlu0 %v127, 16
    %v614 = vpop.permute.xlu0 %613
    %615 = vrot.lane.b32.xlu0 %v122, 16
    %v616 = vpop.permute.xlu0 %615
    %617 = vrot.lane.b32.xlu0 %v124, 16
    %v618 = vpop.permute.xlu0 %617
    %619 = vrot.lane.b32.xlu0 %v126, 16
    %v620 = vpop.permute.xlu0 %619
    %621 = vrot.lane.b32.xlu0 %v128, 16
    %v622 = vpop.permute.xlu0 %621
    %v623 = vsel %vm211, %v608, %v616
    %v624 = vsel %vm211, %v610, %v618
    %v625 = vsel %vm211, %v612, %v620
    %v626 = vsel %vm211, %v614, %v622
    %v627 = vsel %vm211, %v616, %v608
    %v628 = vsel %vm211, %v618, %v610
    %v629 = vsel %vm211, %v620, %v612
    %v630 = vsel %vm211, %v622, %v614
    %v631 = vmul.f32 %v627, %v224
    %v632 = vmul.f32 %v623, %v228
    %v633 = vmul.f32 %v628, %v224
    %v634 = vmul.f32 %v624, %v228
    %v635 = vmul.f32 %v629, %v224
    %v636 = vmul.f32 %v625, %v228
    %v637 = vmul.f32 %v630, %v224
    %v638 = vmul.f32 %v626, %v228
    %639 = vst [vmem:[#allocation2 + $0x90] sm:$0xff] %v631
    %640 = vst [vmem:[#allocation2 + $0x98] sm:$0xff] %v632
    %641 = vst [vmem:[#allocation2 + $0xb0] sm:$0xff] %v633
    %642 = vst [vmem:[#allocation2 + $0xb8] sm:$0xff] %v634
    %643 = vst [vmem:[#allocation2 + $0xd0] sm:$0xff] %v635
    %644 = vst [vmem:[#allocation2 + $0xd8] sm:$0xff] %v636
    %645 = vst [vmem:[#allocation2 + $0xf0] sm:$0xff] %v637
    %646 = vst [vmem:[#allocation2 + $0xf8] sm:$0xff] %v638
    %647 = vrot.lane.b32.xlu0 %v121, 15
    %v648 = vpop.permute.xlu0 %647
    %649 = vrot.lane.b32.xlu0 %v123, 15
    %v650 = vpop.permute.xlu0 %649
    %651 = vrot.lane.b32.xlu0 %v125, 15
    %v652 = vpop.permute.xlu0 %651
    %653 = vrot.lane.b32.xlu0 %v127, 15
    %v654 = vpop.permute.xlu0 %653
    %655 = vrot.lane.b32.xlu0 %v122, 15
    %v656 = vpop.permute.xlu0 %655
    %657 = vrot.lane.b32.xlu0 %v124, 15
    %v658 = vpop.permute.xlu0 %657
    %659 = vrot.lane.b32.xlu0 %v126, 15
    %v660 = vpop.permute.xlu0 %659
    %661 = vrot.lane.b32.xlu0 %v128, 15
    %v662 = vpop.permute.xlu0 %661
    %v663 = vsel %vm263, %v648, %v656
    %v664 = vsel %vm263, %v650, %v658
    %v665 = vsel %vm263, %v652, %v660
    %v666 = vsel %vm263, %v654, %v662
    %v667 = vsel %vm263, %v656, %v648
    %v668 = vsel %vm263, %v658, %v650
    %v669 = vsel %vm263, %v660, %v652
    %v670 = vsel %vm263, %v662, %v654
    %v671 = vmul.f32 %v667, %v276
    %v672 = vmul.f32 %v663, %v280
    %v673 = vmul.f32 %v668, %v276
    %v674 = vmul.f32 %v664, %v280
    %v675 = vmul.f32 %v669, %v276
    %v676 = vmul.f32 %v665, %v280
    %v677 = vmul.f32 %v670, %v276
    %v678 = vmul.f32 %v666, %v280
    %679 = vst [vmem:[#allocation2 + $0x110] sm:$0xff] %v671
    %680 = vst [vmem:[#allocation2 + $0x118] sm:$0xff] %v672
    %681 = vst [vmem:[#allocation2 + $0x130] sm:$0xff] %v673
    %682 = vst [vmem:[#allocation2 + $0x138] sm:$0xff] %v674
    %683 = vst [vmem:[#allocation2 + $0x150] sm:$0xff] %v675
    %684 = vst [vmem:[#allocation2 + $0x158] sm:$0xff] %v676
    %685 = vst [vmem:[#allocation2 + $0x170] sm:$0xff] %v677
    %686 = vst [vmem:[#allocation2 + $0x178] sm:$0xff] %v678
    %687 = vrot.lane.b32.xlu0 %v121, 1
    %v688 = vpop.permute.xlu0 %687
    %689 = vrot.lane.b32.xlu0 %v123, 1
    %v690 = vpop.permute.xlu0 %689
    %691 = vrot.lane.b32.xlu0 %v125, 1
    %v692 = vpop.permute.xlu0 %691
    %693 = vrot.lane.b32.xlu0 %v127, 1
    %v694 = vpop.permute.xlu0 %693
    %695 = vrot.lane.b32.xlu0 %v122, 1
    %v696 = vpop.permute.xlu0 %695
    %697 = vrot.lane.b32.xlu0 %v124, 1
    %v698 = vpop.permute.xlu0 %697
    %699 = vrot.lane.b32.xlu0 %v126, 1
    %v700 = vpop.permute.xlu0 %699
    %701 = vrot.lane.b32.xlu0 %v128, 1
    %v702 = vpop.permute.xlu0 %701
    %v703 = vsel %vm315, %v688, %v696
    %v704 = vsel %vm315, %v690, %v698
    %v705 = vsel %vm315, %v692, %v700
    %v706 = vsel %vm315, %v694, %v702
    %v707 = vsel %vm315, %v696, %v688
    %v708 = vsel %vm315, %v698, %v690
    %v709 = vsel %vm315, %v700, %v692
    %v710 = vsel %vm315, %v702, %v694
    %v711 = vmul.f32 %v707, %v328
    %v712 = vmul.f32 %v703, %v332
    %v713 = vmul.f32 %v708, %v328
    %v714 = vmul.f32 %v704, %v332
    %v715 = vmul.f32 %v709, %v328
    %v716 = vmul.f32 %v705, %v332
    %v717 = vmul.f32 %v710, %v328
    %v718 = vmul.f32 %v706, %v332
    %719 = vst [vmem:[#allocation2 + $0x190] sm:$0xff] %v711
    %720 = vst [vmem:[#allocation2 + $0x198] sm:$0xff] %v712
    %721 = vst [vmem:[#allocation2 + $0x1b0] sm:$0xff] %v713
    %722 = vst [vmem:[#allocation2 + $0x1b8] sm:$0xff] %v714
    %723 = vst [vmem:[#allocation2 + $0x1d0] sm:$0xff] %v715
    %724 = vst [vmem:[#allocation2 + $0x1d8] sm:$0xff] %v716
    %725 = vst [vmem:[#allocation2 + $0x1f0] sm:$0xff] %v717
    %726 = vst [vmem:[#allocation2 + $0x1f8] sm:$0xff] %v718
    %727 = vst [vmem:[#allocation2 + $0x210] sm:$0xff] %v121
    %728 = vst [vmem:[#allocation2 + $0x218] sm:$0xff] %v122
    %729 = vst [vmem:[#allocation2 + $0x230] sm:$0xff] %v123
    %730 = vst [vmem:[#allocation2 + $0x238] sm:$0xff] %v124
    %731 = vst [vmem:[#allocation2 + $0x250] sm:$0xff] %v125
    %732 = vst [vmem:[#allocation2 + $0x258] sm:$0xff] %v126
    %733 = vst [vmem:[#allocation2 + $0x270] sm:$0xff] %v127
    %734 = vst [vmem:[#allocation2 + $0x278] sm:$0xff] %v128
    %735 = vrot.lane.b32.xlu0 %v121, 127
    %v736 = vpop.permute.xlu0 %735
    %737 = vrot.lane.b32.xlu0 %v123, 127
    %v738 = vpop.permute.xlu0 %737
    %739 = vrot.lane.b32.xlu0 %v125, 127
    %v740 = vpop.permute.xlu0 %739
    %741 = vrot.lane.b32.xlu0 %v127, 127
    %v742 = vpop.permute.xlu0 %741
    %743 = vrot.lane.b32.xlu0 %v122, 127
    %v744 = vpop.permute.xlu0 %743
    %745 = vrot.lane.b32.xlu0 %v124, 127
    %v746 = vpop.permute.xlu0 %745
    %747 = vrot.lane.b32.xlu0 %v126, 127
    %v748 = vpop.permute.xlu0 %747
    %749 = vrot.lane.b32.xlu0 %v128, 127
    %v750 = vpop.permute.xlu0 %749
    %v751 = vsel %vm375, %v736, %v744
    %v752 = vsel %vm375, %v738, %v746
    %v753 = vsel %vm375, %v740, %v748
    %v754 = vsel %vm375, %v742, %v750
    %v755 = vsel %vm375, %v744, %v736
    %v756 = vsel %vm375, %v746, %v738
    %v757 = vsel %vm375, %v748, %v740
    %v758 = vsel %vm375, %v750, %v742
    %v759 = vmul.f32 %v751, %v388
    %v760 = vmul.f32 %v755, %v392
    %v761 = vmul.f32 %v752, %v388
    %v762 = vmul.f32 %v756, %v392
    %v763 = vmul.f32 %v753, %v388
    %v764 = vmul.f32 %v757, %v392
    %v765 = vmul.f32 %v754, %v388
    %v766 = vmul.f32 %v758, %v392
    %767 = vst [vmem:[#allocation2 + $0x290] sm:$0xff] %v759
    %768 = vst [vmem:[#allocation2 + $0x298] sm:$0xff] %v760
    %769 = vst [vmem:[#allocation2 + $0x2b0] sm:$0xff] %v761
    %770 = vst [vmem:[#allocation2 + $0x2b8] sm:$0xff] %v762
    %771 = vst [vmem:[#allocation2 + $0x2d0] sm:$0xff] %v763
    %772 = vst [vmem:[#allocation2 + $0x2d8] sm:$0xff] %v764
    %773 = vst [vmem:[#allocation2 + $0x2f0] sm:$0xff] %v765
    %774 = vst [vmem:[#allocation2 + $0x2f8] sm:$0xff] %v766
    %775 = vrot.lane.b32.xlu0 %v121, 113
    %v776 = vpop.permute.xlu0 %775
    %777 = vrot.lane.b32.xlu0 %v123, 113
    %v778 = vpop.permute.xlu0 %777
    %779 = vrot.lane.b32.xlu0 %v125, 113
    %v780 = vpop.permute.xlu0 %779
    %781 = vrot.lane.b32.xlu0 %v127, 113
    %v782 = vpop.permute.xlu0 %781
    %783 = vrot.lane.b32.xlu0 %v122, 113
    %v784 = vpop.permute.xlu0 %783
    %785 = vrot.lane.b32.xlu0 %v124, 113
    %v786 = vpop.permute.xlu0 %785
    %787 = vrot.lane.b32.xlu0 %v126, 113
    %v788 = vpop.permute.xlu0 %787
    %789 = vrot.lane.b32.xlu0 %v128, 113
    %v790 = vpop.permute.xlu0 %789
    %v791 = vsel %vm427, %v776, %v784
    %v792 = vsel %vm427, %v778, %v786
    %v793 = vsel %vm427, %v780, %v788
    %v794 = vsel %vm427, %v782, %v790
    %v795 = vsel %vm427, %v784, %v776
    %v796 = vsel %vm427, %v786, %v778
    %v797 = vsel %vm427, %v788, %v780
    %v798 = vsel %vm427, %v790, %v782
    %v799 = vmul.f32 %v791, %v440
    %v800 = vmul.f32 %v795, %v444
    %v801 = vmul.f32 %v792, %v440
    %v802 = vmul.f32 %v796, %v444
    %v803 = vmul.f32 %v793, %v440
    %v804 = vmul.f32 %v797, %v444
    %v805 = vmul.f32 %v794, %v440
    %v806 = vmul.f32 %v798, %v444
    %807 = vst [vmem:[#allocation2 + $0x310] sm:$0xff] %v799
    %808 = vst [vmem:[#allocation2 + $0x318] sm:$0xff] %v800
    %809 = vst [vmem:[#allocation2 + $0x330] sm:$0xff] %v801
    %810 = vst [vmem:[#allocation2 + $0x338] sm:$0xff] %v802
    %811 = vst [vmem:[#allocation2 + $0x350] sm:$0xff] %v803
    %812 = vst [vmem:[#allocation2 + $0x358] sm:$0xff] %v804
    %813 = vst [vmem:[#allocation2 + $0x370] sm:$0xff] %v805
    %814 = vst [vmem:[#allocation2 + $0x378] sm:$0xff] %v806
    %815 = vrot.lane.b32.xlu0 %v121, 112
    %v816 = vpop.permute.xlu0 %815
    %817 = vrot.lane.b32.xlu0 %v123, 112
    %v818 = vpop.permute.xlu0 %817
    %819 = vrot.lane.b32.xlu0 %v125, 112
    %v820 = vpop.permute.xlu0 %819
    %821 = vrot.lane.b32.xlu0 %v127, 112
    %v822 = vpop.permute.xlu0 %821
    %823 = vrot.lane.b32.xlu0 %v122, 112
    %v824 = vpop.permute.xlu0 %823
    %825 = vrot.lane.b32.xlu0 %v124, 112
    %v826 = vpop.permute.xlu0 %825
    %827 = vrot.lane.b32.xlu0 %v126, 112
    %v828 = vpop.permute.xlu0 %827
    %829 = vrot.lane.b32.xlu0 %v128, 112
    %v830 = vpop.permute.xlu0 %829
    %v831 = vsel %vm479, %v816, %v824
    %v832 = vsel %vm479, %v818, %v826
    %v833 = vsel %vm479, %v820, %v828
    %v834 = vsel %vm479, %v822, %v830
    %v835 = vsel %vm479, %v824, %v816
    %v836 = vsel %vm479, %v826, %v818
    %v837 = vsel %vm479, %v828, %v820
    %v838 = vsel %vm479, %v830, %v822
    %v839 = vmul.f32 %v831, %v492
    %v840 = vmul.f32 %v835, %v496
    %v841 = vmul.f32 %v832, %v492
    %v842 = vmul.f32 %v836, %v496
    %v843 = vmul.f32 %v833, %v492
    %v844 = vmul.f32 %v837, %v496
    %v845 = vmul.f32 %v834, %v492
    %v846 = vmul.f32 %v838, %v496
    %847 = vst [vmem:[#allocation2 + $0x390] sm:$0xff] %v839
    %848 = vst [vmem:[#allocation2 + $0x398] sm:$0xff] %v840
    %849 = vst [vmem:[#allocation2 + $0x3b0] sm:$0xff] %v841
    %850 = vst [vmem:[#allocation2 + $0x3b8] sm:$0xff] %v842
    %851 = vst [vmem:[#allocation2 + $0x3d0] sm:$0xff] %v843
    %852 = vst [vmem:[#allocation2 + $0x3d8] sm:$0xff] %v844
    %853 = vst [vmem:[#allocation2 + $0x3f0] sm:$0xff] %v845
    %854 = vst [vmem:[#allocation2 + $0x3f8] sm:$0xff] %v846
    %855 = vrot.lane.b32.xlu0 %v121, 111
    %v856 = vpop.permute.xlu0 %855
    %857 = vrot.lane.b32.xlu0 %v123, 111
    %v858 = vpop.permute.xlu0 %857
    %859 = vrot.lane.b32.xlu0 %v125, 111
    %v860 = vpop.permute.xlu0 %859
    %861 = vrot.lane.b32.xlu0 %v127, 111
    %v862 = vpop.permute.xlu0 %861
    %863 = vrot.lane.b32.xlu0 %v122, 111
    %v864 = vpop.permute.xlu0 %863
    %865 = vrot.lane.b32.xlu0 %v124, 111
    %v866 = vpop.permute.xlu0 %865
    %867 = vrot.lane.b32.xlu0 %v126, 111
    %v868 = vpop.permute.xlu0 %867
    %869 = vrot.lane.b32.xlu0 %v128, 111
    %v870 = vpop.permute.xlu0 %869
    %v871 = vsel %vm531, %v856, %v864
    %v872 = vsel %vm531, %v858, %v866
    %v873 = vsel %vm531, %v860, %v868
    %v874 = vsel %vm531, %v862, %v870
    %v875 = vsel %vm531, %v864, %v856
    %v876 = vsel %vm531, %v866, %v858
    %v877 = vsel %vm531, %v868, %v860
    %v878 = vsel %vm531, %v870, %v862
    %v879 = vmul.f32 %v871, %v544
    %v880 = vmul.f32 %v875, %v548
    %v881 = vmul.f32 %v872, %v544
    %v882 = vmul.f32 %v876, %v548
    %v883 = vmul.f32 %v873, %v544
    %v884 = vmul.f32 %v877, %v548
    %v885 = vmul.f32 %v874, %v544
    %v886 = vmul.f32 %v878, %v548
    %887 = vst [vmem:[#allocation2 + $0x410] sm:$0xff] %v879
    %888 = vst [vmem:[#allocation2 + $0x418] sm:$0xff] %v880
    %889 = vst [vmem:[#allocation2 + $0x430] sm:$0xff] %v881
    %890 = vst [vmem:[#allocation2 + $0x438] sm:$0xff] %v882
    %891 = vst [vmem:[#allocation2 + $0x450] sm:$0xff] %v883
    %892 = vst [vmem:[#allocation2 + $0x458] sm:$0xff] %v884
    %893 = vst [vmem:[#allocation2 + $0x470] sm:$0xff] %v885
    %894 = vst [vmem:[#allocation2 + $0x478] sm:$0xff] %v886
    %v895 = vld [vmem:[#allocation2] sm:$0xff]
    %v896 = vld [vmem:[#allocation2 + $0x8] sm:$0xff]
    %v897 = vld [vmem:[#allocation2 + $0x10] sm:$0xff]
    %v898 = vld [vmem:[#allocation2 + $0x18] sm:$0xff]
    %v899 = vld [vmem:[#allocation2 + $0x20] sm:$0xff]
    %v900 = vld [vmem:[#allocation2 + $0x28] sm:$0xff]
    %v901 = vld [vmem:[#allocation2 + $0x30] sm:$0xff]
    %v902 = vld [vmem:[#allocation2 + $0x38] sm:$0xff]
    %v903 = vld [vmem:[#allocation2 + $0x40] sm:$0xff]
    %v904 = vld [vmem:[#allocation2 + $0x48] sm:$0xff]
    %v905 = vld [vmem:[#allocation2 + $0x50] sm:$0xff]
    %v906 = vld [vmem:[#allocation2 + $0x58] sm:$0xff]
    %v907 = vld [vmem:[#allocation2 + $0x60] sm:$0xff]
    %v908 = vld [vmem:[#allocation2 + $0x68] sm:$0xff]
    %v909 = vld [vmem:[#allocation2 + $0x70] sm:$0xff]
    %v910 = vld [vmem:[#allocation2 + $0x78] sm:$0xff]
    %v911 = vld [vmem:[#allocation2 + $0x80] sm:$0xff]
    %v912 = vld [vmem:[#allocation2 + $0x88] sm:$0xff]
    %v913 = vld [vmem:[#allocation2 + $0x90] sm:$0xff]
    %v914 = vld [vmem:[#allocation2 + $0x98] sm:$0xff]
    %v915 = vld [vmem:[#allocation2 + $0xa0] sm:$0xff]
    %v916 = vld [vmem:[#allocation2 + $0xa8] sm:$0xff]
    %v917 = vld [vmem:[#allocation2 + $0xb0] sm:$0xff]
    %v918 = vld [vmem:[#allocation2 + $0xb8] sm:$0xff]
    %v919 = vld [vmem:[#allocation2 + $0xc0] sm:$0xff]
    %v920 = vld [vmem:[#allocation2 + $0xc8] sm:$0xff]
    %v921 = vld [vmem:[#allocation2 + $0xd0] sm:$0xff]
    %v922 = vld [vmem:[#allocation2 + $0xd8] sm:$0xff]
    %v923 = vld [vmem:[#allocation2 + $0xe0] sm:$0xff]
    %v924 = vld [vmem:[#allocation2 + $0xe8] sm:$0xff]
    %v925 = vld [vmem:[#allocation2 + $0xf0] sm:$0xff]
    %v926 = vld [vmem:[#allocation2 + $0xf8] sm:$0xff]
    %v927 = vld [vmem:[#allocation2 + $0x100] sm:$0xff]
    %v928 = vld [vmem:[#allocation2 + $0x108] sm:$0xff]
    %v929 = vld [vmem:[#allocation2 + $0x110] sm:$0xff]
    %v930 = vld [vmem:[#allocation2 + $0x118] sm:$0xff]
    %v931 = vld [vmem:[#allocation2 + $0x120] sm:$0xff]
    %v932 = vld [vmem:[#allocation2 + $0x128] sm:$0xff]
    %v933 = vld [vmem:[#allocation2 + $0x130] sm:$0xff]
    %v934 = vld [vmem:[#allocation2 + $0x138] sm:$0xff]
    %v935 = vld [vmem:[#allocation2 + $0x140] sm:$0xff]
    %v936 = vld [vmem:[#allocation2 + $0x148] sm:$0xff]
    %v937 = vld [vmem:[#allocation2 + $0x150] sm:$0xff]
    %v938 = vld [vmem:[#allocation2 + $0x158] sm:$0xff]
    %v939 = vld [vmem:[#allocation2 + $0x160] sm:$0xff]
    %v940 = vld [vmem:[#allocation2 + $0x168] sm:$0xff]
    %v941 = vld [vmem:[#allocation2 + $0x170] sm:$0xff]
    %v942 = vld [vmem:[#allocation2 + $0x178] sm:$0xff]
    %v943 = vld [vmem:[#allocation2 + $0x180] sm:$0xff]
    %v944 = vld [vmem:[#allocation2 + $0x188] sm:$0xff]
    %v945 = vld [vmem:[#allocation2 + $0x190] sm:$0xff]
    %v946 = vld [vmem:[#allocation2 + $0x198] sm:$0xff]
    %v947 = vld [vmem:[#allocation2 + $0x1a0] sm:$0xff]
    %v948 = vld [vmem:[#allocation2 + $0x1a8] sm:$0xff]
    %v949 = vld [vmem:[#allocation2 + $0x1b0] sm:$0xff]
    %v950 = vld [vmem:[#allocation2 + $0x1b8] sm:$0xff]
    %v951 = vld [vmem:[#allocation2 + $0x1c0] sm:$0xff]
    %v952 = vld [vmem:[#allocation2 + $0x1c8] sm:$0xff]
    %v953 = vld [vmem:[#allocation2 + $0x1d0] sm:$0xff]
    %v954 = vld [vmem:[#allocation2 + $0x1d8] sm:$0xff]
    %v955 = vld [vmem:[#allocation2 + $0x1e0] sm:$0xff]
    %v956 = vld [vmem:[#allocation2 + $0x1e8] sm:$0xff]
    %v957 = vld [vmem:[#allocation2 + $0x1f0] sm:$0xff]
    %v958 = vld [vmem:[#allocation2 + $0x1f8] sm:$0xff]
    %v959 = vld [vmem:[#allocation2 + $0x200] sm:$0xff]
    %v960 = vld [vmem:[#allocation2 + $0x208] sm:$0xff]
    %v961 = vld [vmem:[#allocation2 + $0x210] sm:$0xff]
    %v962 = vld [vmem:[#allocation2 + $0x218] sm:$0xff]
    %v963 = vld [vmem:[#allocation2 + $0x220] sm:$0xff]
    %v964 = vld [vmem:[#allocation2 + $0x228] sm:$0xff]
    %v965 = vld [vmem:[#allocation2 + $0x230] sm:$0xff]
    %v966 = vld [vmem:[#allocation2 + $0x238] sm:$0xff]
    %v967 = vld [vmem:[#allocation2 + $0x240] sm:$0xff]
    %v968 = vld [vmem:[#allocation2 + $0x248] sm:$0xff]
    %v969 = vld [vmem:[#allocation2 + $0x250] sm:$0xff]
    %v970 = vld [vmem:[#allocation2 + $0x258] sm:$0xff]
    %v971 = vld [vmem:[#allocation2 + $0x260] sm:$0xff]
    %v972 = vld [vmem:[#allocation2 + $0x268] sm:$0xff]
    %v973 = vld [vmem:[#allocation2 + $0x270] sm:$0xff]
    %v974 = vld [vmem:[#allocation2 + $0x278] sm:$0xff]
    %v975 = vld [vmem:[#allocation2 + $0x280] sm:$0xff]
    %v976 = vld [vmem:[#allocation2 + $0x288] sm:$0xff]
    %v977 = vld [vmem:[#allocation2 + $0x290] sm:$0xff]
    %v978 = vld [vmem:[#allocation2 + $0x298] sm:$0xff]
    %v979 = vld [vmem:[#allocation2 + $0x2a0] sm:$0xff]
    %v980 = vld [vmem:[#allocation2 + $0x2a8] sm:$0xff]
    %v981 = vld [vmem:[#allocation2 + $0x2b0] sm:$0xff]
    %v982 = vld [vmem:[#allocation2 + $0x2b8] sm:$0xff]
    %v983 = vld [vmem:[#allocation2 + $0x2c0] sm:$0xff]
    %v984 = vld [vmem:[#allocation2 + $0x2c8] sm:$0xff]
    %v985 = vld [vmem:[#allocation2 + $0x2d0] sm:$0xff]
    %v986 = vld [vmem:[#allocation2 + $0x2d8] sm:$0xff]
    %v987 = vld [vmem:[#allocation2 + $0x2e0] sm:$0xff]
    %v988 = vld [vmem:[#allocation2 + $0x2e8] sm:$0xff]
    %v989 = vld [vmem:[#allocation2 + $0x2f0] sm:$0xff]
    %v990 = vld [vmem:[#allocation2 + $0x2f8] sm:$0xff]
    %v991 = vld [vmem:[#allocation2 + $0x300] sm:$0xff]
    %v992 = vld [vmem:[#allocation2 + $0x308] sm:$0xff]
    %v993 = vld [vmem:[#allocation2 + $0x310] sm:$0xff]
    %v994 = vld [vmem:[#allocation2 + $0x318] sm:$0xff]
    %v995 = vld [vmem:[#allocation2 + $0x320] sm:$0xff]
    %v996 = vld [vmem:[#allocation2 + $0x328] sm:$0xff]
    %v997 = vld [vmem:[#allocation2 + $0x330] sm:$0xff]
    %v998 = vld [vmem:[#allocation2 + $0x338] sm:$0xff]
    %v999 = vld [vmem:[#allocation2 + $0x340] sm:$0xff]
    %v1000 = vld [vmem:[#allocation2 + $0x348] sm:$0xff]
    %v1001 = vld [vmem:[#allocation2 + $0x350] sm:$0xff]
    %v1002 = vld [vmem:[#allocation2 + $0x358] sm:$0xff]
    %v1003 = vld [vmem:[#allocation2 + $0x360] sm:$0xff]
    %v1004 = vld [vmem:[#allocation2 + $0x368] sm:$0xff]
    %v1005 = vld [vmem:[#allocation2 + $0x370] sm:$0xff]
    %v1006 = vld [vmem:[#allocation2 + $0x378] sm:$0xff]
    %v1007 = vld [vmem:[#allocation2 + $0x380] sm:$0xff]
    %v1008 = vld [vmem:[#allocation2 + $0x388] sm:$0xff]
    %v1009 = vld [vmem:[#allocation2 + $0x390] sm:$0xff]
    %v1010 = vld [vmem:[#allocation2 + $0x398] sm:$0xff]
    %v1011 = vld [vmem:[#allocation2 + $0x3a0] sm:$0xff]
    %v1012 = vld [vmem:[#allocation2 + $0x3a8] sm:$0xff]
    %v1013 = vld [vmem:[#allocation2 + $0x3b0] sm:$0xff]
    %v1014 = vld [vmem:[#allocation2 + $0x3b8] sm:$0xff]
    %v1015 = vld [vmem:[#allocation2 + $0x3c0] sm:$0xff]
    %v1016 = vld [vmem:[#allocation2 + $0x3c8] sm:$0xff]
    %v1017 = vld [vmem:[#allocation2 + $0x3d0] sm:$0xff]
    %v1018 = vld [vmem:[#allocation2 + $0x3d8] sm:$0xff]
    %v1019 = vld [vmem:[#allocation2 + $0x3e0] sm:$0xff]
    %v1020 = vld [vmem:[#allocation2 + $0x3e8] sm:$0xff]
    %v1021 = vld [vmem:[#allocation2 + $0x3f0] sm:$0xff]
    %v1022 = vld [vmem:[#allocation2 + $0x3f8] sm:$0xff]
    %v1023 = vld [vmem:[#allocation2 + $0x400] sm:$0xff]
    %v1024 = vld [vmem:[#allocation2 + $0x408] sm:$0xff]
    %v1025 = vld [vmem:[#allocation2 + $0x410] sm:$0xff]
    %v1026 = vld [vmem:[#allocation2 + $0x418] sm:$0xff]
    %v1027 = vld [vmem:[#allocation2 + $0x420] sm:$0xff]
    %v1028 = vld [vmem:[#allocation2 + $0x428] sm:$0xff]
    %v1029 = vld [vmem:[#allocation2 + $0x430] sm:$0xff]
    %v1030 = vld [vmem:[#allocation2 + $0x438] sm:$0xff]
    %v1031 = vld [vmem:[#allocation2 + $0x440] sm:$0xff]
    %v1032 = vld [vmem:[#allocation2 + $0x448] sm:$0xff]
    %v1033 = vld [vmem:[#allocation2 + $0x450] sm:$0xff]
    %v1034 = vld [vmem:[#allocation2 + $0x458] sm:$0xff]
    %v1035 = vld [vmem:[#allocation2 + $0x460] sm:$0xff]
    %v1036 = vld [vmem:[#allocation2 + $0x468] sm:$0xff]
    %v1037 = vld [vmem:[#allocation2 + $0x470] sm:$0xff]
    %v1038 = vld [vmem:[#allocation2 + $0x478] sm:$0xff]
    %vm1039 = vcmask 261120
    %v1041 = vsel %vm1039, %v131, 0
    %v1044 = vsel %vm1039, %v134, 0
    %v1047 = vsel %vm1039, %v137, 0
    %v1050 = vsel %vm1039, %v140, 0
    %1052 = vmatprep.subr.mxu0 %v956
    %1053 = vmatpush1.msra.mxu0 %v955
    %1054 = vmatprep.subr.mxu0 %v952
    %1055 = vmatpush1.msra.mxu0 %v951
    %1056 = vmatprep.subr.mxu0 %v948
    %1057 = vmatpush1.msra.mxu0 %v947
    %1058 = vmatprep.subr.mxu0 %v944
    %1059 = vmatpush1.msra.mxu0 %v943
    %1060 = vmatprep.subr.mxu0 %v940
    %1061 = vmatpush1.msra.mxu0 %v939
    %1062 = vmatprep.subr.mxu0 %v936
    %1063 = vmatpush1.msra.mxu0 %v935
    %1064 = vmatprep.subr.mxu0 %v932
    %1065 = vmatpush1.msra.mxu0 %v931
    %1066 = vmatprep.subr.mxu0 %v928
    %1067 = vmatpush1.msra.mxu0 %v927
    %1068 = vmatprep.subr.mxu0 %v924
    %1069 = vmatpush1.msra.mxu0 %v923
    %1070 = vmatprep.subr.mxu0 %v920
    %1071 = vmatpush1.msra.mxu0 %v919
    %1072 = vmatprep.subr.mxu0 %v916
    %1073 = vmatpush1.msra.mxu0 %v915
    %1074 = vmatprep.subr.mxu0 %v912
    %1075 = vmatpush1.msra.mxu0 %v911
    %1076 = vmatprep.subr.mxu0 %v908
    %1077 = vmatpush1.msra.mxu0 %v907
    %1078 = vmatprep.subr.mxu0 %v904
    %1079 = vmatpush1.msra.mxu0 %v903
    %1080 = vmatprep.subr.mxu0 %v900
    %1081 = vmatpush1.msra.mxu0 %v899
    %1082 = vmatprep.subr.mxu0 %v896
    %1083 = vmatpush1.msra.mxu0 %v895
    %1084 = vmatprep.subr.mxu0 %v1020
    %1085 = vmatpush2.msra.mxu0 %v1019
    %1086 = vmatprep.subr.mxu0 %v1016
    %1087 = vmatpush2.msra.mxu0 %v1015
    %1088 = vmatprep.subr.mxu0 %v1012
    %1089 = vmatpush2.msra.mxu0 %v1011
    %1090 = vmatprep.subr.mxu0 %v1008
    %1091 = vmatpush2.msra.mxu0 %v1007
    %1092 = vmatprep.subr.mxu0 %v1004
    %1093 = vmatpush2.msra.mxu0 %v1003
    %1094 = vmatprep.subr.mxu0 %v1000
    %1095 = vmatpush2.msra.mxu0 %v999
    %1096 = vmatprep.subr.mxu0 %v996
    %1097 = vmatpush2.msra.mxu0 %v995
    %1098 = vmatprep.subr.mxu0 %v992
    %1099 = vmatpush2.msra.mxu0 %v991
    %1100 = vmatprep.subr.mxu0 %v988
    %1101 = vmatpush2.msra.mxu0 %v987
    %1102 = vmatprep.subr.mxu0 %v984
    %1103 = vmatpush2.msra.mxu0 %v983
    %1104 = vmatprep.subr.mxu0 %v980
    %1105 = vmatpush2.msra.mxu0 %v979
    %1106 = vmatprep.subr.mxu0 %v976
    %1107 = vmatpush2.msra.mxu0 %v975
    %1108 = vmatprep.subr.mxu0 %v972
    %1109 = vmatpush2.msra.mxu0 %v971
    %1110 = vmatprep.subr.mxu0 %v968
    %1111 = vmatpush2.msra.mxu0 %v967
    %1112 = vmatprep.subr.mxu0 %v964
    %1113 = vmatpush2.msra.mxu0 %v963
    %1114 = vmatprep.subr.mxu0 %v960
    %1115 = vmatpush2.msra.mxu0 %v959
    %1116 = vmatprep.mubr.f32.mxu0 %v130
    %1117 = vmatmul.mubr.f32.gmra.mxu0 %v129
    %v1118 = vpop.f32.mrf.mxu0
    %v1119 = vadd.f32 0.0, %v1118
    %v1120 = vpop.f32.mrf.mxu0
    %v1121 = vadd.f32 0.0, %v1120
    %1122 = vmatprep.mubr.f32.mxu0 %v133
    %1123 = vmatmul.mubr.f32.gmra.mxu0 %v132
    %v1124 = vpop.f32.mrf.mxu0
    %v1125 = vadd.f32 0.0, %v1124
    %v1126 = vpop.f32.mrf.mxu0
    %v1127 = vadd.f32 0.0, %v1126
    %1128 = vmatprep.mubr.f32.mxu0 %v136
    %1129 = vmatmul.mubr.f32.gmra.mxu0 %v135
    %v1130 = vpop.f32.mrf.mxu0
    %v1131 = vadd.f32 0.0, %v1130
    %v1132 = vpop.f32.mrf.mxu0
    %v1133 = vadd.f32 0.0, %v1132
    %1134 = vmatprep.mubr.f32.mxu0 %v139
    %1135 = vmatmul.mubr.f32.gmra.mxu0 %v138
    %v1136 = vpop.f32.mrf.mxu0
    %v1137 = vadd.f32 0.0, %v1136
    %v1138 = vpop.f32.mrf.mxu0
    %v1139 = vadd.f32 0.0, %v1138
    %1140 = vdwg.mxu0
    %1141 = vmatprep.subr.mxu0 0.0
    %1142 = vmatpush1.msra.mxu0 0.0
    %1143 = vmatprep.subr.mxu0 0.0
    %1144 = vmatpush1.msra.mxu0 0.0
    %1145 = vmatprep.subr.mxu0 0.0
    %1146 = vmatpush1.msra.mxu0 0.0
    %1147 = vmatprep.subr.mxu0 0.0
    %1148 = vmatpush1.msra.mxu0 0.0
    %1149 = vmatprep.subr.mxu0 0.0
    %1150 = vmatpush1.msra.mxu0 0.0
    %1151 = vmatprep.subr.mxu0 0.0
    %1152 = vmatpush1.msra.mxu0 0.0
    %1153 = vmatprep.subr.mxu0 0.0
    %1154 = vmatpush1.msra.mxu0 0.0
    %1155 = vmatprep.subr.mxu0 0.0
    %1156 = vmatpush1.msra.mxu0 0.0
    %1157 = vmatprep.subr.mxu0 0.0
    %1158 = vmatpush1.msra.mxu0 0.0
    %1159 = vmatprep.subr.mxu0 0.0
    %1160 = vmatpush1.msra.mxu0 0.0
    %1161 = vmatprep.subr.mxu0 0.0
    %1162 = vmatpush1.msra.mxu0 0.0
    %1163 = vmatprep.subr.mxu0 0.0
    %1164 = vmatpush1.msra.mxu0 0.0
    %1165 = vmatprep.subr.mxu0 %v1036
    %1166 = vmatpush1.msra.mxu0 %v1035
    %1167 = vmatprep.subr.mxu0 %v1032
    %1168 = vmatpush1.msra.mxu0 %v1031
    %1169 = vmatprep.subr.mxu0 %v1028
    %1170 = vmatpush1.msra.mxu0 %v1027
    %1171 = vmatprep.subr.mxu0 %v1024
    %1172 = vmatpush1.msra.mxu0 %v1023
    %1173 = vmatprep.subr.mxu0 0.0
    %1174 = vmatpush2.msra.mxu0 0.0
    %1175 = vmatprep.subr.mxu0 0.0
    %1176 = vmatpush2.msra.mxu0 0.0
    %1177 = vmatprep.subr.mxu0 0.0
    %1178 = vmatpush2.msra.mxu0 0.0
    %1179 = vmatprep.subr.mxu0 0.0
    %1180 = vmatpush2.msra.mxu0 0.0
    %1181 = vmatprep.subr.mxu0 0.0
    %1182 = vmatpush2.msra.mxu0 0.0
    %1183 = vmatprep.subr.mxu0 0.0
    %1184 = vmatpush2.msra.mxu0 0.0
    %1185 = vmatprep.subr.mxu0 0.0
    %1186 = vmatpush2.msra.mxu0 0.0
    %1187 = vmatprep.subr.mxu0 0.0
    %1188 = vmatpush2.msra.mxu0 0.0
    %1189 = vmatprep.subr.mxu0 0.0
    %1190 = vmatpush2.msra.mxu0 0.0
    %1191 = vmatprep.subr.mxu0 0.0
    %1192 = vmatpush2.msra.mxu0 0.0
    %1193 = vmatprep.subr.mxu0 0.0
    %1194 = vmatpush2.msra.mxu0 0.0
    %1195 = vmatprep.subr.mxu0 0.0
    %1196 = vmatpush2.msra.mxu0 0.0
    %1197 = vmatprep.subr.mxu0 0.0
    %1198 = vmatpush2.msra.mxu0 0.0
    %1199 = vmatprep.subr.mxu0 0.0
    %1200 = vmatpush2.msra.mxu0 0.0
    %1201 = vmatprep.subr.mxu0 0.0
    %1202 = vmatpush2.msra.mxu0 0.0
    %1203 = vmatprep.subr.mxu0 0.0
    %1204 = vmatpush2.msra.mxu0 0.0
    %1205 = vmatprep.mubr.f32.mxu0 0.0
    %1206 = vmatmul.mubr.f32.gmra.mxu0 %v1041
    %v1207 = vpop.f32.mrf.mxu0
    %v1208 = vadd.f32 %v1119, %v1207
    %v1209 = vpop.f32.mrf.mxu0
    %v1210 = vadd.f32 %v1121, %v1209
    %1211 = vmatprep.mubr.f32.mxu0 0.0
    %1212 = vmatmul.mubr.f32.gmra.mxu0 %v1044
    %v1213 = vpop.f32.mrf.mxu0
    %v1214 = vadd.f32 %v1125, %v1213
    %v1215 = vpop.f32.mrf.mxu0
    %v1216 = vadd.f32 %v1127, %v1215
    %1217 = vmatprep.mubr.f32.mxu0 0.0
    %1218 = vmatmul.mubr.f32.gmra.mxu0 %v1047
    %v1219 = vpop.f32.mrf.mxu0
    %v1220 = vadd.f32 %v1131, %v1219
    %v1221 = vpop.f32.mrf.mxu0
    %v1222 = vadd.f32 %v1133, %v1221
    %1223 = vmatprep.mubr.f32.mxu0 0.0
    %1224 = vmatmul.mubr.f32.gmra.mxu0 %v1050
    %v1225 = vpop.f32.mrf.mxu0
    %v1226 = vadd.f32 %v1137, %v1225
    %v1227 = vpop.f32.mrf.mxu0
    %v1228 = vadd.f32 %v1139, %v1227
    %1229 = vdwg.mxu0
    %1230 = vmatprep.subr.mxu0 %v958
    %1231 = vmatpush1.msra.mxu0 %v957
    %1232 = vmatprep.subr.mxu0 %v954
    %1233 = vmatpush1.msra.mxu0 %v953
    %1234 = vmatprep.subr.mxu0 %v950
    %1235 = vmatpush1.msra.mxu0 %v949
    %1236 = vmatprep.subr.mxu0 %v946
    %1237 = vmatpush1.msra.mxu0 %v945
    %1238 = vmatprep.subr.mxu0 %v942
    %1239 = vmatpush1.msra.mxu0 %v941
    %1240 = vmatprep.subr.mxu0 %v938
    %1241 = vmatpush1.msra.mxu0 %v937
    %1242 = vmatprep.subr.mxu0 %v934
    %1243 = vmatpush1.msra.mxu0 %v933
    %1244 = vmatprep.subr.mxu0 %v930
    %1245 = vmatpush1.msra.mxu0 %v929
    %1246 = vmatprep.subr.mxu0 %v926
    %1247 = vmatpush1.msra.mxu0 %v925
    %1248 = vmatprep.subr.mxu0 %v922
    %1249 = vmatpush1.msra.mxu0 %v921
    %1250 = vmatprep.subr.mxu0 %v918
    %1251 = vmatpush1.msra.mxu0 %v917
    %1252 = vmatprep.subr.mxu0 %v914
    %1253 = vmatpush1.msra.mxu0 %v913
    %1254 = vmatprep.subr.mxu0 %v910
    %1255 = vmatpush1.msra.mxu0 %v909
    %1256 = vmatprep.subr.mxu0 %v906
    %1257 = vmatpush1.msra.mxu0 %v905
    %1258 = vmatprep.subr.mxu0 %v902
    %1259 = vmatpush1.msra.mxu0 %v901
    %1260 = vmatprep.subr.mxu0 %v898
    %1261 = vmatpush1.msra.mxu0 %v897
    %1262 = vmatprep.subr.mxu0 %v1022
    %1263 = vmatpush2.msra.mxu0 %v1021
    %1264 = vmatprep.subr.mxu0 %v1018
    %1265 = vmatpush2.msra.mxu0 %v1017
    %1266 = vmatprep.subr.mxu0 %v1014
    %1267 = vmatpush2.msra.mxu0 %v1013
    %1268 = vmatprep.subr.mxu0 %v1010
    %1269 = vmatpush2.msra.mxu0 %v1009
    %1270 = vmatprep.subr.mxu0 %v1006
    %1271 = vmatpush2.msra.mxu0 %v1005
    %1272 = vmatprep.subr.mxu0 %v1002
    %1273 = vmatpush2.msra.mxu0 %v1001
    %1274 = vmatprep.subr.mxu0 %v998
    %1275 = vmatpush2.msra.mxu0 %v997
    %1276 = vmatprep.subr.mxu0 %v994
    %1277 = vmatpush2.msra.mxu0 %v993
    %1278 = vmatprep.subr.mxu0 %v990
    %1279 = vmatpush2.msra.mxu0 %v989
    %1280 = vmatprep.subr.mxu0 %v986
    %1281 = vmatpush2.msra.mxu0 %v985
    %1282 = vmatprep.subr.mxu0 %v982
    %1283 = vmatpush2.msra.mxu0 %v981
    %1284 = vmatprep.subr.mxu0 %v978
    %1285 = vmatpush2.msra.mxu0 %v977
    %1286 = vmatprep.subr.mxu0 %v974
    %1287 = vmatpush2.msra.mxu0 %v973
    %1288 = vmatprep.subr.mxu0 %v970
    %1289 = vmatpush2.msra.mxu0 %v969
    %1290 = vmatprep.subr.mxu0 %v966
    %1291 = vmatpush2.msra.mxu0 %v965
    %1292 = vmatprep.subr.mxu0 %v962
    %1293 = vmatpush2.msra.mxu0 %v961
    %1294 = vmatprep.mubr.f32.mxu0 %v130
    %1295 = vmatmul.mubr.f32.gmra.mxu0 %v129
    %v1296 = vpop.f32.mrf.mxu0
    %v1297 = vadd.f32 0.0, %v1296
    %v1298 = vpop.f32.mrf.mxu0
    %v1299 = vadd.f32 0.0, %v1298
    %1300 = vmatprep.mubr.f32.mxu0 %v133
    %1301 = vmatmul.mubr.f32.gmra.mxu0 %v132
    %v1302 = vpop.f32.mrf.mxu0
    %v1303 = vadd.f32 0.0, %v1302
    %v1304 = vpop.f32.mrf.mxu0
    %v1305 = vadd.f32 0.0, %v1304
    %1306 = vmatprep.mubr.f32.mxu0 %v136
    %1307 = vmatmul.mubr.f32.gmra.mxu0 %v135
    %v1308 = vpop.f32.mrf.mxu0
    %v1309 = vadd.f32 0.0, %v1308
    %v1310 = vpop.f32.mrf.mxu0
    %v1311 = vadd.f32 0.0, %v1310
    %1312 = vmatprep.mubr.f32.mxu0 %v139
    %1313 = vmatmul.mubr.f32.gmra.mxu0 %v138
    %v1314 = vpop.f32.mrf.mxu0
    %v1315 = vadd.f32 0.0, %v1314
    %v1316 = vpop.f32.mrf.mxu0
    %v1317 = vadd.f32 0.0, %v1316
    %1318 = vdwg.mxu0
    %1319 = vmatprep.subr.mxu0 0.0
    %1320 = vmatpush1.msra.mxu0 0.0
    %1321 = vmatprep.subr.mxu0 0.0
    %1322 = vmatpush1.msra.mxu0 0.0
    %1323 = vmatprep.subr.mxu0 0.0
    %1324 = vmatpush1.msra.mxu0 0.0
    %1325 = vmatprep.subr.mxu0 0.0
    %1326 = vmatpush1.msra.mxu0 0.0
    %1327 = vmatprep.subr.mxu0 0.0
    %1328 = vmatpush1.msra.mxu0 0.0
    %1329 = vmatprep.subr.mxu0 0.0
    %1330 = vmatpush1.msra.mxu0 0.0
    %1331 = vmatprep.subr.mxu0 0.0
    %1332 = vmatpush1.msra.mxu0 0.0
    %1333 = vmatprep.subr.mxu0 0.0
    %1334 = vmatpush1.msra.mxu0 0.0
    %1335 = vmatprep.subr.mxu0 0.0
    %1336 = vmatpush1.msra.mxu0 0.0
    %1337 = vmatprep.subr.mxu0 0.0
    %1338 = vmatpush1.msra.mxu0 0.0
    %1339 = vmatprep.subr.mxu0 0.0
    %1340 = vmatpush1.msra.mxu0 0.0
    %1341 = vmatprep.subr.mxu0 0.0
    %1342 = vmatpush1.msra.mxu0 0.0
    %1343 = vmatprep.subr.mxu0 %v1038
    %1344 = vmatpush1.msra.mxu0 %v1037
    %1345 = vmatprep.subr.mxu0 %v1034
    %1346 = vmatpush1.msra.mxu0 %v1033
    %1347 = vmatprep.subr.mxu0 %v1030
    %1348 = vmatpush1.msra.mxu0 %v1029
    %1349 = vmatprep.subr.mxu0 %v1026
    %1350 = vmatpush1.msra.mxu0 %v1025
    %1351 = vmatprep.subr.mxu0 0.0
    %1352 = vmatpush2.msra.mxu0 0.0
    %1353 = vmatprep.subr.mxu0 0.0
    %1354 = vmatpush2.msra.mxu0 0.0
    %1355 = vmatprep.subr.mxu0 0.0
    %1356 = vmatpush2.msra.mxu0 0.0
    %1357 = vmatprep.subr.mxu0 0.0
    %1358 = vmatpush2.msra.mxu0 0.0
    %1359 = vmatprep.subr.mxu0 0.0
    %1360 = vmatpush2.msra.mxu0 0.0
    %1361 = vmatprep.subr.mxu0 0.0
    %1362 = vmatpush2.msra.mxu0 0.0
    %1363 = vmatprep.subr.mxu0 0.0
    %1364 = vmatpush2.msra.mxu0 0.0
    %1365 = vmatprep.subr.mxu0 0.0
    %1366 = vmatpush2.msra.mxu0 0.0
    %1367 = vmatprep.subr.mxu0 0.0
    %1368 = vmatpush2.msra.mxu0 0.0
    %1369 = vmatprep.subr.mxu0 0.0
    %1370 = vmatpush2.msra.mxu0 0.0
    %1371 = vmatprep.subr.mxu0 0.0
    %1372 = vmatpush2.msra.mxu0 0.0
    %1373 = vmatprep.subr.mxu0 0.0
    %1374 = vmatpush2.msra.mxu0 0.0
    %1375 = vmatprep.subr.mxu0 0.0
    %1376 = vmatpush2.msra.mxu0 0.0
    %1377 = vmatprep.subr.mxu0 0.0
    %1378 = vmatpush2.msra.mxu0 0.0
    %1379 = vmatprep.subr.mxu0 0.0
    %1380 = vmatpush2.msra.mxu0 0.0
    %1381 = vmatprep.subr.mxu0 0.0
    %1382 = vmatpush2.msra.mxu0 0.0
    %1383 = vmatprep.mubr.f32.mxu0 0.0
    %1384 = vmatmul.mubr.f32.gmra.mxu0 %v1041
    %v1385 = vpop.f32.mrf.mxu0
    %v1386 = vadd.f32 %v1297, %v1385
    %v1387 = vpop.f32.mrf.mxu0
    %v1388 = vadd.f32 %v1299, %v1387
    %1389 = vmatprep.mubr.f32.mxu0 0.0
    %1390 = vmatmul.mubr.f32.gmra.mxu0 %v1044
    %v1391 = vpop.f32.mrf.mxu0
    %v1392 = vadd.f32 %v1303, %v1391
    %v1393 = vpop.f32.mrf.mxu0
    %v1394 = vadd.f32 %v1305, %v1393
    %1395 = vmatprep.mubr.f32.mxu0 0.0
    %1396 = vmatmul.mubr.f32.gmra.mxu0 %v1047
    %v1397 = vpop.f32.mrf.mxu0
    %v1398 = vadd.f32 %v1309, %v1397
    %v1399 = vpop.f32.mrf.mxu0
    %v1400 = vadd.f32 %v1311, %v1399
    %1401 = vmatprep.mubr.f32.mxu0 0.0
    %1402 = vmatmul.mubr.f32.gmra.mxu0 %v1050
    %v1403 = vpop.f32.mrf.mxu0
    %v1404 = vadd.f32 %v1315, %v1403
    %v1405 = vpop.f32.mrf.mxu0
    %v1406 = vadd.f32 %v1317, %v1405
    %1407 = vdwg.mxu0
    %1409 = vset.pattern.permute.xlu0 0
    %1410 = vperm.xlu0 %1409, %v92
    %v1411 = vpop.permute.xlu0 %1410
    %1414 = vset.pattern.permute.xlu0 0
    %1415 = vperm.xlu0 %1414, %v93
    %v1416 = vpop.permute.xlu0 %1415
    %1419 = vset.pattern.permute.xlu0 0
    %1420 = vperm.xlu0 %1419, %v94
    %v1421 = vpop.permute.xlu0 %1420
    %1424 = vset.pattern.permute.xlu0 0
    %1425 = vperm.xlu0 %1424, %v95
    %v1426 = vpop.permute.xlu0 %1425
    %v1428 = vadd.f32 %v1208, %v1411
    %v1429 = vadd.f32 %v1210, %v1411
    %v1430 = vadd.f32 %v1214, %v1416
    %v1431 = vadd.f32 %v1216, %v1416
    %v1432 = vadd.f32 %v1220, %v1421
    %v1433 = vadd.f32 %v1222, %v1421
    %v1434 = vadd.f32 %v1226, %v1426
    %v1435 = vadd.f32 %v1228, %v1426
    %vm1436 = vcmp.ge.f32.partialorder %v1428, 0.0
    %vm1437 = vcmp.ge.f32.partialorder %v1429, 0.0
    %vm1438 = vcmp.ge.f32.partialorder %v1430, 0.0
    %vm1439 = vcmp.ge.f32.partialorder %v1431, 0.0
    %vm1440 = vcmp.ge.f32.partialorder %v1432, 0.0
    %vm1441 = vcmp.ge.f32.partialorder %v1433, 0.0
    %vm1442 = vcmp.ge.f32.partialorder %v1434, 0.0
    %vm1443 = vcmp.ge.f32.partialorder %v1435, 0.0
    %v1444 = vmul.f32 %v1428, 0.2
    %v1445 = vmul.f32 %v1429, 0.2
    %v1446 = vmul.f32 %v1430, 0.2
    %v1447 = vmul.f32 %v1431, 0.2
    %v1448 = vmul.f32 %v1432, 0.2
    %v1449 = vmul.f32 %v1433, 0.2
    %v1450 = vmul.f32 %v1434, 0.2
    %v1451 = vmul.f32 %v1435, 0.2
    %v1452 = vsel %vm1436, %v1428, %v1444
    %v1453 = vsel %vm1437, %v1429, %v1445
    %v1454 = vsel %vm1438, %v1430, %v1446
    %v1455 = vsel %vm1439, %v1431, %v1447
    %v1456 = vsel %vm1440, %v1432, %v1448
    %v1457 = vsel %vm1441, %v1433, %v1449
    %v1458 = vsel %vm1442, %v1434, %v1450
    %v1459 = vsel %vm1443, %v1435, %v1451
    %v1460 = vadd.f32 %v1452, %v112
    %v1461 = vadd.f32 %v1453, %v113
    %v1462 = vadd.f32 %v1454, %v114
    %v1463 = vadd.f32 %v1455, %v115
    %v1464 = vadd.f32 %v1456, %v116
    %v1465 = vadd.f32 %v1457, %v117
    %v1466 = vadd.f32 %v1458, %v118
    %v1467 = vadd.f32 %v1459, %v119
    %v1468 = vadd.f32 %v1386, %v1411
    %v1469 = vadd.f32 %v1388, %v1411
    %v1470 = vadd.f32 %v1392, %v1416
    %v1471 = vadd.f32 %v1394, %v1416
    %v1472 = vadd.f32 %v1398, %v1421
    %v1473 = vadd.f32 %v1400, %v1421
    %v1474 = vadd.f32 %v1404, %v1426
    %v1475 = vadd.f32 %v1406, %v1426
    %vm1476 = vcmp.ge.f32.partialorder %v1468, 0.0
    %vm1477 = vcmp.ge.f32.partialorder %v1469, 0.0
    %vm1478 = vcmp.ge.f32.partialorder %v1470, 0.0
    %vm1479 = vcmp.ge.f32.partialorder %v1471, 0.0
    %vm1480 = vcmp.ge.f32.partialorder %v1472, 0.0
    %vm1481 = vcmp.ge.f32.partialorder %v1473, 0.0
    %vm1482 = vcmp.ge.f32.partialorder %v1474, 0.0
    %vm1483 = vcmp.ge.f32.partialorder %v1475, 0.0
    %v1484 = vmul.f32 %v1468, 0.2
    %v1485 = vmul.f32 %v1469, 0.2
    %v1486 = vmul.f32 %v1470, 0.2
    %v1487 = vmul.f32 %v1471, 0.2
    %v1488 = vmul.f32 %v1472, 0.2
    %v1489 = vmul.f32 %v1473, 0.2
    %v1490 = vmul.f32 %v1474, 0.2
    %v1491 = vmul.f32 %v1475, 0.2
    %v1492 = vsel %vm1476, %v1468, %v1484
    %v1493 = vsel %vm1477, %v1469, %v1485
    %v1494 = vsel %vm1478, %v1470, %v1486
    %v1495 = vsel %vm1479, %v1471, %v1487
    %v1496 = vsel %vm1480, %v1472, %v1488
    %v1497 = vsel %vm1481, %v1473, %v1489
    %v1498 = vsel %vm1482, %v1474, %v1490
    %v1499 = vsel %vm1483, %v1475, %v1491
    %v1500 = vadd.f32 %v1492, %v121
    %v1501 = vadd.f32 %v1493, %v122
    %v1502 = vadd.f32 %v1494, %v123
    %v1503 = vadd.f32 %v1495, %v124
    %v1504 = vadd.f32 %v1496, %v125
    %v1505 = vadd.f32 %v1497, %v126
    %v1506 = vadd.f32 %v1498, %v127
    %v1507 = vadd.f32 %v1499, %v128
    %v1508 = vld [vmem:[#allocation6] sm:$0xff]
    %v1509 = vld [vmem:[#allocation6 + $0x8] sm:$0xff]
    %v1510 = vld [vmem:[#allocation6 + $0x10] sm:$0xff]
    %v1511 = vld [vmem:[#allocation6 + $0x18] sm:$0xff]
    %v1512 = vld [vmem:[#allocation6 + $0x20] sm:$0xff]
    %v1513 = vld [vmem:[#allocation6 + $0x28] sm:$0xff]
    %v1514 = vld [vmem:[#allocation6 + $0x30] sm:$0xff]
    %v1515 = vld [vmem:[#allocation6 + $0x38] sm:$0xff]
    %v1516 = vld [vmem:[#allocation6 + $0x40] sm:$0xff]
    %v1517 = vld [vmem:[#allocation6 + $0x48] sm:$0xff]
    %v1518 = vld [vmem:[#allocation6 + $0x50] sm:$0xff]
    %v1519 = vld [vmem:[#allocation6 + $0x58] sm:$0xff]
    %1520 = vrot.lane.b32.xlu0 %v1460, 17
    %v1521 = vpop.permute.xlu0 %1520
    %1522 = vrot.lane.b32.xlu0 %v1462, 17
    %v1523 = vpop.permute.xlu0 %1522
    %1524 = vrot.lane.b32.xlu0 %v1464, 17
    %v1525 = vpop.permute.xlu0 %1524
    %1526 = vrot.lane.b32.xlu0 %v1466, 17
    %v1527 = vpop.permute.xlu0 %1526
    %1528 = vrot.lane.b32.xlu0 %v1461, 17
    %v1529 = vpop.permute.xlu0 %1528
    %1530 = vrot.lane.b32.xlu0 %v1463, 17
    %v1531 = vpop.permute.xlu0 %1530
    %1532 = vrot.lane.b32.xlu0 %v1465, 17
    %v1533 = vpop.permute.xlu0 %1532
    %1534 = vrot.lane.b32.xlu0 %v1467, 17
    %v1535 = vpop.permute.xlu0 %1534
    %v1536 = vsel %vm159, %v1521, %v1529
    %v1537 = vsel %vm159, %v1523, %v1531
    %v1538 = vsel %vm159, %v1525, %v1533
    %v1539 = vsel %vm159, %v1527, %v1535
    %v1540 = vsel %vm159, %v1529, %v1521
    %v1541 = vsel %vm159, %v1531, %v1523
    %v1542 = vsel %vm159, %v1533, %v1525
    %v1543 = vsel %vm159, %v1535, %v1527
    %v1544 = vmul.f32 %v1540, %v172
    %v1545 = vmul.f32 %v1536, %v176
    %v1546 = vmul.f32 %v1541, %v172
    %v1547 = vmul.f32 %v1537, %v176
    %v1548 = vmul.f32 %v1542, %v172
    %v1549 = vmul.f32 %v1538, %v176
    %v1550 = vmul.f32 %v1543, %v172
    %v1551 = vmul.f32 %v1539, %v176
    %1552 = vst [vmem:[#allocation2] sm:$0xff] %v1544
    %1553 = vst [vmem:[#allocation2 + $0x8] sm:$0xff] %v1545
    %1554 = vst [vmem:[#allocation2 + $0x20] sm:$0xff] %v1546
    %1555 = vst [vmem:[#allocation2 + $0x28] sm:$0xff] %v1547
    %1556 = vst [vmem:[#allocation2 + $0x40] sm:$0xff] %v1548
    %1557 = vst [vmem:[#allocation2 + $0x48] sm:$0xff] %v1549
    %1558 = vst [vmem:[#allocation2 + $0x60] sm:$0xff] %v1550
    %1559 = vst [vmem:[#allocation2 + $0x68] sm:$0xff] %v1551
    %1560 = vrot.lane.b32.xlu0 %v1460, 16
    %v1561 = vpop.permute.xlu0 %1560
    %1562 = vrot.lane.b32.xlu0 %v1462, 16
    %v1563 = vpop.permute.xlu0 %1562
    %1564 = vrot.lane.b32.xlu0 %v1464, 16
    %v1565 = vpop.permute.xlu0 %1564
    %1566 = vrot.lane.b32.xlu0 %v1466, 16
    %v1567 = vpop.permute.xlu0 %1566
    %1568 = vrot.lane.b32.xlu0 %v1461, 16
    %v1569 = vpop.permute.xlu0 %1568
    %1570 = vrot.lane.b32.xlu0 %v1463, 16
    %v1571 = vpop.permute.xlu0 %1570
    %1572 = vrot.lane.b32.xlu0 %v1465, 16
    %v1573 = vpop.permute.xlu0 %1572
    %1574 = vrot.lane.b32.xlu0 %v1467, 16
    %v1575 = vpop.permute.xlu0 %1574
    %v1576 = vsel %vm211, %v1561, %v1569
    %v1577 = vsel %vm211, %v1563, %v1571
    %v1578 = vsel %vm211, %v1565, %v1573
    %v1579 = vsel %vm211, %v1567, %v1575
    %v1580 = vsel %vm211, %v1569, %v1561
    %v1581 = vsel %vm211, %v1571, %v1563
    %v1582 = vsel %vm211, %v1573, %v1565
    %v1583 = vsel %vm211, %v1575, %v1567
    %v1584 = vmul.f32 %v1580, %v224
    %v1585 = vmul.f32 %v1576, %v228
    %v1586 = vmul.f32 %v1581, %v224
    %v1587 = vmul.f32 %v1577, %v228
    %v1588 = vmul.f32 %v1582, %v224
    %v1589 = vmul.f32 %v1578, %v228
    %v1590 = vmul.f32 %v1583, %v224
    %v1591 = vmul.f32 %v1579, %v228
    %1592 = vst [vmem:[#allocation2 + $0x80] sm:$0xff] %v1584
    %1593 = vst [vmem:[#allocation2 + $0x88] sm:$0xff] %v1585
    %1594 = vst [vmem:[#allocation2 + $0xa0] sm:$0xff] %v1586
    %1595 = vst [vmem:[#allocation2 + $0xa8] sm:$0xff] %v1587
    %1596 = vst [vmem:[#allocation2 + $0xc0] sm:$0xff] %v1588
    %1597 = vst [vmem:[#allocation2 + $0xc8] sm:$0xff] %v1589
    %1598 = vst [vmem:[#allocation2 + $0xe0] sm:$0xff] %v1590
    %1599 = vst [vmem:[#allocation2 + $0xe8] sm:$0xff] %v1591
    %1600 = vrot.lane.b32.xlu0 %v1460, 15
    %v1601 = vpop.permute.xlu0 %1600
    %1602 = vrot.lane.b32.xlu0 %v1462, 15
    %v1603 = vpop.permute.xlu0 %1602
    %1604 = vrot.lane.b32.xlu0 %v1464, 15
    %v1605 = vpop.permute.xlu0 %1604
    %1606 = vrot.lane.b32.xlu0 %v1466, 15
    %v1607 = vpop.permute.xlu0 %1606
    %1608 = vrot.lane.b32.xlu0 %v1461, 15
    %v1609 = vpop.permute.xlu0 %1608
    %1610 = vrot.lane.b32.xlu0 %v1463, 15
    %v1611 = vpop.permute.xlu0 %1610
    %1612 = vrot.lane.b32.xlu0 %v1465, 15
    %v1613 = vpop.permute.xlu0 %1612
    %1614 = vrot.lane.b32.xlu0 %v1467, 15
    %v1615 = vpop.permute.xlu0 %1614
    %v1616 = vsel %vm263, %v1601, %v1609
    %v1617 = vsel %vm263, %v1603, %v1611
    %v1618 = vsel %vm263, %v1605, %v1613
    %v1619 = vsel %vm263, %v1607, %v1615
    %v1620 = vsel %vm263, %v1609, %v1601
    %v1621 = vsel %vm263, %v1611, %v1603
    %v1622 = vsel %vm263, %v1613, %v1605
    %v1623 = vsel %vm263, %v1615, %v1607
    %v1624 = vmul.f32 %v1620, %v276
    %v1625 = vmul.f32 %v1616, %v280
    %v1626 = vmul.f32 %v1621, %v276
    %v1627 = vmul.f32 %v1617, %v280
    %v1628 = vmul.f32 %v1622, %v276
    %v1629 = vmul.f32 %v1618, %v280
    %v1630 = vmul.f32 %v1623, %v276
    %v1631 = vmul.f32 %v1619, %v280
    %1632 = vst [vmem:[#allocation2 + $0x100] sm:$0xff] %v1624
    %1633 = vst [vmem:[#allocation2 + $0x108] sm:$0xff] %v1625
    %1634 = vst [vmem:[#allocation2 + $0x120] sm:$0xff] %v1626
    %1635 = vst [vmem:[#allocation2 + $0x128] sm:$0xff] %v1627
    %1636 = vst [vmem:[#allocation2 + $0x140] sm:$0xff] %v1628
    %1637 = vst [vmem:[#allocation2 + $0x148] sm:$0xff] %v1629
    %1638 = vst [vmem:[#allocation2 + $0x160] sm:$0xff] %v1630
    %1639 = vst [vmem:[#allocation2 + $0x168] sm:$0xff] %v1631
    %1640 = vrot.lane.b32.xlu0 %v1460, 1
    %v1641 = vpop.permute.xlu0 %1640
    %1642 = vrot.lane.b32.xlu0 %v1462, 1
    %v1643 = vpop.permute.xlu0 %1642
    %1644 = vrot.lane.b32.xlu0 %v1464, 1
    %v1645 = vpop.permute.xlu0 %1644
    %1646 = vrot.lane.b32.xlu0 %v1466, 1
    %v1647 = vpop.permute.xlu0 %1646
    %1648 = vrot.lane.b32.xlu0 %v1461, 1
    %v1649 = vpop.permute.xlu0 %1648
    %1650 = vrot.lane.b32.xlu0 %v1463, 1
    %v1651 = vpop.permute.xlu0 %1650
    %1652 = vrot.lane.b32.xlu0 %v1465, 1
    %v1653 = vpop.permute.xlu0 %1652
    %1654 = vrot.lane.b32.xlu0 %v1467, 1
    %v1655 = vpop.permute.xlu0 %1654
    %v1656 = vsel %vm315, %v1641, %v1649
    %v1657 = vsel %vm315, %v1643, %v1651
    %v1658 = vsel %vm315, %v1645, %v1653
    %v1659 = vsel %vm315, %v1647, %v1655
    %v1660 = vsel %vm315, %v1649, %v1641
    %v1661 = vsel %vm315, %v1651, %v1643
    %v1662 = vsel %vm315, %v1653, %v1645
    %v1663 = vsel %vm315, %v1655, %v1647
    %v1664 = vmul.f32 %v1660, %v328
    %v1665 = vmul.f32 %v1656, %v332
    %v1666 = vmul.f32 %v1661, %v328
    %v1667 = vmul.f32 %v1657, %v332
    %v1668 = vmul.f32 %v1662, %v328
    %v1669 = vmul.f32 %v1658, %v332
    %v1670 = vmul.f32 %v1663, %v328
    %v1671 = vmul.f32 %v1659, %v332
    %1672 = vst [vmem:[#allocation2 + $0x180] sm:$0xff] %v1664
    %1673 = vst [vmem:[#allocation2 + $0x188] sm:$0xff] %v1665
    %1674 = vst [vmem:[#allocation2 + $0x1a0] sm:$0xff] %v1666
    %1675 = vst [vmem:[#allocation2 + $0x1a8] sm:$0xff] %v1667
    %1676 = vst [vmem:[#allocation2 + $0x1c0] sm:$0xff] %v1668
    %1677 = vst [vmem:[#allocation2 + $0x1c8] sm:$0xff] %v1669
    %1678 = vst [vmem:[#allocation2 + $0x1e0] sm:$0xff] %v1670
    %1679 = vst [vmem:[#allocation2 + $0x1e8] sm:$0xff] %v1671
    %1680 = vst [vmem:[#allocation2 + $0x200] sm:$0xff] %v1460
    %1681 = vst [vmem:[#allocation2 + $0x208] sm:$0xff] %v1461
    %1682 = vst [vmem:[#allocation2 + $0x220] sm:$0xff] %v1462
    %1683 = vst [vmem:[#allocation2 + $0x228] sm:$0xff] %v1463
    %1684 = vst [vmem:[#allocation2 + $0x240] sm:$0xff] %v1464
    %1685 = vst [vmem:[#allocation2 + $0x248] sm:$0xff] %v1465
    %1686 = vst [vmem:[#allocation2 + $0x260] sm:$0xff] %v1466
    %1687 = vst [vmem:[#allocation2 + $0x268] sm:$0xff] %v1467
    %1688 = vrot.lane.b32.xlu0 %v1460, 127
    %v1689 = vpop.permute.xlu0 %1688
    %1690 = vrot.lane.b32.xlu0 %v1462, 127
    %v1691 = vpop.permute.xlu0 %1690
    %1692 = vrot.lane.b32.xlu0 %v1464, 127
    %v1693 = vpop.permute.xlu0 %1692
    %1694 = vrot.lane.b32.xlu0 %v1466, 127
    %v1695 = vpop.permute.xlu0 %1694
    %1696 = vrot.lane.b32.xlu0 %v1461, 127
    %v1697 = vpop.permute.xlu0 %1696
    %1698 = vrot.lane.b32.xlu0 %v1463, 127
    %v1699 = vpop.permute.xlu0 %1698
    %1700 = vrot.lane.b32.xlu0 %v1465, 127
    %v1701 = vpop.permute.xlu0 %1700
    %1702 = vrot.lane.b32.xlu0 %v1467, 127
    %v1703 = vpop.permute.xlu0 %1702
    %v1704 = vsel %vm375, %v1689, %v1697
    %v1705 = vsel %vm375, %v1691, %v1699
    %v1706 = vsel %vm375, %v1693, %v1701
    %v1707 = vsel %vm375, %v1695, %v1703
    %v1708 = vsel %vm375, %v1697, %v1689
    %v1709 = vsel %vm375, %v1699, %v1691
    %v1710 = vsel %vm375, %v1701, %v1693
    %v1711 = vsel %vm375, %v1703, %v1695
    %v1712 = vmul.f32 %v1704, %v388
    %v1713 = vmul.f32 %v1708, %v392
    %v1714 = vmul.f32 %v1705, %v388
    %v1715 = vmul.f32 %v1709, %v392
    %v1716 = vmul.f32 %v1706, %v388
    %v1717 = vmul.f32 %v1710, %v392
    %v1718 = vmul.f32 %v1707, %v388
    %v1719 = vmul.f32 %v1711, %v392
    %1720 = vst [vmem:[#allocation2 + $0x280] sm:$0xff] %v1712
    %1721 = vst [vmem:[#allocation2 + $0x288] sm:$0xff] %v1713
    %1722 = vst [vmem:[#allocation2 + $0x2a0] sm:$0xff] %v1714
    %1723 = vst [vmem:[#allocation2 + $0x2a8] sm:$0xff] %v1715
    %1724 = vst [vmem:[#allocation2 + $0x2c0] sm:$0xff] %v1716
    %1725 = vst [vmem:[#allocation2 + $0x2c8] sm:$0xff] %v1717
    %1726 = vst [vmem:[#allocation2 + $0x2e0] sm:$0xff] %v1718
    %1727 = vst [vmem:[#allocation2 + $0x2e8] sm:$0xff] %v1719
    %1728 = vrot.lane.b32.xlu0 %v1460, 113
    %v1729 = vpop.permute.xlu0 %1728
    %1730 = vrot.lane.b32.xlu0 %v1462, 113
    %v1731 = vpop.permute.xlu0 %1730
    %1732 = vrot.lane.b32.xlu0 %v1464, 113
    %v1733 = vpop.permute.xlu0 %1732
    %1734 = vrot.lane.b32.xlu0 %v1466, 113
    %v1735 = vpop.permute.xlu0 %1734
    %1736 = vrot.lane.b32.xlu0 %v1461, 113
    %v1737 = vpop.permute.xlu0 %1736
    %1738 = vrot.lane.b32.xlu0 %v1463, 113
    %v1739 = vpop.permute.xlu0 %1738
    %1740 = vrot.lane.b32.xlu0 %v1465, 113
    %v1741 = vpop.permute.xlu0 %1740
    %1742 = vrot.lane.b32.xlu0 %v1467, 113
    %v1743 = vpop.permute.xlu0 %1742
    %v1744 = vsel %vm427, %v1729, %v1737
    %v1745 = vsel %vm427, %v1731, %v1739
    %v1746 = vsel %vm427, %v1733, %v1741
    %v1747 = vsel %vm427, %v1735, %v1743
    %v1748 = vsel %vm427, %v1737, %v1729
    %v1749 = vsel %vm427, %v1739, %v1731
    %v1750 = vsel %vm427, %v1741, %v1733
    %v1751 = vsel %vm427, %v1743, %v1735
    %v1752 = vmul.f32 %v1744, %v440
    %v1753 = vmul.f32 %v1748, %v444
    %v1754 = vmul.f32 %v1745, %v440
    %v1755 = vmul.f32 %v1749, %v444
    %v1756 = vmul.f32 %v1746, %v440
    %v1757 = vmul.f32 %v1750, %v444
    %v1758 = vmul.f32 %v1747, %v440
    %v1759 = vmul.f32 %v1751, %v444
    %1760 = vst [vmem:[#allocation2 + $0x300] sm:$0xff] %v1752
    %1761 = vst [vmem:[#allocation2 + $0x308] sm:$0xff] %v1753
    %1762 = vst [vmem:[#allocation2 + $0x320] sm:$0xff] %v1754
    %1763 = vst [vmem:[#allocation2 + $0x328] sm:$0xff] %v1755
    %1764 = vst [vmem:[#allocation2 + $0x340] sm:$0xff] %v1756
    %1765 = vst [vmem:[#allocation2 + $0x348] sm:$0xff] %v1757
    %1766 = vst [vmem:[#allocation2 + $0x360] sm:$0xff] %v1758
    %1767 = vst [vmem:[#allocation2 + $0x368] sm:$0xff] %v1759
    %1768 = vrot.lane.b32.xlu0 %v1460, 112
    %v1769 = vpop.permute.xlu0 %1768
    %1770 = vrot.lane.b32.xlu0 %v1462, 112
    %v1771 = vpop.permute.xlu0 %1770
    %1772 = vrot.lane.b32.xlu0 %v1464, 112
    %v1773 = vpop.permute.xlu0 %1772
    %1774 = vrot.lane.b32.xlu0 %v1466, 112
    %v1775 = vpop.permute.xlu0 %1774
    %1776 = vrot.lane.b32.xlu0 %v1461, 112
    %v1777 = vpop.permute.xlu0 %1776
    %1778 = vrot.lane.b32.xlu0 %v1463, 112
    %v1779 = vpop.permute.xlu0 %1778
    %1780 = vrot.lane.b32.xlu0 %v1465, 112
    %v1781 = vpop.permute.xlu0 %1780
    %1782 = vrot.lane.b32.xlu0 %v1467, 112
    %v1783 = vpop.permute.xlu0 %1782
    %v1784 = vsel %vm479, %v1769, %v1777
    %v1785 = vsel %vm479, %v1771, %v1779
    %v1786 = vsel %vm479, %v1773, %v1781
    %v1787 = vsel %vm479, %v1775, %v1783
    %v1788 = vsel %vm479, %v1777, %v1769
    %v1789 = vsel %vm479, %v1779, %v1771
    %v1790 = vsel %vm479, %v1781, %v1773
    %v1791 = vsel %vm479, %v1783, %v1775
    %v1792 = vmul.f32 %v1784, %v492
    %v1793 = vmul.f32 %v1788, %v496
    %v1794 = vmul.f32 %v1785, %v492
    %v1795 = vmul.f32 %v1789, %v496
    %v1796 = vmul.f32 %v1786, %v492
    %v1797 = vmul.f32 %v1790, %v496
    %v1798 = vmul.f32 %v1787, %v492
    %v1799 = vmul.f32 %v1791, %v496
    %1800 = vst [vmem:[#allocation2 + $0x380] sm:$0xff] %v1792
    %1801 = vst [vmem:[#allocation2 + $0x388] sm:$0xff] %v1793
    %1802 = vst [vmem:[#allocation2 + $0x3a0] sm:$0xff] %v1794
    %1803 = vst [vmem:[#allocation2 + $0x3a8] sm:$0xff] %v1795
    %1804 = vst [vmem:[#allocation2 + $0x3c0] sm:$0xff] %v1796
    %1805 = vst [vmem:[#allocation2 + $0x3c8] sm:$0xff] %v1797
    %1806 = vst [vmem:[#allocation2 + $0x3e0] sm:$0xff] %v1798
    %1807 = vst [vmem:[#allocation2 + $0x3e8] sm:$0xff] %v1799
    %1808 = vrot.lane.b32.xlu0 %v1460, 111
    %v1809 = vpop.permute.xlu0 %1808
    %1810 = vrot.lane.b32.xlu0 %v1462, 111
    %v1811 = vpop.permute.xlu0 %1810
    %1812 = vrot.lane.b32.xlu0 %v1464, 111
    %v1813 = vpop.permute.xlu0 %1812
    %1814 = vrot.lane.b32.xlu0 %v1466, 111
    %v1815 = vpop.permute.xlu0 %1814
    %1816 = vrot.lane.b32.xlu0 %v1461, 111
    %v1817 = vpop.permute.xlu0 %1816
    %1818 = vrot.lane.b32.xlu0 %v1463, 111
    %v1819 = vpop.permute.xlu0 %1818
    %1820 = vrot.lane.b32.xlu0 %v1465, 111
    %v1821 = vpop.permute.xlu0 %1820
    %1822 = vrot.lane.b32.xlu0 %v1467, 111
    %v1823 = vpop.permute.xlu0 %1822
    %v1824 = vsel %vm531, %v1809, %v1817
    %v1825 = vsel %vm531, %v1811, %v1819
    %v1826 = vsel %vm531, %v1813, %v1821
    %v1827 = vsel %vm531, %v1815, %v1823
    %v1828 = vsel %vm531, %v1817, %v1809
    %v1829 = vsel %vm531, %v1819, %v1811
    %v1830 = vsel %vm531, %v1821, %v1813
    %v1831 = vsel %vm531, %v1823, %v1815
    %v1832 = vmul.f32 %v1824, %v544
    %v1833 = vmul.f32 %v1828, %v548
    %v1834 = vmul.f32 %v1825, %v544
    %v1835 = vmul.f32 %v1829, %v548
    %v1836 = vmul.f32 %v1826, %v544
    %v1837 = vmul.f32 %v1830, %v548
    %v1838 = vmul.f32 %v1827, %v544
    %v1839 = vmul.f32 %v1831, %v548
    %1840 = vst [vmem:[#allocation2 + $0x400] sm:$0xff] %v1832
    %1841 = vst [vmem:[#allocation2 + $0x408] sm:$0xff] %v1833
    %1842 = vst [vmem:[#allocation2 + $0x420] sm:$0xff] %v1834
    %1843 = vst [vmem:[#allocation2 + $0x428] sm:$0xff] %v1835
    %1844 = vst [vmem:[#allocation2 + $0x440] sm:$0xff] %v1836
    %1845 = vst [vmem:[#allocation2 + $0x448] sm:$0xff] %v1837
    %1846 = vst [vmem:[#allocation2 + $0x460] sm:$0xff] %v1838
    %1847 = vst [vmem:[#allocation2 + $0x468] sm:$0xff] %v1839
    %1848 = vrot.lane.b32.xlu0 %v1500, 17
    %v1849 = vpop.permute.xlu0 %1848
    %1850 = vrot.lane.b32.xlu0 %v1502, 17
    %v1851 = vpop.permute.xlu0 %1850
    %1852 = vrot.lane.b32.xlu0 %v1504, 17
    %v1853 = vpop.permute.xlu0 %1852
    %1854 = vrot.lane.b32.xlu0 %v1506, 17
    %v1855 = vpop.permute.xlu0 %1854
    %1856 = vrot.lane.b32.xlu0 %v1501, 17
    %v1857 = vpop.permute.xlu0 %1856
    %1858 = vrot.lane.b32.xlu0 %v1503, 17
    %v1859 = vpop.permute.xlu0 %1858
    %1860 = vrot.lane.b32.xlu0 %v1505, 17
    %v1861 = vpop.permute.xlu0 %1860
    %1862 = vrot.lane.b32.xlu0 %v1507, 17
    %v1863 = vpop.permute.xlu0 %1862
    %v1864 = vsel %vm159, %v1849, %v1857
    %v1865 = vsel %vm159, %v1851, %v1859
    %v1866 = vsel %vm159, %v1853, %v1861
    %v1867 = vsel %vm159, %v1855, %v1863
    %v1868 = vsel %vm159, %v1857, %v1849
    %v1869 = vsel %vm159, %v1859, %v1851
    %v1870 = vsel %vm159, %v1861, %v1853
    %v1871 = vsel %vm159, %v1863, %v1855
    %v1872 = vmul.f32 %v1868, %v172
    %v1873 = vmul.f32 %v1864, %v176
    %v1874 = vmul.f32 %v1869, %v172
    %v1875 = vmul.f32 %v1865, %v176
    %v1876 = vmul.f32 %v1870, %v172
    %v1877 = vmul.f32 %v1866, %v176
    %v1878 = vmul.f32 %v1871, %v172
    %v1879 = vmul.f32 %v1867, %v176
    %1880 = vst [vmem:[#allocation2 + $0x10] sm:$0xff] %v1872
    %1881 = vst [vmem:[#allocation2 + $0x18] sm:$0xff] %v1873
    %1882 = vst [vmem:[#allocation2 + $0x30] sm:$0xff] %v1874
    %1883 = vst [vmem:[#allocation2 + $0x38] sm:$0xff] %v1875
    %1884 = vst [vmem:[#allocation2 + $0x50] sm:$0xff] %v1876
    %1885 = vst [vmem:[#allocation2 + $0x58] sm:$0xff] %v1877
    %1886 = vst [vmem:[#allocation2 + $0x70] sm:$0xff] %v1878
    %1887 = vst [vmem:[#allocation2 + $0x78] sm:$0xff] %v1879
    %1888 = vrot.lane.b32.xlu0 %v1500, 16
    %v1889 = vpop.permute.xlu0 %1888
    %1890 = vrot.lane.b32.xlu0 %v1502, 16
    %v1891 = vpop.permute.xlu0 %1890
    %1892 = vrot.lane.b32.xlu0 %v1504, 16
    %v1893 = vpop.permute.xlu0 %1892
    %1894 = vrot.lane.b32.xlu0 %v1506, 16
    %v1895 = vpop.permute.xlu0 %1894
    %1896 = vrot.lane.b32.xlu0 %v1501, 16
    %v1897 = vpop.permute.xlu0 %1896
    %1898 = vrot.lane.b32.xlu0 %v1503, 16
    %v1899 = vpop.permute.xlu0 %1898
    %1900 = vrot.lane.b32.xlu0 %v1505, 16
    %v1901 = vpop.permute.xlu0 %1900
    %1902 = vrot.lane.b32.xlu0 %v1507, 16
    %v1903 = vpop.permute.xlu0 %1902
    %v1904 = vsel %vm211, %v1889, %v1897
    %v1905 = vsel %vm211, %v1891, %v1899
    %v1906 = vsel %vm211, %v1893, %v1901
    %v1907 = vsel %vm211, %v1895, %v1903
    %v1908 = vsel %vm211, %v1897, %v1889
    %v1909 = vsel %vm211, %v1899, %v1891
    %v1910 = vsel %vm211, %v1901, %v1893
    %v1911 = vsel %vm211, %v1903, %v1895
    %v1912 = vmul.f32 %v1908, %v224
    %v1913 = vmul.f32 %v1904, %v228
    %v1914 = vmul.f32 %v1909, %v224
    %v1915 = vmul.f32 %v1905, %v228
    %v1916 = vmul.f32 %v1910, %v224
    %v1917 = vmul.f32 %v1906, %v228
    %v1918 = vmul.f32 %v1911, %v224
    %v1919 = vmul.f32 %v1907, %v228
    %1920 = vst [vmem:[#allocation2 + $0x90] sm:$0xff] %v1912
    %1921 = vst [vmem:[#allocation2 + $0x98] sm:$0xff] %v1913
    %1922 = vst [vmem:[#allocation2 + $0xb0] sm:$0xff] %v1914
    %1923 = vst [vmem:[#allocation2 + $0xb8] sm:$0xff] %v1915
    %1924 = vst [vmem:[#allocation2 + $0xd0] sm:$0xff] %v1916
    %1925 = vst [vmem:[#allocation2 + $0xd8] sm:$0xff] %v1917
    %1926 = vst [vmem:[#allocation2 + $0xf0] sm:$0xff] %v1918
    %1927 = vst [vmem:[#allocation2 + $0xf8] sm:$0xff] %v1919
    %1928 = vrot.lane.b32.xlu0 %v1500, 15
    %v1929 = vpop.permute.xlu0 %1928
    %1930 = vrot.lane.b32.xlu0 %v1502, 15
    %v1931 = vpop.permute.xlu0 %1930
    %1932 = vrot.lane.b32.xlu0 %v1504, 15
    %v1933 = vpop.permute.xlu0 %1932
    %1934 = vrot.lane.b32.xlu0 %v1506, 15
    %v1935 = vpop.permute.xlu0 %1934
    %1936 = vrot.lane.b32.xlu0 %v1501, 15
    %v1937 = vpop.permute.xlu0 %1936
    %1938 = vrot.lane.b32.xlu0 %v1503, 15
    %v1939 = vpop.permute.xlu0 %1938
    %1940 = vrot.lane.b32.xlu0 %v1505, 15
    %v1941 = vpop.permute.xlu0 %1940
    %1942 = vrot.lane.b32.xlu0 %v1507, 15
    %v1943 = vpop.permute.xlu0 %1942
    %v1944 = vsel %vm263, %v1929, %v1937
    %v1945 = vsel %vm263, %v1931, %v1939
    %v1946 = vsel %vm263, %v1933, %v1941
    %v1947 = vsel %vm263, %v1935, %v1943
    %v1948 = vsel %vm263, %v1937, %v1929
    %v1949 = vsel %vm263, %v1939, %v1931
    %v1950 = vsel %vm263, %v1941, %v1933
    %v1951 = vsel %vm263, %v1943, %v1935
    %v1952 = vmul.f32 %v1948, %v276
    %v1953 = vmul.f32 %v1944, %v280
    %v1954 = vmul.f32 %v1949, %v276
    %v1955 = vmul.f32 %v1945, %v280
    %v1956 = vmul.f32 %v1950, %v276
    %v1957 = vmul.f32 %v1946, %v280
    %v1958 = vmul.f32 %v1951, %v276
    %v1959 = vmul.f32 %v1947, %v280
    %1960 = vst [vmem:[#allocation2 + $0x110] sm:$0xff] %v1952
    %1961 = vst [vmem:[#allocation2 + $0x118] sm:$0xff] %v1953
    %1962 = vst [vmem:[#allocation2 + $0x130] sm:$0xff] %v1954
    %1963 = vst [vmem:[#allocation2 + $0x138] sm:$0xff] %v1955
    %1964 = vst [vmem:[#allocation2 + $0x150] sm:$0xff] %v1956
    %1965 = vst [vmem:[#allocation2 + $0x158] sm:$0xff] %v1957
    %1966 = vst [vmem:[#allocation2 + $0x170] sm:$0xff] %v1958
    %1967 = vst [vmem:[#allocation2 + $0x178] sm:$0xff] %v1959
    %1968 = vrot.lane.b32.xlu0 %v1500, 1
    %v1969 = vpop.permute.xlu0 %1968
    %1970 = vrot.lane.b32.xlu0 %v1502, 1
    %v1971 = vpop.permute.xlu0 %1970
    %1972 = vrot.lane.b32.xlu0 %v1504, 1
    %v1973 = vpop.permute.xlu0 %1972
    %1974 = vrot.lane.b32.xlu0 %v1506, 1
    %v1975 = vpop.permute.xlu0 %1974
    %1976 = vrot.lane.b32.xlu0 %v1501, 1
    %v1977 = vpop.permute.xlu0 %1976
    %1978 = vrot.lane.b32.xlu0 %v1503, 1
    %v1979 = vpop.permute.xlu0 %1978
    %1980 = vrot.lane.b32.xlu0 %v1505, 1
    %v1981 = vpop.permute.xlu0 %1980
    %1982 = vrot.lane.b32.xlu0 %v1507, 1
    %v1983 = vpop.permute.xlu0 %1982
    %v1984 = vsel %vm315, %v1969, %v1977
    %v1985 = vsel %vm315, %v1971, %v1979
    %v1986 = vsel %vm315, %v1973, %v1981
    %v1987 = vsel %vm315, %v1975, %v1983
    %v1988 = vsel %vm315, %v1977, %v1969
    %v1989 = vsel %vm315, %v1979, %v1971
    %v1990 = vsel %vm315, %v1981, %v1973
    %v1991 = vsel %vm315, %v1983, %v1975
    %v1992 = vmul.f32 %v1988, %v328
    %v1993 = vmul.f32 %v1984, %v332
    %v1994 = vmul.f32 %v1989, %v328
    %v1995 = vmul.f32 %v1985, %v332
    %v1996 = vmul.f32 %v1990, %v328
    %v1997 = vmul.f32 %v1986, %v332
    %v1998 = vmul.f32 %v1991, %v328
    %v1999 = vmul.f32 %v1987, %v332
    %2000 = vst [vmem:[#allocation2 + $0x190] sm:$0xff] %v1992
    %2001 = vst [vmem:[#allocation2 + $0x198] sm:$0xff] %v1993
    %2002 = vst [vmem:[#allocation2 + $0x1b0] sm:$0xff] %v1994
    %2003 = vst [vmem:[#allocation2 + $0x1b8] sm:$0xff] %v1995
    %2004 = vst [vmem:[#allocation2 + $0x1d0] sm:$0xff] %v1996
    %2005 = vst [vmem:[#allocation2 + $0x1d8] sm:$0xff] %v1997
    %2006 = vst [vmem:[#allocation2 + $0x1f0] sm:$0xff] %v1998
    %2007 = vst [vmem:[#allocation2 + $0x1f8] sm:$0xff] %v1999
    %2008 = vst [vmem:[#allocation2 + $0x210] sm:$0xff] %v1500
    %2009 = vst [vmem:[#allocation2 + $0x218] sm:$0xff] %v1501
    %2010 = vst [vmem:[#allocation2 + $0x230] sm:$0xff] %v1502
    %2011 = vst [vmem:[#allocation2 + $0x238] sm:$0xff] %v1503
    %2012 = vst [vmem:[#allocation2 + $0x250] sm:$0xff] %v1504
    %2013 = vst [vmem:[#allocation2 + $0x258] sm:$0xff] %v1505
    %2014 = vst [vmem:[#allocation2 + $0x270] sm:$0xff] %v1506
    %2015 = vst [vmem:[#allocation2 + $0x278] sm:$0xff] %v1507
    %2016 = vrot.lane.b32.xlu0 %v1500, 127
    %v2017 = vpop.permute.xlu0 %2016
    %2018 = vrot.lane.b32.xlu0 %v1502, 127
    %v2019 = vpop.permute.xlu0 %2018
    %2020 = vrot.lane.b32.xlu0 %v1504, 127
    %v2021 = vpop.permute.xlu0 %2020
    %2022 = vrot.lane.b32.xlu0 %v1506, 127
    %v2023 = vpop.permute.xlu0 %2022
    %2024 = vrot.lane.b32.xlu0 %v1501, 127
    %v2025 = vpop.permute.xlu0 %2024
    %2026 = vrot.lane.b32.xlu0 %v1503, 127
    %v2027 = vpop.permute.xlu0 %2026
    %2028 = vrot.lane.b32.xlu0 %v1505, 127
    %v2029 = vpop.permute.xlu0 %2028
    %2030 = vrot.lane.b32.xlu0 %v1507, 127
    %v2031 = vpop.permute.xlu0 %2030
    %v2032 = vsel %vm375, %v2017, %v2025
    %v2033 = vsel %vm375, %v2019, %v2027
    %v2034 = vsel %vm375, %v2021, %v2029
    %v2035 = vsel %vm375, %v2023, %v2031
    %v2036 = vsel %vm375, %v2025, %v2017
    %v2037 = vsel %vm375, %v2027, %v2019
    %v2038 = vsel %vm375, %v2029, %v2021
    %v2039 = vsel %vm375, %v2031, %v2023
    %v2040 = vmul.f32 %v2032, %v388
    %v2041 = vmul.f32 %v2036, %v392
    %v2042 = vmul.f32 %v2033, %v388
    %v2043 = vmul.f32 %v2037, %v392
    %v2044 = vmul.f32 %v2034, %v388
    %v2045 = vmul.f32 %v2038, %v392
    %v2046 = vmul.f32 %v2035, %v388
    %v2047 = vmul.f32 %v2039, %v392
    %2048 = vst [vmem:[#allocation2 + $0x290] sm:$0xff] %v2040
    %2049 = vst [vmem:[#allocation2 + $0x298] sm:$0xff] %v2041
    %2050 = vst [vmem:[#allocation2 + $0x2b0] sm:$0xff] %v2042
    %2051 = vst [vmem:[#allocation2 + $0x2b8] sm:$0xff] %v2043
    %2052 = vst [vmem:[#allocation2 + $0x2d0] sm:$0xff] %v2044
    %2053 = vst [vmem:[#allocation2 + $0x2d8] sm:$0xff] %v2045
    %2054 = vst [vmem:[#allocation2 + $0x2f0] sm:$0xff] %v2046
    %2055 = vst [vmem:[#allocation2 + $0x2f8] sm:$0xff] %v2047
    %2056 = vrot.lane.b32.xlu0 %v1500, 113
    %v2057 = vpop.permute.xlu0 %2056
    %2058 = vrot.lane.b32.xlu0 %v1502, 113
    %v2059 = vpop.permute.xlu0 %2058
    %2060 = vrot.lane.b32.xlu0 %v1504, 113
    %v2061 = vpop.permute.xlu0 %2060
    %2062 = vrot.lane.b32.xlu0 %v1506, 113
    %v2063 = vpop.permute.xlu0 %2062
    %2064 = vrot.lane.b32.xlu0 %v1501, 113
    %v2065 = vpop.permute.xlu0 %2064
    %2066 = vrot.lane.b32.xlu0 %v1503, 113
    %v2067 = vpop.permute.xlu0 %2066
    %2068 = vrot.lane.b32.xlu0 %v1505, 113
    %v2069 = vpop.permute.xlu0 %2068
    %2070 = vrot.lane.b32.xlu0 %v1507, 113
    %v2071 = vpop.permute.xlu0 %2070
    %v2072 = vsel %vm427, %v2057, %v2065
    %v2073 = vsel %vm427, %v2059, %v2067
    %v2074 = vsel %vm427, %v2061, %v2069
    %v2075 = vsel %vm427, %v2063, %v2071
    %v2076 = vsel %vm427, %v2065, %v2057
    %v2077 = vsel %vm427, %v2067, %v2059
    %v2078 = vsel %vm427, %v2069, %v2061
    %v2079 = vsel %vm427, %v2071, %v2063
    %v2080 = vmul.f32 %v2072, %v440
    %v2081 = vmul.f32 %v2076, %v444
    %v2082 = vmul.f32 %v2073, %v440
    %v2083 = vmul.f32 %v2077, %v444
    %v2084 = vmul.f32 %v2074, %v440
    %v2085 = vmul.f32 %v2078, %v444
    %v2086 = vmul.f32 %v2075, %v440
    %v2087 = vmul.f32 %v2079, %v444
    %2088 = vst [vmem:[#allocation2 + $0x310] sm:$0xff] %v2080
    %2089 = vst [vmem:[#allocation2 + $0x318] sm:$0xff] %v2081
    %2090 = vst [vmem:[#allocation2 + $0x330] sm:$0xff] %v2082
    %2091 = vst [vmem:[#allocation2 + $0x338] sm:$0xff] %v2083
    %2092 = vst [vmem:[#allocation2 + $0x350] sm:$0xff] %v2084
    %2093 = vst [vmem:[#allocation2 + $0x358] sm:$0xff] %v2085
    %2094 = vst [vmem:[#allocation2 + $0x370] sm:$0xff] %v2086
    %2095 = vst [vmem:[#allocation2 + $0x378] sm:$0xff] %v2087
    %2096 = vrot.lane.b32.xlu0 %v1500, 112
    %v2097 = vpop.permute.xlu0 %2096
    %2098 = vrot.lane.b32.xlu0 %v1502, 112
    %v2099 = vpop.permute.xlu0 %2098
    %2100 = vrot.lane.b32.xlu0 %v1504, 112
    %v2101 = vpop.permute.xlu0 %2100
    %2102 = vrot.lane.b32.xlu0 %v1506, 112
    %v2103 = vpop.permute.xlu0 %2102
    %2104 = vrot.lane.b32.xlu0 %v1501, 112
    %v2105 = vpop.permute.xlu0 %2104
    %2106 = vrot.lane.b32.xlu0 %v1503, 112
    %v2107 = vpop.permute.xlu0 %2106
    %2108 = vrot.lane.b32.xlu0 %v1505, 112
    %v2109 = vpop.permute.xlu0 %2108
    %2110 = vrot.lane.b32.xlu0 %v1507, 112
    %v2111 = vpop.permute.xlu0 %2110
    %v2112 = vsel %vm479, %v2097, %v2105
    %v2113 = vsel %vm479, %v2099, %v2107
    %v2114 = vsel %vm479, %v2101, %v2109
    %v2115 = vsel %vm479, %v2103, %v2111
    %v2116 = vsel %vm479, %v2105, %v2097
    %v2117 = vsel %vm479, %v2107, %v2099
    %v2118 = vsel %vm479, %v2109, %v2101
    %v2119 = vsel %vm479, %v2111, %v2103
    %v2120 = vmul.f32 %v2112, %v492
    %v2121 = vmul.f32 %v2116, %v496
    %v2122 = vmul.f32 %v2113, %v492
    %v2123 = vmul.f32 %v2117, %v496
    %v2124 = vmul.f32 %v2114, %v492
    %v2125 = vmul.f32 %v2118, %v496
    %v2126 = vmul.f32 %v2115, %v492
    %v2127 = vmul.f32 %v2119, %v496
    %2128 = vst [vmem:[#allocation2 + $0x390] sm:$0xff] %v2120
    %2129 = vst [vmem:[#allocation2 + $0x398] sm:$0xff] %v2121
    %2130 = vst [vmem:[#allocation2 + $0x3b0] sm:$0xff] %v2122
    %2131 = vst [vmem:[#allocation2 + $0x3b8] sm:$0xff] %v2123
    %2132 = vst [vmem:[#allocation2 + $0x3d0] sm:$0xff] %v2124
    %2133 = vst [vmem:[#allocation2 + $0x3d8] sm:$0xff] %v2125
    %2134 = vst [vmem:[#allocation2 + $0x3f0] sm:$0xff] %v2126
    %2135 = vst [vmem:[#allocation2 + $0x3f8] sm:$0xff] %v2127
    %2136 = vrot.lane.b32.xlu0 %v1500, 111
    %v2137 = vpop.permute.xlu0 %2136
    %2138 = vrot.lane.b32.xlu0 %v1502, 111
    %v2139 = vpop.permute.xlu0 %2138
    %2140 = vrot.lane.b32.xlu0 %v1504, 111
    %v2141 = vpop.permute.xlu0 %2140
    %2142 = vrot.lane.b32.xlu0 %v1506, 111
    %v2143 = vpop.permute.xlu0 %2142
    %2144 = vrot.lane.b32.xlu0 %v1501, 111
    %v2145 = vpop.permute.xlu0 %2144
    %2146 = vrot.lane.b32.xlu0 %v1503, 111
    %v2147 = vpop.permute.xlu0 %2146
    %2148 = vrot.lane.b32.xlu0 %v1505, 111
    %v2149 = vpop.permute.xlu0 %2148
    %2150 = vrot.lane.b32.xlu0 %v1507, 111
    %v2151 = vpop.permute.xlu0 %2150
    %v2152 = vsel %vm531, %v2137, %v2145
    %v2153 = vsel %vm531, %v2139, %v2147
    %v2154 = vsel %vm531, %v2141, %v2149
    %v2155 = vsel %vm531, %v2143, %v2151
    %v2156 = vsel %vm531, %v2145, %v2137
    %v2157 = vsel %vm531, %v2147, %v2139
    %v2158 = vsel %vm531, %v2149, %v2141
    %v2159 = vsel %vm531, %v2151, %v2143
    %v2160 = vmul.f32 %v2152, %v544
    %v2161 = vmul.f32 %v2156, %v548
    %v2162 = vmul.f32 %v2153, %v544
    %v2163 = vmul.f32 %v2157, %v548
    %v2164 = vmul.f32 %v2154, %v544
    %v2165 = vmul.f32 %v2158, %v548
    %v2166 = vmul.f32 %v2155, %v544
    %v2167 = vmul.f32 %v2159, %v548
    %2168 = vst [vmem:[#allocation2 + $0x410] sm:$0xff] %v2160
    %2169 = vst [vmem:[#allocation2 + $0x418] sm:$0xff] %v2161
    %2170 = vst [vmem:[#allocation2 + $0x430] sm:$0xff] %v2162
    %2171 = vst [vmem:[#allocation2 + $0x438] sm:$0xff] %v2163
    %2172 = vst [vmem:[#allocation2 + $0x450] sm:$0xff] %v2164
    %2173 = vst [vmem:[#allocation2 + $0x458] sm:$0xff] %v2165
    %2174 = vst [vmem:[#allocation2 + $0x470] sm:$0xff] %v2166
    %2175 = vst [vmem:[#allocation2 + $0x478] sm:$0xff] %v2167
    %v2176 = vld [vmem:[#allocation2] sm:$0xff]
    %v2177 = vld [vmem:[#allocation2 + $0x8] sm:$0xff]
    %v2178 = vld [vmem:[#allocation2 + $0x10] sm:$0xff]
    %v2179 = vld [vmem:[#allocation2 + $0x18] sm:$0xff]
    %v2180 = vld [vmem:[#allocation2 + $0x20] sm:$0xff]
    %v2181 = vld [vmem:[#allocation2 + $0x28] sm:$0xff]
    %v2182 = vld [vmem:[#allocation2 + $0x30] sm:$0xff]
    %v2183 = vld [vmem:[#allocation2 + $0x38] sm:$0xff]
    %v2184 = vld [vmem:[#allocation2 + $0x40] sm:$0xff]
    %v2185 = vld [vmem:[#allocation2 + $0x48] sm:$0xff]
    %v2186 = vld [vmem:[#allocation2 + $0x50] sm:$0xff]
    %v2187 = vld [vmem:[#allocation2 + $0x58] sm:$0xff]
    %v2188 = vld [vmem:[#allocation2 + $0x60] sm:$0xff]
    %v2189 = vld [vmem:[#allocation2 + $0x68] sm:$0xff]
    %v2190 = vld [vmem:[#allocation2 + $0x70] sm:$0xff]
    %v2191 = vld [vmem:[#allocation2 + $0x78] sm:$0xff]
    %v2192 = vld [vmem:[#allocation2 + $0x80] sm:$0xff]
    %v2193 = vld [vmem:[#allocation2 + $0x88] sm:$0xff]
    %v2194 = vld [vmem:[#allocation2 + $0x90] sm:$0xff]
    %v2195 = vld [vmem:[#allocation2 + $0x98] sm:$0xff]
    %v2196 = vld [vmem:[#allocation2 + $0xa0] sm:$0xff]
    %v2197 = vld [vmem:[#allocation2 + $0xa8] sm:$0xff]
    %v2198 = vld [vmem:[#allocation2 + $0xb0] sm:$0xff]
    %v2199 = vld [vmem:[#allocation2 + $0xb8] sm:$0xff]
    %v2200 = vld [vmem:[#allocation2 + $0xc0] sm:$0xff]
    %v2201 = vld [vmem:[#allocation2 + $0xc8] sm:$0xff]
    %v2202 = vld [vmem:[#allocation2 + $0xd0] sm:$0xff]
    %v2203 = vld [vmem:[#allocation2 + $0xd8] sm:$0xff]
    %v2204 = vld [vmem:[#allocation2 + $0xe0] sm:$0xff]
    %v2205 = vld [vmem:[#allocation2 + $0xe8] sm:$0xff]
    %v2206 = vld [vmem:[#allocation2 + $0xf0] sm:$0xff]
    %v2207 = vld [vmem:[#allocation2 + $0xf8] sm:$0xff]
    %v2208 = vld [vmem:[#allocation2 + $0x100] sm:$0xff]
    %v2209 = vld [vmem:[#allocation2 + $0x108] sm:$0xff]
    %v2210 = vld [vmem:[#allocation2 + $0x110] sm:$0xff]
    %v2211 = vld [vmem:[#allocation2 + $0x118] sm:$0xff]
    %v2212 = vld [vmem:[#allocation2 + $0x120] sm:$0xff]
    %v2213 = vld [vmem:[#allocation2 + $0x128] sm:$0xff]
    %v2214 = vld [vmem:[#allocation2 + $0x130] sm:$0xff]
    %v2215 = vld [vmem:[#allocation2 + $0x138] sm:$0xff]
    %v2216 = vld [vmem:[#allocation2 + $0x140] sm:$0xff]
    %v2217 = vld [vmem:[#allocation2 + $0x148] sm:$0xff]
    %v2218 = vld [vmem:[#allocation2 + $0x150] sm:$0xff]
    %v2219 = vld [vmem:[#allocation2 + $0x158] sm:$0xff]
    %v2220 = vld [vmem:[#allocation2 + $0x160] sm:$0xff]
    %v2221 = vld [vmem:[#allocation2 + $0x168] sm:$0xff]
    %v2222 = vld [vmem:[#allocation2 + $0x170] sm:$0xff]
    %v2223 = vld [vmem:[#allocation2 + $0x178] sm:$0xff]
    %v2224 = vld [vmem:[#allocation2 + $0x180] sm:$0xff]
    %v2225 = vld [vmem:[#allocation2 + $0x188] sm:$0xff]
    %v2226 = vld [vmem:[#allocation2 + $0x190] sm:$0xff]
    %v2227 = vld [vmem:[#allocation2 + $0x198] sm:$0xff]
    %v2228 = vld [vmem:[#allocation2 + $0x1a0] sm:$0xff]
    %v2229 = vld [vmem:[#allocation2 + $0x1a8] sm:$0xff]
    %v2230 = vld [vmem:[#allocation2 + $0x1b0] sm:$0xff]
    %v2231 = vld [vmem:[#allocation2 + $0x1b8] sm:$0xff]
    %v2232 = vld [vmem:[#allocation2 + $0x1c0] sm:$0xff]
    %v2233 = vld [vmem:[#allocation2 + $0x1c8] sm:$0xff]
    %v2234 = vld [vmem:[#allocation2 + $0x1d0] sm:$0xff]
    %v2235 = vld [vmem:[#allocation2 + $0x1d8] sm:$0xff]
    %v2236 = vld [vmem:[#allocation2 + $0x1e0] sm:$0xff]
    %v2237 = vld [vmem:[#allocation2 + $0x1e8] sm:$0xff]
    %v2238 = vld [vmem:[#allocation2 + $0x1f0] sm:$0xff]
    %v2239 = vld [vmem:[#allocation2 + $0x1f8] sm:$0xff]
    %v2240 = vld [vmem:[#allocation2 + $0x200] sm:$0xff]
    %v2241 = vld [vmem:[#allocation2 + $0x208] sm:$0xff]
    %v2242 = vld [vmem:[#allocation2 + $0x210] sm:$0xff]
    %v2243 = vld [vmem:[#allocation2 + $0x218] sm:$0xff]
    %v2244 = vld [vmem:[#allocation2 + $0x220] sm:$0xff]
    %v2245 = vld [vmem:[#allocation2 + $0x228] sm:$0xff]
    %v2246 = vld [vmem:[#allocation2 + $0x230] sm:$0xff]
    %v2247 = vld [vmem:[#allocation2 + $0x238] sm:$0xff]
    %v2248 = vld [vmem:[#allocation2 + $0x240] sm:$0xff]
    %v2249 = vld [vmem:[#allocation2 + $0x248] sm:$0xff]
    %v2250 = vld [vmem:[#allocation2 + $0x250] sm:$0xff]
    %v2251 = vld [vmem:[#allocation2 + $0x258] sm:$0xff]
    %v2252 = vld [vmem:[#allocation2 + $0x260] sm:$0xff]
    %v2253 = vld [vmem:[#allocation2 + $0x268] sm:$0xff]
    %v2254 = vld [vmem:[#allocation2 + $0x270] sm:$0xff]
    %v2255 = vld [vmem:[#allocation2 + $0x278] sm:$0xff]
    %v2256 = vld [vmem:[#allocation2 + $0x280] sm:$0xff]
    %v2257 = vld [vmem:[#allocation2 + $0x288] sm:$0xff]
    %v2258 = vld [vmem:[#allocation2 + $0x290] sm:$0xff]
    %v2259 = vld [vmem:[#allocation2 + $0x298] sm:$0xff]
    %v2260 = vld [vmem:[#allocation2 + $0x2a0] sm:$0xff]
    %v2261 = vld [vmem:[#allocation2 + $0x2a8] sm:$0xff]
    %v2262 = vld [vmem:[#allocation2 + $0x2b0] sm:$0xff]
    %v2263 = vld [vmem:[#allocation2 + $0x2b8] sm:$0xff]
    %v2264 = vld [vmem:[#allocation2 + $0x2c0] sm:$0xff]
    %v2265 = vld [vmem:[#allocation2 + $0x2c8] sm:$0xff]
    %v2266 = vld [vmem:[#allocation2 + $0x2d0] sm:$0xff]
    %v2267 = vld [vmem:[#allocation2 + $0x2d8] sm:$0xff]
    %v2268 = vld [vmem:[#allocation2 + $0x2e0] sm:$0xff]
    %v2269 = vld [vmem:[#allocation2 + $0x2e8] sm:$0xff]
    %v2270 = vld [vmem:[#allocation2 + $0x2f0] sm:$0xff]
    %v2271 = vld [vmem:[#allocation2 + $0x2f8] sm:$0xff]
    %v2272 = vld [vmem:[#allocation2 + $0x300] sm:$0xff]
    %v2273 = vld [vmem:[#allocation2 + $0x308] sm:$0xff]
    %v2274 = vld [vmem:[#allocation2 + $0x310] sm:$0xff]
    %v2275 = vld [vmem:[#allocation2 + $0x318] sm:$0xff]
    %v2276 = vld [vmem:[#allocation2 + $0x320] sm:$0xff]
    %v2277 = vld [vmem:[#allocation2 + $0x328] sm:$0xff]
    %v2278 = vld [vmem:[#allocation2 + $0x330] sm:$0xff]
    %v2279 = vld [vmem:[#allocation2 + $0x338] sm:$0xff]
    %v2280 = vld [vmem:[#allocation2 + $0x340] sm:$0xff]
    %v2281 = vld [vmem:[#allocation2 + $0x348] sm:$0xff]
    %v2282 = vld [vmem:[#allocation2 + $0x350] sm:$0xff]
    %v2283 = vld [vmem:[#allocation2 + $0x358] sm:$0xff]
    %v2284 = vld [vmem:[#allocation2 + $0x360] sm:$0xff]
    %v2285 = vld [vmem:[#allocation2 + $0x368] sm:$0xff]
    %v2286 = vld [vmem:[#allocation2 + $0x370] sm:$0xff]
    %v2287 = vld [vmem:[#allocation2 + $0x378] sm:$0xff]
    %v2288 = vld [vmem:[#allocation2 + $0x380] sm:$0xff]
    %v2289 = vld [vmem:[#allocation2 + $0x388] sm:$0xff]
    %v2290 = vld [vmem:[#allocation2 + $0x390] sm:$0xff]
    %v2291 = vld [vmem:[#allocation2 + $0x398] sm:$0xff]
    %v2292 = vld [vmem:[#allocation2 + $0x3a0] sm:$0xff]
    %v2293 = vld [vmem:[#allocation2 + $0x3a8] sm:$0xff]
    %v2294 = vld [vmem:[#allocation2 + $0x3b0] sm:$0xff]
    %v2295 = vld [vmem:[#allocation2 + $0x3b8] sm:$0xff]
    %v2296 = vld [vmem:[#allocation2 + $0x3c0] sm:$0xff]
    %v2297 = vld [vmem:[#allocation2 + $0x3c8] sm:$0xff]
    %v2298 = vld [vmem:[#allocation2 + $0x3d0] sm:$0xff]
    %v2299 = vld [vmem:[#allocation2 + $0x3d8] sm:$0xff]
    %v2300 = vld [vmem:[#allocation2 + $0x3e0] sm:$0xff]
    %v2301 = vld [vmem:[#allocation2 + $0x3e8] sm:$0xff]
    %v2302 = vld [vmem:[#allocation2 + $0x3f0] sm:$0xff]
    %v2303 = vld [vmem:[#allocation2 + $0x3f8] sm:$0xff]
    %v2304 = vld [vmem:[#allocation2 + $0x400] sm:$0xff]
    %v2305 = vld [vmem:[#allocation2 + $0x408] sm:$0xff]
    %v2306 = vld [vmem:[#allocation2 + $0x410] sm:$0xff]
    %v2307 = vld [vmem:[#allocation2 + $0x418] sm:$0xff]
    %v2308 = vld [vmem:[#allocation2 + $0x420] sm:$0xff]
    %v2309 = vld [vmem:[#allocation2 + $0x428] sm:$0xff]
    %v2310 = vld [vmem:[#allocation2 + $0x430] sm:$0xff]
    %v2311 = vld [vmem:[#allocation2 + $0x438] sm:$0xff]
    %v2312 = vld [vmem:[#allocation2 + $0x440] sm:$0xff]
    %v2313 = vld [vmem:[#allocation2 + $0x448] sm:$0xff]
    %v2314 = vld [vmem:[#allocation2 + $0x450] sm:$0xff]
    %v2315 = vld [vmem:[#allocation2 + $0x458] sm:$0xff]
    %v2316 = vld [vmem:[#allocation2 + $0x460] sm:$0xff]
    %v2317 = vld [vmem:[#allocation2 + $0x468] sm:$0xff]
    %v2318 = vld [vmem:[#allocation2 + $0x470] sm:$0xff]
    %v2319 = vld [vmem:[#allocation2 + $0x478] sm:$0xff]
    %v2321 = vsel %vm1039, %v1510, 0
    %v2324 = vsel %vm1039, %v1513, 0
    %v2327 = vsel %vm1039, %v1516, 0
    %v2330 = vsel %vm1039, %v1519, 0
    %2332 = vmatprep.subr.mxu0 %v2237
    %2333 = vmatpush1.msra.mxu0 %v2236
    %2334 = vmatprep.subr.mxu0 %v2233
    %2335 = vmatpush1.msra.mxu0 %v2232
    %2336 = vmatprep.subr.mxu0 %v2229
    %2337 = vmatpush1.msra.mxu0 %v2228
    %2338 = vmatprep.subr.mxu0 %v2225
    %2339 = vmatpush1.msra.mxu0 %v2224
    %2340 = vmatprep.subr.mxu0 %v2221
    %2341 = vmatpush1.msra.mxu0 %v2220
    %2342 = vmatprep.subr.mxu0 %v2217
    %2343 = vmatpush1.msra.mxu0 %v2216
    %2344 = vmatprep.subr.mxu0 %v2213
    %2345 = vmatpush1.msra.mxu0 %v2212
    %2346 = vmatprep.subr.mxu0 %v2209
    %2347 = vmatpush1.msra.mxu0 %v2208
    %2348 = vmatprep.subr.mxu0 %v2205
    %2349 = vmatpush1.msra.mxu0 %v2204
    %2350 = vmatprep.subr.mxu0 %v2201
    %2351 = vmatpush1.msra.mxu0 %v2200
    %2352 = vmatprep.subr.mxu0 %v2197
    %2353 = vmatpush1.msra.mxu0 %v2196
    %2354 = vmatprep.subr.mxu0 %v2193
    %2355 = vmatpush1.msra.mxu0 %v2192
    %2356 = vmatprep.subr.mxu0 %v2189
    %2357 = vmatpush1.msra.mxu0 %v2188
    %2358 = vmatprep.subr.mxu0 %v2185
    %2359 = vmatpush1.msra.mxu0 %v2184
    %2360 = vmatprep.subr.mxu0 %v2181
    %2361 = vmatpush1.msra.mxu0 %v2180
    %2362 = vmatprep.subr.mxu0 %v2177
    %2363 = vmatpush1.msra.mxu0 %v2176
    %2364 = vmatprep.subr.mxu0 %v2301
    %2365 = vmatpush2.msra.mxu0 %v2300
    %2366 = vmatprep.subr.mxu0 %v2297
    %2367 = vmatpush2.msra.mxu0 %v2296
    %2368 = vmatprep.subr.mxu0 %v2293
    %2369 = vmatpush2.msra.mxu0 %v2292
    %2370 = vmatprep.subr.mxu0 %v2289
    %2371 = vmatpush2.msra.mxu0 %v2288
    %2372 = vmatprep.subr.mxu0 %v2285
    %2373 = vmatpush2.msra.mxu0 %v2284
    %2374 = vmatprep.subr.mxu0 %v2281
    %2375 = vmatpush2.msra.mxu0 %v2280
    %2376 = vmatprep.subr.mxu0 %v2277
    %2377 = vmatpush2.msra.mxu0 %v2276
    %2378 = vmatprep.subr.mxu0 %v2273
    %2379 = vmatpush2.msra.mxu0 %v2272
    %2380 = vmatprep.subr.mxu0 %v2269
    %2381 = vmatpush2.msra.mxu0 %v2268
    %2382 = vmatprep.subr.mxu0 %v2265
    %2383 = vmatpush2.msra.mxu0 %v2264
    %2384 = vmatprep.subr.mxu0 %v2261
    %2385 = vmatpush2.msra.mxu0 %v2260
    %2386 = vmatprep.subr.mxu0 %v2257
    %2387 = vmatpush2.msra.mxu0 %v2256
    %2388 = vmatprep.subr.mxu0 %v2253
    %2389 = vmatpush2.msra.mxu0 %v2252
    %2390 = vmatprep.subr.mxu0 %v2249
    %2391 = vmatpush2.msra.mxu0 %v2248
    %2392 = vmatprep.subr.mxu0 %v2245
    %2393 = vmatpush2.msra.mxu0 %v2244
    %2394 = vmatprep.subr.mxu0 %v2241
    %2395 = vmatpush2.msra.mxu0 %v2240
    %2396 = vmatprep.mubr.f32.mxu0 %v1509
    %2397 = vmatmul.mubr.f32.gmra.mxu0 %v1508
    %v2398 = vpop.f32.mrf.mxu0
    %v2399 = vadd.f32 0.0, %v2398
    %v2400 = vpop.f32.mrf.mxu0
    %v2401 = vadd.f32 0.0, %v2400
    %2402 = vmatprep.mubr.f32.mxu0 %v1512
    %2403 = vmatmul.mubr.f32.gmra.mxu0 %v1511
    %v2404 = vpop.f32.mrf.mxu0
    %v2405 = vadd.f32 0.0, %v2404
    %v2406 = vpop.f32.mrf.mxu0
    %v2407 = vadd.f32 0.0, %v2406
    %2408 = vmatprep.mubr.f32.mxu0 %v1515
    %2409 = vmatmul.mubr.f32.gmra.mxu0 %v1514
    %v2410 = vpop.f32.mrf.mxu0
    %v2411 = vadd.f32 0.0, %v2410
    %v2412 = vpop.f32.mrf.mxu0
    %v2413 = vadd.f32 0.0, %v2412
    %2414 = vmatprep.mubr.f32.mxu0 %v1518
    %2415 = vmatmul.mubr.f32.gmra.mxu0 %v1517
    %v2416 = vpop.f32.mrf.mxu0
    %v2417 = vadd.f32 0.0, %v2416
    %v2418 = vpop.f32.mrf.mxu0
    %v2419 = vadd.f32 0.0, %v2418
    %2420 = vdwg.mxu0
    %2421 = vmatprep.subr.mxu0 0.0
    %2422 = vmatpush1.msra.mxu0 0.0
    %2423 = vmatprep.subr.mxu0 0.0
    %2424 = vmatpush1.msra.mxu0 0.0
    %2425 = vmatprep.subr.mxu0 0.0
    %2426 = vmatpush1.msra.mxu0 0.0
    %2427 = vmatprep.subr.mxu0 0.0
    %2428 = vmatpush1.msra.mxu0 0.0
    %2429 = vmatprep.subr.mxu0 0.0
    %2430 = vmatpush1.msra.mxu0 0.0
    %2431 = vmatprep.subr.mxu0 0.0
    %2432 = vmatpush1.msra.mxu0 0.0
    %2433 = vmatprep.subr.mxu0 0.0
    %2434 = vmatpush1.msra.mxu0 0.0
    %2435 = vmatprep.subr.mxu0 0.0
    %2436 = vmatpush1.msra.mxu0 0.0
    %2437 = vmatprep.subr.mxu0 0.0
    %2438 = vmatpush1.msra.mxu0 0.0
    %2439 = vmatprep.subr.mxu0 0.0
    %2440 = vmatpush1.msra.mxu0 0.0
    %2441 = vmatprep.subr.mxu0 0.0
    %2442 = vmatpush1.msra.mxu0 0.0
    %2443 = vmatprep.subr.mxu0 0.0
    %2444 = vmatpush1.msra.mxu0 0.0
    %2445 = vmatprep.subr.mxu0 %v2317
    %2446 = vmatpush1.msra.mxu0 %v2316
    %2447 = vmatprep.subr.mxu0 %v2313
    %2448 = vmatpush1.msra.mxu0 %v2312
    %2449 = vmatprep.subr.mxu0 %v2309
    %2450 = vmatpush1.msra.mxu0 %v2308
    %2451 = vmatprep.subr.mxu0 %v2305
    %2452 = vmatpush1.msra.mxu0 %v2304
    %2453 = vmatprep.subr.mxu0 0.0
    %2454 = vmatpush2.msra.mxu0 0.0
    %2455 = vmatprep.subr.mxu0 0.0
    %2456 = vmatpush2.msra.mxu0 0.0
    %2457 = vmatprep.subr.mxu0 0.0
    %2458 = vmatpush2.msra.mxu0 0.0
    %2459 = vmatprep.subr.mxu0 0.0
    %2460 = vmatpush2.msra.mxu0 0.0
    %2461 = vmatprep.subr.mxu0 0.0
    %2462 = vmatpush2.msra.mxu0 0.0
    %2463 = vmatprep.subr.mxu0 0.0
    %2464 = vmatpush2.msra.mxu0 0.0
    %2465 = vmatprep.subr.mxu0 0.0
    %2466 = vmatpush2.msra.mxu0 0.0
    %2467 = vmatprep.subr.mxu0 0.0
    %2468 = vmatpush2.msra.mxu0 0.0
    %2469 = vmatprep.subr.mxu0 0.0
    %2470 = vmatpush2.msra.mxu0 0.0
    %2471 = vmatprep.subr.mxu0 0.0
    %2472 = vmatpush2.msra.mxu0 0.0
    %2473 = vmatprep.subr.mxu0 0.0
    %2474 = vmatpush2.msra.mxu0 0.0
    %2475 = vmatprep.subr.mxu0 0.0
    %2476 = vmatpush2.msra.mxu0 0.0
    %2477 = vmatprep.subr.mxu0 0.0
    %2478 = vmatpush2.msra.mxu0 0.0
    %2479 = vmatprep.subr.mxu0 0.0
    %2480 = vmatpush2.msra.mxu0 0.0
    %2481 = vmatprep.subr.mxu0 0.0
    %2482 = vmatpush2.msra.mxu0 0.0
    %2483 = vmatprep.subr.mxu0 0.0
    %2484 = vmatpush2.msra.mxu0 0.0
    %2485 = vmatprep.mubr.f32.mxu0 0.0
    %2486 = vmatmul.mubr.f32.gmra.mxu0 %v2321
    %v2487 = vpop.f32.mrf.mxu0
    %v2488 = vadd.f32 %v2399, %v2487
    %v2489 = vpop.f32.mrf.mxu0
    %v2490 = vadd.f32 %v2401, %v2489
    %2491 = vmatprep.mubr.f32.mxu0 0.0
    %2492 = vmatmul.mubr.f32.gmra.mxu0 %v2324
    %v2493 = vpop.f32.mrf.mxu0
    %v2494 = vadd.f32 %v2405, %v2493
    %v2495 = vpop.f32.mrf.mxu0
    %v2496 = vadd.f32 %v2407, %v2495
    %2497 = vmatprep.mubr.f32.mxu0 0.0
    %2498 = vmatmul.mubr.f32.gmra.mxu0 %v2327
    %v2499 = vpop.f32.mrf.mxu0
    %v2500 = vadd.f32 %v2411, %v2499
    %v2501 = vpop.f32.mrf.mxu0
    %v2502 = vadd.f32 %v2413, %v2501
    %2503 = vmatprep.mubr.f32.mxu0 0.0
    %2504 = vmatmul.mubr.f32.gmra.mxu0 %v2330
    %v2505 = vpop.f32.mrf.mxu0
    %v2506 = vadd.f32 %v2417, %v2505
    %v2507 = vpop.f32.mrf.mxu0
    %v2508 = vadd.f32 %v2419, %v2507
    %2509 = vdwg.mxu0
    %2510 = vmatprep.subr.mxu0 %v2239
    %2511 = vmatpush1.msra.mxu0 %v2238
    %2512 = vmatprep.subr.mxu0 %v2235
    %2513 = vmatpush1.msra.mxu0 %v2234
    %2514 = vmatprep.subr.mxu0 %v2231
    %2515 = vmatpush1.msra.mxu0 %v2230
    %2516 = vmatprep.subr.mxu0 %v2227
    %2517 = vmatpush1.msra.mxu0 %v2226
    %2518 = vmatprep.subr.mxu0 %v2223
    %2519 = vmatpush1.msra.mxu0 %v2222
    %2520 = vmatprep.subr.mxu0 %v2219
    %2521 = vmatpush1.msra.mxu0 %v2218
    %2522 = vmatprep.subr.mxu0 %v2215
    %2523 = vmatpush1.msra.mxu0 %v2214
    %2524 = vmatprep.subr.mxu0 %v2211
    %2525 = vmatpush1.msra.mxu0 %v2210
    %2526 = vmatprep.subr.mxu0 %v2207
    %2527 = vmatpush1.msra.mxu0 %v2206
    %2528 = vmatprep.subr.mxu0 %v2203
    %2529 = vmatpush1.msra.mxu0 %v2202
    %2530 = vmatprep.subr.mxu0 %v2199
    %2531 = vmatpush1.msra.mxu0 %v2198
    %2532 = vmatprep.subr.mxu0 %v2195
    %2533 = vmatpush1.msra.mxu0 %v2194
    %2534 = vmatprep.subr.mxu0 %v2191
    %2535 = vmatpush1.msra.mxu0 %v2190
    %2536 = vmatprep.subr.mxu0 %v2187
    %2537 = vmatpush1.msra.mxu0 %v2186
    %2538 = vmatprep.subr.mxu0 %v2183
    %2539 = vmatpush1.msra.mxu0 %v2182
    %2540 = vmatprep.subr.mxu0 %v2179
    %2541 = vmatpush1.msra.mxu0 %v2178
    %2542 = vmatprep.subr.mxu0 %v2303
    %2543 = vmatpush2.msra.mxu0 %v2302
    %2544 = vmatprep.subr.mxu0 %v2299
    %2545 = vmatpush2.msra.mxu0 %v2298
    %2546 = vmatprep.subr.mxu0 %v2295
    %2547 = vmatpush2.msra.mxu0 %v2294
    %2548 = vmatprep.subr.mxu0 %v2291
    %2549 = vmatpush2.msra.mxu0 %v2290
    %2550 = vmatprep.subr.mxu0 %v2287
    %2551 = vmatpush2.msra.mxu0 %v2286
    %2552 = vmatprep.subr.mxu0 %v2283
    %2553 = vmatpush2.msra.mxu0 %v2282
    %2554 = vmatprep.subr.mxu0 %v2279
    %2555 = vmatpush2.msra.mxu0 %v2278
    %2556 = vmatprep.subr.mxu0 %v2275
    %2557 = vmatpush2.msra.mxu0 %v2274
    %2558 = vmatprep.subr.mxu0 %v2271
    %2559 = vmatpush2.msra.mxu0 %v2270
    %2560 = vmatprep.subr.mxu0 %v2267
    %2561 = vmatpush2.msra.mxu0 %v2266
    %2562 = vmatprep.subr.mxu0 %v2263
    %2563 = vmatpush2.msra.mxu0 %v2262
    %2564 = vmatprep.subr.mxu0 %v2259
    %2565 = vmatpush2.msra.mxu0 %v2258
    %2566 = vmatprep.subr.mxu0 %v2255
    %2567 = vmatpush2.msra.mxu0 %v2254
    %2568 = vmatprep.subr.mxu0 %v2251
    %2569 = vmatpush2.msra.mxu0 %v2250
    %2570 = vmatprep.subr.mxu0 %v2247
    %2571 = vmatpush2.msra.mxu0 %v2246
    %2572 = vmatprep.subr.mxu0 %v2243
    %2573 = vmatpush2.msra.mxu0 %v2242
    %2574 = vmatprep.mubr.f32.mxu0 %v1509
    %2575 = vmatmul.mubr.f32.gmra.mxu0 %v1508
    %v2576 = vpop.f32.mrf.mxu0
    %v2577 = vadd.f32 0.0, %v2576
    %v2578 = vpop.f32.mrf.mxu0
    %v2579 = vadd.f32 0.0, %v2578
    %2580 = vmatprep.mubr.f32.mxu0 %v1512
    %2581 = vmatmul.mubr.f32.gmra.mxu0 %v1511
    %v2582 = vpop.f32.mrf.mxu0
    %v2583 = vadd.f32 0.0, %v2582
    %v2584 = vpop.f32.mrf.mxu0
    %v2585 = vadd.f32 0.0, %v2584
    %2586 = vmatprep.mubr.f32.mxu0 %v1515
    %2587 = vmatmul.mubr.f32.gmra.mxu0 %v1514
    %v2588 = vpop.f32.mrf.mxu0
    %v2589 = vadd.f32 0.0, %v2588
    %v2590 = vpop.f32.mrf.mxu0
    %v2591 = vadd.f32 0.0, %v2590
    %2592 = vmatprep.mubr.f32.mxu0 %v1518
    %2593 = vmatmul.mubr.f32.gmra.mxu0 %v1517
    %v2594 = vpop.f32.mrf.mxu0
    %v2595 = vadd.f32 0.0, %v2594
    %v2596 = vpop.f32.mrf.mxu0
    %v2597 = vadd.f32 0.0, %v2596
    %2598 = vdwg.mxu0
    %2599 = vmatprep.subr.mxu0 0.0
    %2600 = vmatpush1.msra.mxu0 0.0
    %2601 = vmatprep.subr.mxu0 0.0
    %2602 = vmatpush1.msra.mxu0 0.0
    %2603 = vmatprep.subr.mxu0 0.0
    %2604 = vmatpush1.msra.mxu0 0.0
    %2605 = vmatprep.subr.mxu0 0.0
    %2606 = vmatpush1.msra.mxu0 0.0
    %2607 = vmatprep.subr.mxu0 0.0
    %2608 = vmatpush1.msra.mxu0 0.0
    %2609 = vmatprep.subr.mxu0 0.0
    %2610 = vmatpush1.msra.mxu0 0.0
    %2611 = vmatprep.subr.mxu0 0.0
    %2612 = vmatpush1.msra.mxu0 0.0
    %2613 = vmatprep.subr.mxu0 0.0
    %2614 = vmatpush1.msra.mxu0 0.0
    %2615 = vmatprep.subr.mxu0 0.0
    %2616 = vmatpush1.msra.mxu0 0.0
    %2617 = vmatprep.subr.mxu0 0.0
    %2618 = vmatpush1.msra.mxu0 0.0
    %2619 = vmatprep.subr.mxu0 0.0
    %2620 = vmatpush1.msra.mxu0 0.0
    %2621 = vmatprep.subr.mxu0 0.0
    %2622 = vmatpush1.msra.mxu0 0.0
    %2623 = vmatprep.subr.mxu0 %v2319
    %2624 = vmatpush1.msra.mxu0 %v2318
    %2625 = vmatprep.subr.mxu0 %v2315
    %2626 = vmatpush1.msra.mxu0 %v2314
    %2627 = vmatprep.subr.mxu0 %v2311
    %2628 = vmatpush1.msra.mxu0 %v2310
    %2629 = vmatprep.subr.mxu0 %v2307
    %2630 = vmatpush1.msra.mxu0 %v2306
    %2631 = vmatprep.subr.mxu0 0.0
    %2632 = vmatpush2.msra.mxu0 0.0
    %2633 = vmatprep.subr.mxu0 0.0
    %2634 = vmatpush2.msra.mxu0 0.0
    %2635 = vmatprep.subr.mxu0 0.0
    %2636 = vmatpush2.msra.mxu0 0.0
    %2637 = vmatprep.subr.mxu0 0.0
    %2638 = vmatpush2.msra.mxu0 0.0
    %2639 = vmatprep.subr.mxu0 0.0
    %2640 = vmatpush2.msra.mxu0 0.0
    %2641 = vmatprep.subr.mxu0 0.0
    %2642 = vmatpush2.msra.mxu0 0.0
    %2643 = vmatprep.subr.mxu0 0.0
    %2644 = vmatpush2.msra.mxu0 0.0
    %2645 = vmatprep.subr.mxu0 0.0
    %2646 = vmatpush2.msra.mxu0 0.0
    %2647 = vmatprep.subr.mxu0 0.0
    %2648 = vmatpush2.msra.mxu0 0.0
    %2649 = vmatprep.subr.mxu0 0.0
    %2650 = vmatpush2.msra.mxu0 0.0
    %2651 = vmatprep.subr.mxu0 0.0
    %2652 = vmatpush2.msra.mxu0 0.0
    %2653 = vmatprep.subr.mxu0 0.0
    %2654 = vmatpush2.msra.mxu0 0.0
    %2655 = vmatprep.subr.mxu0 0.0
    %2656 = vmatpush2.msra.mxu0 0.0
    %2657 = vmatprep.subr.mxu0 0.0
    %2658 = vmatpush2.msra.mxu0 0.0
    %2659 = vmatprep.subr.mxu0 0.0
    %2660 = vmatpush2.msra.mxu0 0.0
    %2661 = vmatprep.subr.mxu0 0.0
    %2662 = vmatpush2.msra.mxu0 0.0
    %2663 = vmatprep.mubr.f32.mxu0 0.0
    %2664 = vmatmul.mubr.f32.gmra.mxu0 %v2321
    %v2665 = vpop.f32.mrf.mxu0
    %v2666 = vadd.f32 %v2577, %v2665
    %v2667 = vpop.f32.mrf.mxu0
    %v2668 = vadd.f32 %v2579, %v2667
    %2669 = vmatprep.mubr.f32.mxu0 0.0
    %2670 = vmatmul.mubr.f32.gmra.mxu0 %v2324
    %v2671 = vpop.f32.mrf.mxu0
    %v2672 = vadd.f32 %v2583, %v2671
    %v2673 = vpop.f32.mrf.mxu0
    %v2674 = vadd.f32 %v2585, %v2673
    %2675 = vmatprep.mubr.f32.mxu0 0.0
    %2676 = vmatmul.mubr.f32.gmra.mxu0 %v2327
    %v2677 = vpop.f32.mrf.mxu0
    %v2678 = vadd.f32 %v2589, %v2677
    %v2679 = vpop.f32.mrf.mxu0
    %v2680 = vadd.f32 %v2591, %v2679
    %2681 = vmatprep.mubr.f32.mxu0 0.0
    %2682 = vmatmul.mubr.f32.gmra.mxu0 %v2330
    %v2683 = vpop.f32.mrf.mxu0
    %v2684 = vadd.f32 %v2595, %v2683
    %v2685 = vpop.f32.mrf.mxu0
    %v2686 = vadd.f32 %v2597, %v2685
    %2687 = vdwg.mxu0
    %2689 = vset.pattern.permute.xlu0 0
    %2690 = vperm.xlu0 %2689, %v96
    %v2691 = vpop.permute.xlu0 %2690
    %2694 = vset.pattern.permute.xlu0 0
    %2695 = vperm.xlu0 %2694, %v97
    %v2696 = vpop.permute.xlu0 %2695
    %2699 = vset.pattern.permute.xlu0 0
    %2700 = vperm.xlu0 %2699, %v98
    %v2701 = vpop.permute.xlu0 %2700
    %2704 = vset.pattern.permute.xlu0 0
    %2705 = vperm.xlu0 %2704, %v99
    %v2706 = vpop.permute.xlu0 %2705
    %v2708 = vadd.f32 %v2488, %v2691
    %v2709 = vadd.f32 %v2490, %v2691
    %v2710 = vadd.f32 %v2494, %v2696
    %v2711 = vadd.f32 %v2496, %v2696
    %v2712 = vadd.f32 %v2500, %v2701
    %v2713 = vadd.f32 %v2502, %v2701
    %v2714 = vadd.f32 %v2506, %v2706
    %v2715 = vadd.f32 %v2508, %v2706
    %vm2716 = vcmp.ge.f32.partialorder %v2708, 0.0
    %vm2717 = vcmp.ge.f32.partialorder %v2709, 0.0
    %vm2718 = vcmp.ge.f32.partialorder %v2710, 0.0
    %vm2719 = vcmp.ge.f32.partialorder %v2711, 0.0
    %vm2720 = vcmp.ge.f32.partialorder %v2712, 0.0
    %vm2721 = vcmp.ge.f32.partialorder %v2713, 0.0
    %vm2722 = vcmp.ge.f32.partialorder %v2714, 0.0
    %vm2723 = vcmp.ge.f32.partialorder %v2715, 0.0
    %v2724 = vmul.f32 %v2708, 0.2
    %v2725 = vmul.f32 %v2709, 0.2
    %v2726 = vmul.f32 %v2710, 0.2
    %v2727 = vmul.f32 %v2711, 0.2
    %v2728 = vmul.f32 %v2712, 0.2
    %v2729 = vmul.f32 %v2713, 0.2
    %v2730 = vmul.f32 %v2714, 0.2
    %v2731 = vmul.f32 %v2715, 0.2
    %v2732 = vsel %vm2716, %v2708, %v2724
    %v2733 = vsel %vm2717, %v2709, %v2725
    %v2734 = vsel %vm2718, %v2710, %v2726
    %v2735 = vsel %vm2719, %v2711, %v2727
    %v2736 = vsel %vm2720, %v2712, %v2728
    %v2737 = vsel %vm2721, %v2713, %v2729
    %v2738 = vsel %vm2722, %v2714, %v2730
    %v2739 = vsel %vm2723, %v2715, %v2731
    %v2740 = vadd.f32 %v2732, %v1460
    %v2741 = vadd.f32 %v2733, %v1461
    %v2742 = vadd.f32 %v2734, %v1462
    %v2743 = vadd.f32 %v2735, %v1463
    %v2744 = vadd.f32 %v2736, %v1464
    %v2745 = vadd.f32 %v2737, %v1465
    %v2746 = vadd.f32 %v2738, %v1466
    %v2747 = vadd.f32 %v2739, %v1467
    %2749 = vset.pattern.permute.xlu0 0
    %2750 = vperm.xlu0 %2749, %v100
    %v2751 = vpop.permute.xlu0 %2750
    %2754 = vset.pattern.permute.xlu0 0
    %2755 = vperm.xlu0 %2754, %v101
    %v2756 = vpop.permute.xlu0 %2755
    %2759 = vset.pattern.permute.xlu0 0
    %2760 = vperm.xlu0 %2759, %v102
    %v2761 = vpop.permute.xlu0 %2760
    %2764 = vset.pattern.permute.xlu0 0
    %2765 = vperm.xlu0 %2764, %v103
    %v2766 = vpop.permute.xlu0 %2765
    %v2768 = vmul.f32 %v2740, %v2751
    %v2769 = vmul.f32 %v2741, %v2751
    %v2770 = vmul.f32 %v2742, %v2756
    %v2771 = vmul.f32 %v2743, %v2756
    %v2772 = vmul.f32 %v2744, %v2761
    %v2773 = vmul.f32 %v2745, %v2761
    %v2774 = vmul.f32 %v2746, %v2766
    %v2775 = vmul.f32 %v2747, %v2766
    %2777 = vset.pattern.permute.xlu0 0
    %2778 = vperm.xlu0 %2777, %v104
    %v2779 = vpop.permute.xlu0 %2778
    %2782 = vset.pattern.permute.xlu0 0
    %2783 = vperm.xlu0 %2782, %v105
    %v2784 = vpop.permute.xlu0 %2783
    %2787 = vset.pattern.permute.xlu0 0
    %2788 = vperm.xlu0 %2787, %v106
    %v2789 = vpop.permute.xlu0 %2788
    %2792 = vset.pattern.permute.xlu0 0
    %2793 = vperm.xlu0 %2792, %v107
    %v2794 = vpop.permute.xlu0 %2793
    %v2796 = vadd.f32 %v2768, %v2779
    %v2797 = vadd.f32 %v2769, %v2779
    %v2798 = vadd.f32 %v2770, %v2784
    %v2799 = vadd.f32 %v2771, %v2784
    %v2800 = vadd.f32 %v2772, %v2789
    %v2801 = vadd.f32 %v2773, %v2789
    %v2802 = vadd.f32 %v2774, %v2794
    %v2803 = vadd.f32 %v2775, %v2794
    %v2804 = vadd.f32 %v2666, %v2691
    %v2805 = vadd.f32 %v2668, %v2691
    %v2806 = vadd.f32 %v2672, %v2696
    %v2807 = vadd.f32 %v2674, %v2696
    %v2808 = vadd.f32 %v2678, %v2701
    %v2809 = vadd.f32 %v2680, %v2701
    %v2810 = vadd.f32 %v2684, %v2706
    %v2811 = vadd.f32 %v2686, %v2706
    %vm2812 = vcmp.ge.f32.partialorder %v2804, 0.0
    %vm2813 = vcmp.ge.f32.partialorder %v2805, 0.0
    %vm2814 = vcmp.ge.f32.partialorder %v2806, 0.0
    %vm2815 = vcmp.ge.f32.partialorder %v2807, 0.0
    %vm2816 = vcmp.ge.f32.partialorder %v2808, 0.0
    %vm2817 = vcmp.ge.f32.partialorder %v2809, 0.0
    %vm2818 = vcmp.ge.f32.partialorder %v2810, 0.0
    %vm2819 = vcmp.ge.f32.partialorder %v2811, 0.0
    %v2820 = vmul.f32 %v2804, 0.2
    %v2821 = vmul.f32 %v2805, 0.2
    %v2822 = vmul.f32 %v2806, 0.2
    %v2823 = vmul.f32 %v2807, 0.2
    %v2824 = vmul.f32 %v2808, 0.2
    %v2825 = vmul.f32 %v2809, 0.2
    %v2826 = vmul.f32 %v2810, 0.2
    %v2827 = vmul.f32 %v2811, 0.2
    %v2828 = vsel %vm2812, %v2804, %v2820
    %v2829 = vsel %vm2813, %v2805, %v2821
    %v2830 = vsel %vm2814, %v2806, %v2822
    %v2831 = vsel %vm2815, %v2807, %v2823
    %v2832 = vsel %vm2816, %v2808, %v2824
    %v2833 = vsel %vm2817, %v2809, %v2825
    %v2834 = vsel %vm2818, %v2810, %v2826
    %v2835 = vsel %vm2819, %v2811, %v2827
    %v2836 = vadd.f32 %v2828, %v1500
    %v2837 = vadd.f32 %v2829, %v1501
    %v2838 = vadd.f32 %v2830, %v1502
    %v2839 = vadd.f32 %v2831, %v1503
    %v2840 = vadd.f32 %v2832, %v1504
    %v2841 = vadd.f32 %v2833, %v1505
    %v2842 = vadd.f32 %v2834, %v1506
    %v2843 = vadd.f32 %v2835, %v1507
    %v2844 = vmul.f32 %v2836, %v2751
    %v2845 = vmul.f32 %v2837, %v2751
    %v2846 = vmul.f32 %v2838, %v2756
    %v2847 = vmul.f32 %v2839, %v2756
    %v2848 = vmul.f32 %v2840, %v2761
    %v2849 = vmul.f32 %v2841, %v2761
    %v2850 = vmul.f32 %v2842, %v2766
    %v2851 = vmul.f32 %v2843, %v2766
    %v2852 = vadd.f32 %v2844, %v2779
    %v2853 = vadd.f32 %v2845, %v2779
    %v2854 = vadd.f32 %v2846, %v2784
    %v2855 = vadd.f32 %v2847, %v2784
    %v2856 = vadd.f32 %v2848, %v2789
    %v2857 = vadd.f32 %v2849, %v2789
    %v2858 = vadd.f32 %v2850, %v2794
    %v2859 = vadd.f32 %v2851, %v2794
    %v2860 = vld [vmem:[#allocation8] sm:$0xff]
    %v2861 = vld [vmem:[#allocation8 + $0x8] sm:$0xff]
    %v2862 = vld [vmem:[#allocation8 + $0x10] sm:$0xff]
    %v2863 = vld [vmem:[#allocation8 + $0x18] sm:$0xff]
    %v2864 = vld [vmem:[#allocation8 + $0x20] sm:$0xff]
    %v2865 = vld [vmem:[#allocation8 + $0x28] sm:$0xff]
    %v2866 = vld [vmem:[#allocation8 + $0x30] sm:$0xff]
    %v2867 = vld [vmem:[#allocation8 + $0x38] sm:$0xff]
    %v2868 = vld [vmem:[#allocation8 + $0x40] sm:$0xff]
    %v2869 = vld [vmem:[#allocation8 + $0x48] sm:$0xff]
    %v2870 = vld [vmem:[#allocation8 + $0x50] sm:$0xff]
    %v2871 = vld [vmem:[#allocation8 + $0x58] sm:$0xff]
    %2872 = vrot.lane.b32.xlu0 %v2796, 17
    %v2873 = vpop.permute.xlu0 %2872
    %2874 = vrot.lane.b32.xlu0 %v2798, 17
    %v2875 = vpop.permute.xlu0 %2874
    %2876 = vrot.lane.b32.xlu0 %v2800, 17
    %v2877 = vpop.permute.xlu0 %2876
    %2878 = vrot.lane.b32.xlu0 %v2802, 17
    %v2879 = vpop.permute.xlu0 %2878
    %2880 = vrot.lane.b32.xlu0 %v2797, 17
    %v2881 = vpop.permute.xlu0 %2880
    %2882 = vrot.lane.b32.xlu0 %v2799, 17
    %v2883 = vpop.permute.xlu0 %2882
    %2884 = vrot.lane.b32.xlu0 %v2801, 17
    %v2885 = vpop.permute.xlu0 %2884
    %2886 = vrot.lane.b32.xlu0 %v2803, 17
    %v2887 = vpop.permute.xlu0 %2886
    %v2888 = vsel %vm159, %v2873, %v2881
    %v2889 = vsel %vm159, %v2875, %v2883
    %v2890 = vsel %vm159, %v2877, %v2885
    %v2891 = vsel %vm159, %v2879, %v2887
    %v2892 = vsel %vm159, %v2881, %v2873
    %v2893 = vsel %vm159, %v2883, %v2875
    %v2894 = vsel %vm159, %v2885, %v2877
    %v2895 = vsel %vm159, %v2887, %v2879
    %v2896 = vmul.f32 %v2892, %v172
    %v2897 = vmul.f32 %v2888, %v176
    %v2898 = vmul.f32 %v2893, %v172
    %v2899 = vmul.f32 %v2889, %v176
    %v2900 = vmul.f32 %v2894, %v172
    %v2901 = vmul.f32 %v2890, %v176
    %v2902 = vmul.f32 %v2895, %v172
    %v2903 = vmul.f32 %v2891, %v176
    %2904 = vst [vmem:[#allocation2] sm:$0xff] %v2896
    %2905 = vst [vmem:[#allocation2 + $0x8] sm:$0xff] %v2897
    %2906 = vst [vmem:[#allocation2 + $0x20] sm:$0xff] %v2898
    %2907 = vst [vmem:[#allocation2 + $0x28] sm:$0xff] %v2899
    %2908 = vst [vmem:[#allocation2 + $0x40] sm:$0xff] %v2900
    %2909 = vst [vmem:[#allocation2 + $0x48] sm:$0xff] %v2901
    %2910 = vst [vmem:[#allocation2 + $0x60] sm:$0xff] %v2902
    %2911 = vst [vmem:[#allocation2 + $0x68] sm:$0xff] %v2903
    %2912 = vrot.lane.b32.xlu0 %v2796, 16
    %v2913 = vpop.permute.xlu0 %2912
    %2914 = vrot.lane.b32.xlu0 %v2798, 16
    %v2915 = vpop.permute.xlu0 %2914
    %2916 = vrot.lane.b32.xlu0 %v2800, 16
    %v2917 = vpop.permute.xlu0 %2916
    %2918 = vrot.lane.b32.xlu0 %v2802, 16
    %v2919 = vpop.permute.xlu0 %2918
    %2920 = vrot.lane.b32.xlu0 %v2797, 16
    %v2921 = vpop.permute.xlu0 %2920
    %2922 = vrot.lane.b32.xlu0 %v2799, 16
    %v2923 = vpop.permute.xlu0 %2922
    %2924 = vrot.lane.b32.xlu0 %v2801, 16
    %v2925 = vpop.permute.xlu0 %2924
    %2926 = vrot.lane.b32.xlu0 %v2803, 16
    %v2927 = vpop.permute.xlu0 %2926
    %v2928 = vsel %vm211, %v2913, %v2921
    %v2929 = vsel %vm211, %v2915, %v2923
    %v2930 = vsel %vm211, %v2917, %v2925
    %v2931 = vsel %vm211, %v2919, %v2927
    %v2932 = vsel %vm211, %v2921, %v2913
    %v2933 = vsel %vm211, %v2923, %v2915
    %v2934 = vsel %vm211, %v2925, %v2917
    %v2935 = vsel %vm211, %v2927, %v2919
    %v2936 = vmul.f32 %v2932, %v224
    %v2937 = vmul.f32 %v2928, %v228
    %v2938 = vmul.f32 %v2933, %v224
    %v2939 = vmul.f32 %v2929, %v228
    %v2940 = vmul.f32 %v2934, %v224
    %v2941 = vmul.f32 %v2930, %v228
    %v2942 = vmul.f32 %v2935, %v224
    %v2943 = vmul.f32 %v2931, %v228
    %2944 = vst [vmem:[#allocation2 + $0x80] sm:$0xff] %v2936
    %2945 = vst [vmem:[#allocation2 + $0x88] sm:$0xff] %v2937
    %2946 = vst [vmem:[#allocation2 + $0xa0] sm:$0xff] %v2938
    %2947 = vst [vmem:[#allocation2 + $0xa8] sm:$0xff] %v2939
    %2948 = vst [vmem:[#allocation2 + $0xc0] sm:$0xff] %v2940
    %2949 = vst [vmem:[#allocation2 + $0xc8] sm:$0xff] %v2941
    %2950 = vst [vmem:[#allocation2 + $0xe0] sm:$0xff] %v2942
    %2951 = vst [vmem:[#allocation2 + $0xe8] sm:$0xff] %v2943
    %2952 = vrot.lane.b32.xlu0 %v2796, 15
    %v2953 = vpop.permute.xlu0 %2952
    %2954 = vrot.lane.b32.xlu0 %v2798, 15
    %v2955 = vpop.permute.xlu0 %2954
    %2956 = vrot.lane.b32.xlu0 %v2800, 15
    %v2957 = vpop.permute.xlu0 %2956
    %2958 = vrot.lane.b32.xlu0 %v2802, 15
    %v2959 = vpop.permute.xlu0 %2958
    %2960 = vrot.lane.b32.xlu0 %v2797, 15
    %v2961 = vpop.permute.xlu0 %2960
    %2962 = vrot.lane.b32.xlu0 %v2799, 15
    %v2963 = vpop.permute.xlu0 %2962
    %2964 = vrot.lane.b32.xlu0 %v2801, 15
    %v2965 = vpop.permute.xlu0 %2964
    %2966 = vrot.lane.b32.xlu0 %v2803, 15
    %v2967 = vpop.permute.xlu0 %2966
    %v2968 = vsel %vm263, %v2953, %v2961
    %v2969 = vsel %vm263, %v2955, %v2963
    %v2970 = vsel %vm263, %v2957, %v2965
    %v2971 = vsel %vm263, %v2959, %v2967
    %v2972 = vsel %vm263, %v2961, %v2953
    %v2973 = vsel %vm263, %v2963, %v2955
    %v2974 = vsel %vm263, %v2965, %v2957
    %v2975 = vsel %vm263, %v2967, %v2959
    %v2976 = vmul.f32 %v2972, %v276
    %v2977 = vmul.f32 %v2968, %v280
    %v2978 = vmul.f32 %v2973, %v276
    %v2979 = vmul.f32 %v2969, %v280
    %v2980 = vmul.f32 %v2974, %v276
    %v2981 = vmul.f32 %v2970, %v280
    %v2982 = vmul.f32 %v2975, %v276
    %v2983 = vmul.f32 %v2971, %v280
    %2984 = vst [vmem:[#allocation2 + $0x100] sm:$0xff] %v2976
    %2985 = vst [vmem:[#allocation2 + $0x108] sm:$0xff] %v2977
    %2986 = vst [vmem:[#allocation2 + $0x120] sm:$0xff] %v2978
    %2987 = vst [vmem:[#allocation2 + $0x128] sm:$0xff] %v2979
    %2988 = vst [vmem:[#allocation2 + $0x140] sm:$0xff] %v2980
    %2989 = vst [vmem:[#allocation2 + $0x148] sm:$0xff] %v2981
    %2990 = vst [vmem:[#allocation2 + $0x160] sm:$0xff] %v2982
    %2991 = vst [vmem:[#allocation2 + $0x168] sm:$0xff] %v2983
    %2992 = vrot.lane.b32.xlu0 %v2796, 1
    %v2993 = vpop.permute.xlu0 %2992
    %2994 = vrot.lane.b32.xlu0 %v2798, 1
    %v2995 = vpop.permute.xlu0 %2994
    %2996 = vrot.lane.b32.xlu0 %v2800, 1
    %v2997 = vpop.permute.xlu0 %2996
    %2998 = vrot.lane.b32.xlu0 %v2802, 1
    %v2999 = vpop.permute.xlu0 %2998
    %3000 = vrot.lane.b32.xlu0 %v2797, 1
    %v3001 = vpop.permute.xlu0 %3000
    %3002 = vrot.lane.b32.xlu0 %v2799, 1
    %v3003 = vpop.permute.xlu0 %3002
    %3004 = vrot.lane.b32.xlu0 %v2801, 1
    %v3005 = vpop.permute.xlu0 %3004
    %3006 = vrot.lane.b32.xlu0 %v2803, 1
    %v3007 = vpop.permute.xlu0 %3006
    %v3008 = vsel %vm315, %v2993, %v3001
    %v3009 = vsel %vm315, %v2995, %v3003
    %v3010 = vsel %vm315, %v2997, %v3005
    %v3011 = vsel %vm315, %v2999, %v3007
    %v3012 = vsel %vm315, %v3001, %v2993
    %v3013 = vsel %vm315, %v3003, %v2995
    %v3014 = vsel %vm315, %v3005, %v2997
    %v3015 = vsel %vm315, %v3007, %v2999
    %v3016 = vmul.f32 %v3012, %v328
    %v3017 = vmul.f32 %v3008, %v332
    %v3018 = vmul.f32 %v3013, %v328
    %v3019 = vmul.f32 %v3009, %v332
    %v3020 = vmul.f32 %v3014, %v328
    %v3021 = vmul.f32 %v3010, %v332
    %v3022 = vmul.f32 %v3015, %v328
    %v3023 = vmul.f32 %v3011, %v332
    %3024 = vst [vmem:[#allocation2 + $0x180] sm:$0xff] %v3016
    %3025 = vst [vmem:[#allocation2 + $0x188] sm:$0xff] %v3017
    %3026 = vst [vmem:[#allocation2 + $0x1a0] sm:$0xff] %v3018
    %3027 = vst [vmem:[#allocation2 + $0x1a8] sm:$0xff] %v3019
    %3028 = vst [vmem:[#allocation2 + $0x1c0] sm:$0xff] %v3020
    %3029 = vst [vmem:[#allocation2 + $0x1c8] sm:$0xff] %v3021
    %3030 = vst [vmem:[#allocation2 + $0x1e0] sm:$0xff] %v3022
    %3031 = vst [vmem:[#allocation2 + $0x1e8] sm:$0xff] %v3023
    %3032 = vst [vmem:[#allocation2 + $0x200] sm:$0xff] %v2796
    %3033 = vst [vmem:[#allocation2 + $0x208] sm:$0xff] %v2797
    %3034 = vst [vmem:[#allocation2 + $0x220] sm:$0xff] %v2798
    %3035 = vst [vmem:[#allocation2 + $0x228] sm:$0xff] %v2799
    %3036 = vst [vmem:[#allocation2 + $0x240] sm:$0xff] %v2800
    %3037 = vst [vmem:[#allocation2 + $0x248] sm:$0xff] %v2801
    %3038 = vst [vmem:[#allocation2 + $0x260] sm:$0xff] %v2802
    %3039 = vst [vmem:[#allocation2 + $0x268] sm:$0xff] %v2803
    %3040 = vrot.lane.b32.xlu0 %v2796, 127
    %v3041 = vpop.permute.xlu0 %3040
    %3042 = vrot.lane.b32.xlu0 %v2798, 127
    %v3043 = vpop.permute.xlu0 %3042
    %3044 = vrot.lane.b32.xlu0 %v2800, 127
    %v3045 = vpop.permute.xlu0 %3044
    %3046 = vrot.lane.b32.xlu0 %v2802, 127
    %v3047 = vpop.permute.xlu0 %3046
    %3048 = vrot.lane.b32.xlu0 %v2797, 127
    %v3049 = vpop.permute.xlu0 %3048
    %3050 = vrot.lane.b32.xlu0 %v2799, 127
    %v3051 = vpop.permute.xlu0 %3050
    %3052 = vrot.lane.b32.xlu0 %v2801, 127
    %v3053 = vpop.permute.xlu0 %3052
    %3054 = vrot.lane.b32.xlu0 %v2803, 127
    %v3055 = vpop.permute.xlu0 %3054
    %v3056 = vsel %vm375, %v3041, %v3049
    %v3057 = vsel %vm375, %v3043, %v3051
    %v3058 = vsel %vm375, %v3045, %v3053
    %v3059 = vsel %vm375, %v3047, %v3055
    %v3060 = vsel %vm375, %v3049, %v3041
    %v3061 = vsel %vm375, %v3051, %v3043
    %v3062 = vsel %vm375, %v3053, %v3045
    %v3063 = vsel %vm375, %v3055, %v3047
    %v3064 = vmul.f32 %v3056, %v388
    %v3065 = vmul.f32 %v3060, %v392
    %v3066 = vmul.f32 %v3057, %v388
    %v3067 = vmul.f32 %v3061, %v392
    %v3068 = vmul.f32 %v3058, %v388
    %v3069 = vmul.f32 %v3062, %v392
    %v3070 = vmul.f32 %v3059, %v388
    %v3071 = vmul.f32 %v3063, %v392
    %3072 = vst [vmem:[#allocation2 + $0x280] sm:$0xff] %v3064
    %3073 = vst [vmem:[#allocation2 + $0x288] sm:$0xff] %v3065
    %3074 = vst [vmem:[#allocation2 + $0x2a0] sm:$0xff] %v3066
    %3075 = vst [vmem:[#allocation2 + $0x2a8] sm:$0xff] %v3067
    %3076 = vst [vmem:[#allocation2 + $0x2c0] sm:$0xff] %v3068
    %3077 = vst [vmem:[#allocation2 + $0x2c8] sm:$0xff] %v3069
    %3078 = vst [vmem:[#allocation2 + $0x2e0] sm:$0xff] %v3070
    %3079 = vst [vmem:[#allocation2 + $0x2e8] sm:$0xff] %v3071
    %3080 = vrot.lane.b32.xlu0 %v2796, 113
    %v3081 = vpop.permute.xlu0 %3080
    %3082 = vrot.lane.b32.xlu0 %v2798, 113
    %v3083 = vpop.permute.xlu0 %3082
    %3084 = vrot.lane.b32.xlu0 %v2800, 113
    %v3085 = vpop.permute.xlu0 %3084
    %3086 = vrot.lane.b32.xlu0 %v2802, 113
    %v3087 = vpop.permute.xlu0 %3086
    %3088 = vrot.lane.b32.xlu0 %v2797, 113
    %v3089 = vpop.permute.xlu0 %3088
    %3090 = vrot.lane.b32.xlu0 %v2799, 113
    %v3091 = vpop.permute.xlu0 %3090
    %3092 = vrot.lane.b32.xlu0 %v2801, 113
    %v3093 = vpop.permute.xlu0 %3092
    %3094 = vrot.lane.b32.xlu0 %v2803, 113
    %v3095 = vpop.permute.xlu0 %3094
    %v3096 = vsel %vm427, %v3081, %v3089
    %v3097 = vsel %vm427, %v3083, %v3091
    %v3098 = vsel %vm427, %v3085, %v3093
    %v3099 = vsel %vm427, %v3087, %v3095
    %v3100 = vsel %vm427, %v3089, %v3081
    %v3101 = vsel %vm427, %v3091, %v3083
    %v3102 = vsel %vm427, %v3093, %v3085
    %v3103 = vsel %vm427, %v3095, %v3087
    %v3104 = vmul.f32 %v3096, %v440
    %v3105 = vmul.f32 %v3100, %v444
    %v3106 = vmul.f32 %v3097, %v440
    %v3107 = vmul.f32 %v3101, %v444
    %v3108 = vmul.f32 %v3098, %v440
    %v3109 = vmul.f32 %v3102, %v444
    %v3110 = vmul.f32 %v3099, %v440
    %v3111 = vmul.f32 %v3103, %v444
    %3112 = vst [vmem:[#allocation2 + $0x300] sm:$0xff] %v3104
    %3113 = vst [vmem:[#allocation2 + $0x308] sm:$0xff] %v3105
    %3114 = vst [vmem:[#allocation2 + $0x320] sm:$0xff] %v3106
    %3115 = vst [vmem:[#allocation2 + $0x328] sm:$0xff] %v3107
    %3116 = vst [vmem:[#allocation2 + $0x340] sm:$0xff] %v3108
    %3117 = vst [vmem:[#allocation2 + $0x348] sm:$0xff] %v3109
    %3118 = vst [vmem:[#allocation2 + $0x360] sm:$0xff] %v3110
    %3119 = vst [vmem:[#allocation2 + $0x368] sm:$0xff] %v3111
    %3120 = vrot.lane.b32.xlu0 %v2796, 112
    %v3121 = vpop.permute.xlu0 %3120
    %3122 = vrot.lane.b32.xlu0 %v2798, 112
    %v3123 = vpop.permute.xlu0 %3122
    %3124 = vrot.lane.b32.xlu0 %v2800, 112
    %v3125 = vpop.permute.xlu0 %3124
    %3126 = vrot.lane.b32.xlu0 %v2802, 112
    %v3127 = vpop.permute.xlu0 %3126
    %3128 = vrot.lane.b32.xlu0 %v2797, 112
    %v3129 = vpop.permute.xlu0 %3128
    %3130 = vrot.lane.b32.xlu0 %v2799, 112
    %v3131 = vpop.permute.xlu0 %3130
    %3132 = vrot.lane.b32.xlu0 %v2801, 112
    %v3133 = vpop.permute.xlu0 %3132
    %3134 = vrot.lane.b32.xlu0 %v2803, 112
    %v3135 = vpop.permute.xlu0 %3134
    %v3136 = vsel %vm479, %v3121, %v3129
    %v3137 = vsel %vm479, %v3123, %v3131
    %v3138 = vsel %vm479, %v3125, %v3133
    %v3139 = vsel %vm479, %v3127, %v3135
    %v3140 = vsel %vm479, %v3129, %v3121
    %v3141 = vsel %vm479, %v3131, %v3123
    %v3142 = vsel %vm479, %v3133, %v3125
    %v3143 = vsel %vm479, %v3135, %v3127
    %v3144 = vmul.f32 %v3136, %v492
    %v3145 = vmul.f32 %v3140, %v496
    %v3146 = vmul.f32 %v3137, %v492
    %v3147 = vmul.f32 %v3141, %v496
    %v3148 = vmul.f32 %v3138, %v492
    %v3149 = vmul.f32 %v3142, %v496
    %v3150 = vmul.f32 %v3139, %v492
    %v3151 = vmul.f32 %v3143, %v496
    %3152 = vst [vmem:[#allocation2 + $0x380] sm:$0xff] %v3144
    %3153 = vst [vmem:[#allocation2 + $0x388] sm:$0xff] %v3145
    %3154 = vst [vmem:[#allocation2 + $0x3a0] sm:$0xff] %v3146
    %3155 = vst [vmem:[#allocation2 + $0x3a8] sm:$0xff] %v3147
    %3156 = vst [vmem:[#allocation2 + $0x3c0] sm:$0xff] %v3148
    %3157 = vst [vmem:[#allocation2 + $0x3c8] sm:$0xff] %v3149
    %3158 = vst [vmem:[#allocation2 + $0x3e0] sm:$0xff] %v3150
    %3159 = vst [vmem:[#allocation2 + $0x3e8] sm:$0xff] %v3151
    %3160 = vrot.lane.b32.xlu0 %v2796, 111
    %v3161 = vpop.permute.xlu0 %3160
    %3162 = vrot.lane.b32.xlu0 %v2798, 111
    %v3163 = vpop.permute.xlu0 %3162
    %3164 = vrot.lane.b32.xlu0 %v2800, 111
    %v3165 = vpop.permute.xlu0 %3164
    %3166 = vrot.lane.b32.xlu0 %v2802, 111
    %v3167 = vpop.permute.xlu0 %3166
    %3168 = vrot.lane.b32.xlu0 %v2797, 111
    %v3169 = vpop.permute.xlu0 %3168
    %3170 = vrot.lane.b32.xlu0 %v2799, 111
    %v3171 = vpop.permute.xlu0 %3170
    %3172 = vrot.lane.b32.xlu0 %v2801, 111
    %v3173 = vpop.permute.xlu0 %3172
    %3174 = vrot.lane.b32.xlu0 %v2803, 111
    %v3175 = vpop.permute.xlu0 %3174
    %v3176 = vsel %vm531, %v3161, %v3169
    %v3177 = vsel %vm531, %v3163, %v3171
    %v3178 = vsel %vm531, %v3165, %v3173
    %v3179 = vsel %vm531, %v3167, %v3175
    %v3180 = vsel %vm531, %v3169, %v3161
    %v3181 = vsel %vm531, %v3171, %v3163
    %v3182 = vsel %vm531, %v3173, %v3165
    %v3183 = vsel %vm531, %v3175, %v3167
    %v3184 = vmul.f32 %v3176, %v544
    %v3185 = vmul.f32 %v3180, %v548
    %v3186 = vmul.f32 %v3177, %v544
    %v3187 = vmul.f32 %v3181, %v548
    %v3188 = vmul.f32 %v3178, %v544
    %v3189 = vmul.f32 %v3182, %v548
    %v3190 = vmul.f32 %v3179, %v544
    %v3191 = vmul.f32 %v3183, %v548
    %3192 = vst [vmem:[#allocation2 + $0x400] sm:$0xff] %v3184
    %3193 = vst [vmem:[#allocation2 + $0x408] sm:$0xff] %v3185
    %3194 = vst [vmem:[#allocation2 + $0x420] sm:$0xff] %v3186
    %3195 = vst [vmem:[#allocation2 + $0x428] sm:$0xff] %v3187
    %3196 = vst [vmem:[#allocation2 + $0x440] sm:$0xff] %v3188
    %3197 = vst [vmem:[#allocation2 + $0x448] sm:$0xff] %v3189
    %3198 = vst [vmem:[#allocation2 + $0x460] sm:$0xff] %v3190
    %3199 = vst [vmem:[#allocation2 + $0x468] sm:$0xff] %v3191
    %3200 = vrot.lane.b32.xlu0 %v2852, 17
    %v3201 = vpop.permute.xlu0 %3200
    %3202 = vrot.lane.b32.xlu0 %v2854, 17
    %v3203 = vpop.permute.xlu0 %3202
    %3204 = vrot.lane.b32.xlu0 %v2856, 17
    %v3205 = vpop.permute.xlu0 %3204
    %3206 = vrot.lane.b32.xlu0 %v2858, 17
    %v3207 = vpop.permute.xlu0 %3206
    %3208 = vrot.lane.b32.xlu0 %v2853, 17
    %v3209 = vpop.permute.xlu0 %3208
    %3210 = vrot.lane.b32.xlu0 %v2855, 17
    %v3211 = vpop.permute.xlu0 %3210
    %3212 = vrot.lane.b32.xlu0 %v2857, 17
    %v3213 = vpop.permute.xlu0 %3212
    %3214 = vrot.lane.b32.xlu0 %v2859, 17
    %v3215 = vpop.permute.xlu0 %3214
    %v3216 = vsel %vm159, %v3201, %v3209
    %v3217 = vsel %vm159, %v3203, %v3211
    %v3218 = vsel %vm159, %v3205, %v3213
    %v3219 = vsel %vm159, %v3207, %v3215
    %v3220 = vsel %vm159, %v3209, %v3201
    %v3221 = vsel %vm159, %v3211, %v3203
    %v3222 = vsel %vm159, %v3213, %v3205
    %v3223 = vsel %vm159, %v3215, %v3207
    %v3224 = vmul.f32 %v3220, %v172
    %v3225 = vmul.f32 %v3216, %v176
    %v3226 = vmul.f32 %v3221, %v172
    %v3227 = vmul.f32 %v3217, %v176
    %v3228 = vmul.f32 %v3222, %v172
    %v3229 = vmul.f32 %v3218, %v176
    %v3230 = vmul.f32 %v3223, %v172
    %v3231 = vmul.f32 %v3219, %v176
    %3232 = vst [vmem:[#allocation2 + $0x10] sm:$0xff] %v3224
    %3233 = vst [vmem:[#allocation2 + $0x18] sm:$0xff] %v3225
    %3234 = vst [vmem:[#allocation2 + $0x30] sm:$0xff] %v3226
    %3235 = vst [vmem:[#allocation2 + $0x38] sm:$0xff] %v3227
    %3236 = vst [vmem:[#allocation2 + $0x50] sm:$0xff] %v3228
    %3237 = vst [vmem:[#allocation2 + $0x58] sm:$0xff] %v3229
    %3238 = vst [vmem:[#allocation2 + $0x70] sm:$0xff] %v3230
    %3239 = vst [vmem:[#allocation2 + $0x78] sm:$0xff] %v3231
    %3240 = vrot.lane.b32.xlu0 %v2852, 16
    %v3241 = vpop.permute.xlu0 %3240
    %3242 = vrot.lane.b32.xlu0 %v2854, 16
    %v3243 = vpop.permute.xlu0 %3242
    %3244 = vrot.lane.b32.xlu0 %v2856, 16
    %v3245 = vpop.permute.xlu0 %3244
    %3246 = vrot.lane.b32.xlu0 %v2858, 16
    %v3247 = vpop.permute.xlu0 %3246
    %3248 = vrot.lane.b32.xlu0 %v2853, 16
    %v3249 = vpop.permute.xlu0 %3248
    %3250 = vrot.lane.b32.xlu0 %v2855, 16
    %v3251 = vpop.permute.xlu0 %3250
    %3252 = vrot.lane.b32.xlu0 %v2857, 16
    %v3253 = vpop.permute.xlu0 %3252
    %3254 = vrot.lane.b32.xlu0 %v2859, 16
    %v3255 = vpop.permute.xlu0 %3254
    %v3256 = vsel %vm211, %v3241, %v3249
    %v3257 = vsel %vm211, %v3243, %v3251
    %v3258 = vsel %vm211, %v3245, %v3253
    %v3259 = vsel %vm211, %v3247, %v3255
    %v3260 = vsel %vm211, %v3249, %v3241
    %v3261 = vsel %vm211, %v3251, %v3243
    %v3262 = vsel %vm211, %v3253, %v3245
    %v3263 = vsel %vm211, %v3255, %v3247
    %v3264 = vmul.f32 %v3260, %v224
    %v3265 = vmul.f32 %v3256, %v228
    %v3266 = vmul.f32 %v3261, %v224
    %v3267 = vmul.f32 %v3257, %v228
    %v3268 = vmul.f32 %v3262, %v224
    %v3269 = vmul.f32 %v3258, %v228
    %v3270 = vmul.f32 %v3263, %v224
    %v3271 = vmul.f32 %v3259, %v228
    %3272 = vst [vmem:[#allocation2 + $0x90] sm:$0xff] %v3264
    %3273 = vst [vmem:[#allocation2 + $0x98] sm:$0xff] %v3265
    %3274 = vst [vmem:[#allocation2 + $0xb0] sm:$0xff] %v3266
    %3275 = vst [vmem:[#allocation2 + $0xb8] sm:$0xff] %v3267
    %3276 = vst [vmem:[#allocation2 + $0xd0] sm:$0xff] %v3268
    %3277 = vst [vmem:[#allocation2 + $0xd8] sm:$0xff] %v3269
    %3278 = vst [vmem:[#allocation2 + $0xf0] sm:$0xff] %v3270
    %3279 = vst [vmem:[#allocation2 + $0xf8] sm:$0xff] %v3271
    %3280 = vrot.lane.b32.xlu0 %v2852, 15
    %v3281 = vpop.permute.xlu0 %3280
    %3282 = vrot.lane.b32.xlu0 %v2854, 15
    %v3283 = vpop.permute.xlu0 %3282
    %3284 = vrot.lane.b32.xlu0 %v2856, 15
    %v3285 = vpop.permute.xlu0 %3284
    %3286 = vrot.lane.b32.xlu0 %v2858, 15
    %v3287 = vpop.permute.xlu0 %3286
    %3288 = vrot.lane.b32.xlu0 %v2853, 15
    %v3289 = vpop.permute.xlu0 %3288
    %3290 = vrot.lane.b32.xlu0 %v2855, 15
    %v3291 = vpop.permute.xlu0 %3290
    %3292 = vrot.lane.b32.xlu0 %v2857, 15
    %v3293 = vpop.permute.xlu0 %3292
    %3294 = vrot.lane.b32.xlu0 %v2859, 15
    %v3295 = vpop.permute.xlu0 %3294
    %v3296 = vsel %vm263, %v3281, %v3289
    %v3297 = vsel %vm263, %v3283, %v3291
    %v3298 = vsel %vm263, %v3285, %v3293
    %v3299 = vsel %vm263, %v3287, %v3295
    %v3300 = vsel %vm263, %v3289, %v3281
    %v3301 = vsel %vm263, %v3291, %v3283
    %v3302 = vsel %vm263, %v3293, %v3285
    %v3303 = vsel %vm263, %v3295, %v3287
    %v3304 = vmul.f32 %v3300, %v276
    %v3305 = vmul.f32 %v3296, %v280
    %v3306 = vmul.f32 %v3301, %v276
    %v3307 = vmul.f32 %v3297, %v280
    %v3308 = vmul.f32 %v3302, %v276
    %v3309 = vmul.f32 %v3298, %v280
    %v3310 = vmul.f32 %v3303, %v276
    %v3311 = vmul.f32 %v3299, %v280
    %3312 = vst [vmem:[#allocation2 + $0x110] sm:$0xff] %v3304
    %3313 = vst [vmem:[#allocation2 + $0x118] sm:$0xff] %v3305
    %3314 = vst [vmem:[#allocation2 + $0x130] sm:$0xff] %v3306
    %3315 = vst [vmem:[#allocation2 + $0x138] sm:$0xff] %v3307
    %3316 = vst [vmem:[#allocation2 + $0x150] sm:$0xff] %v3308
    %3317 = vst [vmem:[#allocation2 + $0x158] sm:$0xff] %v3309
    %3318 = vst [vmem:[#allocation2 + $0x170] sm:$0xff] %v3310
    %3319 = vst [vmem:[#allocation2 + $0x178] sm:$0xff] %v3311
    %3320 = vrot.lane.b32.xlu0 %v2852, 1
    %v3321 = vpop.permute.xlu0 %3320
    %3322 = vrot.lane.b32.xlu0 %v2854, 1
    %v3323 = vpop.permute.xlu0 %3322
    %3324 = vrot.lane.b32.xlu0 %v2856, 1
    %v3325 = vpop.permute.xlu0 %3324
    %3326 = vrot.lane.b32.xlu0 %v2858, 1
    %v3327 = vpop.permute.xlu0 %3326
    %3328 = vrot.lane.b32.xlu0 %v2853, 1
    %v3329 = vpop.permute.xlu0 %3328
    %3330 = vrot.lane.b32.xlu0 %v2855, 1
    %v3331 = vpop.permute.xlu0 %3330
    %3332 = vrot.lane.b32.xlu0 %v2857, 1
    %v3333 = vpop.permute.xlu0 %3332
    %3334 = vrot.lane.b32.xlu0 %v2859, 1
    %v3335 = vpop.permute.xlu0 %3334
    %v3336 = vsel %vm315, %v3321, %v3329
    %v3337 = vsel %vm315, %v3323, %v3331
    %v3338 = vsel %vm315, %v3325, %v3333
    %v3339 = vsel %vm315, %v3327, %v3335
    %v3340 = vsel %vm315, %v3329, %v3321
    %v3341 = vsel %vm315, %v3331, %v3323
    %v3342 = vsel %vm315, %v3333, %v3325
    %v3343 = vsel %vm315, %v3335, %v3327
    %v3344 = vmul.f32 %v3340, %v328
    %v3345 = vmul.f32 %v3336, %v332
    %v3346 = vmul.f32 %v3341, %v328
    %v3347 = vmul.f32 %v3337, %v332
    %v3348 = vmul.f32 %v3342, %v328
    %v3349 = vmul.f32 %v3338, %v332
    %v3350 = vmul.f32 %v3343, %v328
    %v3351 = vmul.f32 %v3339, %v332
    %3352 = vst [vmem:[#allocation2 + $0x190] sm:$0xff] %v3344
    %3353 = vst [vmem:[#allocation2 + $0x198] sm:$0xff] %v3345
    %3354 = vst [vmem:[#allocation2 + $0x1b0] sm:$0xff] %v3346
    %3355 = vst [vmem:[#allocation2 + $0x1b8] sm:$0xff] %v3347
    %3356 = vst [vmem:[#allocation2 + $0x1d0] sm:$0xff] %v3348
    %3357 = vst [vmem:[#allocation2 + $0x1d8] sm:$0xff] %v3349
    %3358 = vst [vmem:[#allocation2 + $0x1f0] sm:$0xff] %v3350
    %3359 = vst [vmem:[#allocation2 + $0x1f8] sm:$0xff] %v3351
    %3360 = vst [vmem:[#allocation2 + $0x210] sm:$0xff] %v2852
    %3361 = vst [vmem:[#allocation2 + $0x218] sm:$0xff] %v2853
    %3362 = vst [vmem:[#allocation2 + $0x230] sm:$0xff] %v2854
    %3363 = vst [vmem:[#allocation2 + $0x238] sm:$0xff] %v2855
    %3364 = vst [vmem:[#allocation2 + $0x250] sm:$0xff] %v2856
    %3365 = vst [vmem:[#allocation2 + $0x258] sm:$0xff] %v2857
    %3366 = vst [vmem:[#allocation2 + $0x270] sm:$0xff] %v2858
    %3367 = vst [vmem:[#allocation2 + $0x278] sm:$0xff] %v2859
    %3368 = vrot.lane.b32.xlu0 %v2852, 127
    %v3369 = vpop.permute.xlu0 %3368
    %3370 = vrot.lane.b32.xlu0 %v2854, 127
    %v3371 = vpop.permute.xlu0 %3370
    %3372 = vrot.lane.b32.xlu0 %v2856, 127
    %v3373 = vpop.permute.xlu0 %3372
    %3374 = vrot.lane.b32.xlu0 %v2858, 127
    %v3375 = vpop.permute.xlu0 %3374
    %3376 = vrot.lane.b32.xlu0 %v2853, 127
    %v3377 = vpop.permute.xlu0 %3376
    %3378 = vrot.lane.b32.xlu0 %v2855, 127
    %v3379 = vpop.permute.xlu0 %3378
    %3380 = vrot.lane.b32.xlu0 %v2857, 127
    %v3381 = vpop.permute.xlu0 %3380
    %3382 = vrot.lane.b32.xlu0 %v2859, 127
    %v3383 = vpop.permute.xlu0 %3382
    %v3384 = vsel %vm375, %v3369, %v3377
    %v3385 = vsel %vm375, %v3371, %v3379
    %v3386 = vsel %vm375, %v3373, %v3381
    %v3387 = vsel %vm375, %v3375, %v3383
    %v3388 = vsel %vm375, %v3377, %v3369
    %v3389 = vsel %vm375, %v3379, %v3371
    %v3390 = vsel %vm375, %v3381, %v3373
    %v3391 = vsel %vm375, %v3383, %v3375
    %v3392 = vmul.f32 %v3384, %v388
    %v3393 = vmul.f32 %v3388, %v392
    %v3394 = vmul.f32 %v3385, %v388
    %v3395 = vmul.f32 %v3389, %v392
    %v3396 = vmul.f32 %v3386, %v388
    %v3397 = vmul.f32 %v3390, %v392
    %v3398 = vmul.f32 %v3387, %v388
    %v3399 = vmul.f32 %v3391, %v392
    %3400 = vst [vmem:[#allocation2 + $0x290] sm:$0xff] %v3392
    %3401 = vst [vmem:[#allocation2 + $0x298] sm:$0xff] %v3393
    %3402 = vst [vmem:[#allocation2 + $0x2b0] sm:$0xff] %v3394
    %3403 = vst [vmem:[#allocation2 + $0x2b8] sm:$0xff] %v3395
    %3404 = vst [vmem:[#allocation2 + $0x2d0] sm:$0xff] %v3396
    %3405 = vst [vmem:[#allocation2 + $0x2d8] sm:$0xff] %v3397
    %3406 = vst [vmem:[#allocation2 + $0x2f0] sm:$0xff] %v3398
    %3407 = vst [vmem:[#allocation2 + $0x2f8] sm:$0xff] %v3399
    %3408 = vrot.lane.b32.xlu0 %v2852, 113
    %v3409 = vpop.permute.xlu0 %3408
    %3410 = vrot.lane.b32.xlu0 %v2854, 113
    %v3411 = vpop.permute.xlu0 %3410
    %3412 = vrot.lane.b32.xlu0 %v2856, 113
    %v3413 = vpop.permute.xlu0 %3412
    %3414 = vrot.lane.b32.xlu0 %v2858, 113
    %v3415 = vpop.permute.xlu0 %3414
    %3416 = vrot.lane.b32.xlu0 %v2853, 113
    %v3417 = vpop.permute.xlu0 %3416
    %3418 = vrot.lane.b32.xlu0 %v2855, 113
    %v3419 = vpop.permute.xlu0 %3418
    %3420 = vrot.lane.b32.xlu0 %v2857, 113
    %v3421 = vpop.permute.xlu0 %3420
    %3422 = vrot.lane.b32.xlu0 %v2859, 113
    %v3423 = vpop.permute.xlu0 %3422
    %v3424 = vsel %vm427, %v3409, %v3417
    %v3425 = vsel %vm427, %v3411, %v3419
    %v3426 = vsel %vm427, %v3413, %v3421
    %v3427 = vsel %vm427, %v3415, %v3423
    %v3428 = vsel %vm427, %v3417, %v3409
    %v3429 = vsel %vm427, %v3419, %v3411
    %v3430 = vsel %vm427, %v3421, %v3413
    %v3431 = vsel %vm427, %v3423, %v3415
    %v3432 = vmul.f32 %v3424, %v440
    %v3433 = vmul.f32 %v3428, %v444
    %v3434 = vmul.f32 %v3425, %v440
    %v3435 = vmul.f32 %v3429, %v444
    %v3436 = vmul.f32 %v3426, %v440
    %v3437 = vmul.f32 %v3430, %v444
    %v3438 = vmul.f32 %v3427, %v440
    %v3439 = vmul.f32 %v3431, %v444
    %3440 = vst [vmem:[#allocation2 + $0x310] sm:$0xff] %v3432
    %3441 = vst [vmem:[#allocation2 + $0x318] sm:$0xff] %v3433
    %3442 = vst [vmem:[#allocation2 + $0x330] sm:$0xff] %v3434
    %3443 = vst [vmem:[#allocation2 + $0x338] sm:$0xff] %v3435
    %3444 = vst [vmem:[#allocation2 + $0x350] sm:$0xff] %v3436
    %3445 = vst [vmem:[#allocation2 + $0x358] sm:$0xff] %v3437
    %3446 = vst [vmem:[#allocation2 + $0x370] sm:$0xff] %v3438
    %3447 = vst [vmem:[#allocation2 + $0x378] sm:$0xff] %v3439
    %3448 = vrot.lane.b32.xlu0 %v2852, 112
    %v3449 = vpop.permute.xlu0 %3448
    %3450 = vrot.lane.b32.xlu0 %v2854, 112
    %v3451 = vpop.permute.xlu0 %3450
    %3452 = vrot.lane.b32.xlu0 %v2856, 112
    %v3453 = vpop.permute.xlu0 %3452
    %3454 = vrot.lane.b32.xlu0 %v2858, 112
    %v3455 = vpop.permute.xlu0 %3454
    %3456 = vrot.lane.b32.xlu0 %v2853, 112
    %v3457 = vpop.permute.xlu0 %3456
    %3458 = vrot.lane.b32.xlu0 %v2855, 112
    %v3459 = vpop.permute.xlu0 %3458
    %3460 = vrot.lane.b32.xlu0 %v2857, 112
    %v3461 = vpop.permute.xlu0 %3460
    %3462 = vrot.lane.b32.xlu0 %v2859, 112
    %v3463 = vpop.permute.xlu0 %3462
    %v3464 = vsel %vm479, %v3449, %v3457
    %v3465 = vsel %vm479, %v3451, %v3459
    %v3466 = vsel %vm479, %v3453, %v3461
    %v3467 = vsel %vm479, %v3455, %v3463
    %v3468 = vsel %vm479, %v3457, %v3449
    %v3469 = vsel %vm479, %v3459, %v3451
    %v3470 = vsel %vm479, %v3461, %v3453
    %v3471 = vsel %vm479, %v3463, %v3455
    %v3472 = vmul.f32 %v3464, %v492
    %v3473 = vmul.f32 %v3468, %v496
    %v3474 = vmul.f32 %v3465, %v492
    %v3475 = vmul.f32 %v3469, %v496
    %v3476 = vmul.f32 %v3466, %v492
    %v3477 = vmul.f32 %v3470, %v496
    %v3478 = vmul.f32 %v3467, %v492
    %v3479 = vmul.f32 %v3471, %v496
    %3480 = vst [vmem:[#allocation2 + $0x390] sm:$0xff] %v3472
    %3481 = vst [vmem:[#allocation2 + $0x398] sm:$0xff] %v3473
    %3482 = vst [vmem:[#allocation2 + $0x3b0] sm:$0xff] %v3474
    %3483 = vst [vmem:[#allocation2 + $0x3b8] sm:$0xff] %v3475
    %3484 = vst [vmem:[#allocation2 + $0x3d0] sm:$0xff] %v3476
    %3485 = vst [vmem:[#allocation2 + $0x3d8] sm:$0xff] %v3477
    %3486 = vst [vmem:[#allocation2 + $0x3f0] sm:$0xff] %v3478
    %3487 = vst [vmem:[#allocation2 + $0x3f8] sm:$0xff] %v3479
    %3488 = vrot.lane.b32.xlu0 %v2852, 111
    %v3489 = vpop.permute.xlu0 %3488
    %3490 = vrot.lane.b32.xlu0 %v2854, 111
    %v3491 = vpop.permute.xlu0 %3490
    %3492 = vrot.lane.b32.xlu0 %v2856, 111
    %v3493 = vpop.permute.xlu0 %3492
    %3494 = vrot.lane.b32.xlu0 %v2858, 111
    %v3495 = vpop.permute.xlu0 %3494
    %3496 = vrot.lane.b32.xlu0 %v2853, 111
    %v3497 = vpop.permute.xlu0 %3496
    %3498 = vrot.lane.b32.xlu0 %v2855, 111
    %v3499 = vpop.permute.xlu0 %3498
    %3500 = vrot.lane.b32.xlu0 %v2857, 111
    %v3501 = vpop.permute.xlu0 %3500
    %3502 = vrot.lane.b32.xlu0 %v2859, 111
    %v3503 = vpop.permute.xlu0 %3502
    %v3504 = vsel %vm531, %v3489, %v3497
    %v3505 = vsel %vm531, %v3491, %v3499
    %v3506 = vsel %vm531, %v3493, %v3501
    %v3507 = vsel %vm531, %v3495, %v3503
    %v3508 = vsel %vm531, %v3497, %v3489
    %v3509 = vsel %vm531, %v3499, %v3491
    %v3510 = vsel %vm531, %v3501, %v3493
    %v3511 = vsel %vm531, %v3503, %v3495
    %v3512 = vmul.f32 %v3504, %v544
    %v3513 = vmul.f32 %v3508, %v548
    %v3514 = vmul.f32 %v3505, %v544
    %v3515 = vmul.f32 %v3509, %v548
    %v3516 = vmul.f32 %v3506, %v544
    %v3517 = vmul.f32 %v3510, %v548
    %v3518 = vmul.f32 %v3507, %v544
    %v3519 = vmul.f32 %v3511, %v548
    %3520 = vst [vmem:[#allocation2 + $0x410] sm:$0xff] %v3512
    %3521 = vst [vmem:[#allocation2 + $0x418] sm:$0xff] %v3513
    %3522 = vst [vmem:[#allocation2 + $0x430] sm:$0xff] %v3514
    %3523 = vst [vmem:[#allocation2 + $0x438] sm:$0xff] %v3515
    %3524 = vst [vmem:[#allocation2 + $0x450] sm:$0xff] %v3516
    %3525 = vst [vmem:[#allocation2 + $0x458] sm:$0xff] %v3517
    %3526 = vst [vmem:[#allocation2 + $0x470] sm:$0xff] %v3518
    %3527 = vst [vmem:[#allocation2 + $0x478] sm:$0xff] %v3519
    %v3528 = vld [vmem:[#allocation2] sm:$0xff]
    %v3529 = vld [vmem:[#allocation2 + $0x8] sm:$0xff]
    %v3530 = vld [vmem:[#allocation2 + $0x10] sm:$0xff]
    %v3531 = vld [vmem:[#allocation2 + $0x18] sm:$0xff]
    %v3532 = vld [vmem:[#allocation2 + $0x20] sm:$0xff]
    %v3533 = vld [vmem:[#allocation2 + $0x28] sm:$0xff]
    %v3534 = vld [vmem:[#allocation2 + $0x30] sm:$0xff]
    %v3535 = vld [vmem:[#allocation2 + $0x38] sm:$0xff]
    %v3536 = vld [vmem:[#allocation2 + $0x40] sm:$0xff]
    %v3537 = vld [vmem:[#allocation2 + $0x48] sm:$0xff]
    %v3538 = vld [vmem:[#allocation2 + $0x50] sm:$0xff]
    %v3539 = vld [vmem:[#allocation2 + $0x58] sm:$0xff]
    %v3540 = vld [vmem:[#allocation2 + $0x60] sm:$0xff]
    %v3541 = vld [vmem:[#allocation2 + $0x68] sm:$0xff]
    %v3542 = vld [vmem:[#allocation2 + $0x70] sm:$0xff]
    %v3543 = vld [vmem:[#allocation2 + $0x78] sm:$0xff]
    %v3544 = vld [vmem:[#allocation2 + $0x80] sm:$0xff]
    %v3545 = vld [vmem:[#allocation2 + $0x88] sm:$0xff]
    %v3546 = vld [vmem:[#allocation2 + $0x90] sm:$0xff]
    %v3547 = vld [vmem:[#allocation2 + $0x98] sm:$0xff]
    %v3548 = vld [vmem:[#allocation2 + $0xa0] sm:$0xff]
    %v3549 = vld [vmem:[#allocation2 + $0xa8] sm:$0xff]
    %v3550 = vld [vmem:[#allocation2 + $0xb0] sm:$0xff]
    %v3551 = vld [vmem:[#allocation2 + $0xb8] sm:$0xff]
    %v3552 = vld [vmem:[#allocation2 + $0xc0] sm:$0xff]
    %v3553 = vld [vmem:[#allocation2 + $0xc8] sm:$0xff]
    %v3554 = vld [vmem:[#allocation2 + $0xd0] sm:$0xff]
    %v3555 = vld [vmem:[#allocation2 + $0xd8] sm:$0xff]
    %v3556 = vld [vmem:[#allocation2 + $0xe0] sm:$0xff]
    %v3557 = vld [vmem:[#allocation2 + $0xe8] sm:$0xff]
    %v3558 = vld [vmem:[#allocation2 + $0xf0] sm:$0xff]
    %v3559 = vld [vmem:[#allocation2 + $0xf8] sm:$0xff]
    %v3560 = vld [vmem:[#allocation2 + $0x100] sm:$0xff]
    %v3561 = vld [vmem:[#allocation2 + $0x108] sm:$0xff]
    %v3562 = vld [vmem:[#allocation2 + $0x110] sm:$0xff]
    %v3563 = vld [vmem:[#allocation2 + $0x118] sm:$0xff]
    %v3564 = vld [vmem:[#allocation2 + $0x120] sm:$0xff]
    %v3565 = vld [vmem:[#allocation2 + $0x128] sm:$0xff]
    %v3566 = vld [vmem:[#allocation2 + $0x130] sm:$0xff]
    %v3567 = vld [vmem:[#allocation2 + $0x138] sm:$0xff]
    %v3568 = vld [vmem:[#allocation2 + $0x140] sm:$0xff]
    %v3569 = vld [vmem:[#allocation2 + $0x148] sm:$0xff]
    %v3570 = vld [vmem:[#allocation2 + $0x150] sm:$0xff]
    %v3571 = vld [vmem:[#allocation2 + $0x158] sm:$0xff]
    %v3572 = vld [vmem:[#allocation2 + $0x160] sm:$0xff]
    %v3573 = vld [vmem:[#allocation2 + $0x168] sm:$0xff]
    %v3574 = vld [vmem:[#allocation2 + $0x170] sm:$0xff]
    %v3575 = vld [vmem:[#allocation2 + $0x178] sm:$0xff]
    %v3576 = vld [vmem:[#allocation2 + $0x180] sm:$0xff]
    %v3577 = vld [vmem:[#allocation2 + $0x188] sm:$0xff]
    %v3578 = vld [vmem:[#allocation2 + $0x190] sm:$0xff]
    %v3579 = vld [vmem:[#allocation2 + $0x198] sm:$0xff]
    %v3580 = vld [vmem:[#allocation2 + $0x1a0] sm:$0xff]
    %v3581 = vld [vmem:[#allocation2 + $0x1a8] sm:$0xff]
    %v3582 = vld [vmem:[#allocation2 + $0x1b0] sm:$0xff]
    %v3583 = vld [vmem:[#allocation2 + $0x1b8] sm:$0xff]
    %v3584 = vld [vmem:[#allocation2 + $0x1c0] sm:$0xff]
    %v3585 = vld [vmem:[#allocation2 + $0x1c8] sm:$0xff]
    %v3586 = vld [vmem:[#allocation2 + $0x1d0] sm:$0xff]
    %v3587 = vld [vmem:[#allocation2 + $0x1d8] sm:$0xff]
    %v3588 = vld [vmem:[#allocation2 + $0x1e0] sm:$0xff]
    %v3589 = vld [vmem:[#allocation2 + $0x1e8] sm:$0xff]
    %v3590 = vld [vmem:[#allocation2 + $0x1f0] sm:$0xff]
    %v3591 = vld [vmem:[#allocation2 + $0x1f8] sm:$0xff]
    %v3592 = vld [vmem:[#allocation2 + $0x200] sm:$0xff]
    %v3593 = vld [vmem:[#allocation2 + $0x208] sm:$0xff]
    %v3594 = vld [vmem:[#allocation2 + $0x210] sm:$0xff]
    %v3595 = vld [vmem:[#allocation2 + $0x218] sm:$0xff]
    %v3596 = vld [vmem:[#allocation2 + $0x220] sm:$0xff]
    %v3597 = vld [vmem:[#allocation2 + $0x228] sm:$0xff]
    %v3598 = vld [vmem:[#allocation2 + $0x230] sm:$0xff]
    %v3599 = vld [vmem:[#allocation2 + $0x238] sm:$0xff]
    %v3600 = vld [vmem:[#allocation2 + $0x240] sm:$0xff]
    %v3601 = vld [vmem:[#allocation2 + $0x248] sm:$0xff]
    %v3602 = vld [vmem:[#allocation2 + $0x250] sm:$0xff]
    %v3603 = vld [vmem:[#allocation2 + $0x258] sm:$0xff]
    %v3604 = vld [vmem:[#allocation2 + $0x260] sm:$0xff]
    %v3605 = vld [vmem:[#allocation2 + $0x268] sm:$0xff]
    %v3606 = vld [vmem:[#allocation2 + $0x270] sm:$0xff]
    %v3607 = vld [vmem:[#allocation2 + $0x278] sm:$0xff]
    %v3608 = vld [vmem:[#allocation2 + $0x280] sm:$0xff]
    %v3609 = vld [vmem:[#allocation2 + $0x288] sm:$0xff]
    %v3610 = vld [vmem:[#allocation2 + $0x290] sm:$0xff]
    %v3611 = vld [vmem:[#allocation2 + $0x298] sm:$0xff]
    %v3612 = vld [vmem:[#allocation2 + $0x2a0] sm:$0xff]
    %v3613 = vld [vmem:[#allocation2 + $0x2a8] sm:$0xff]
    %v3614 = vld [vmem:[#allocation2 + $0x2b0] sm:$0xff]
    %v3615 = vld [vmem:[#allocation2 + $0x2b8] sm:$0xff]
    %v3616 = vld [vmem:[#allocation2 + $0x2c0] sm:$0xff]
    %v3617 = vld [vmem:[#allocation2 + $0x2c8] sm:$0xff]
    %v3618 = vld [vmem:[#allocation2 + $0x2d0] sm:$0xff]
    %v3619 = vld [vmem:[#allocation2 + $0x2d8] sm:$0xff]
    %v3620 = vld [vmem:[#allocation2 + $0x2e0] sm:$0xff]
    %v3621 = vld [vmem:[#allocation2 + $0x2e8] sm:$0xff]
    %v3622 = vld [vmem:[#allocation2 + $0x2f0] sm:$0xff]
    %v3623 = vld [vmem:[#allocation2 + $0x2f8] sm:$0xff]
    %v3624 = vld [vmem:[#allocation2 + $0x300] sm:$0xff]
    %v3625 = vld [vmem:[#allocation2 + $0x308] sm:$0xff]
    %v3626 = vld [vmem:[#allocation2 + $0x310] sm:$0xff]
    %v3627 = vld [vmem:[#allocation2 + $0x318] sm:$0xff]
    %v3628 = vld [vmem:[#allocation2 + $0x320] sm:$0xff]
    %v3629 = vld [vmem:[#allocation2 + $0x328] sm:$0xff]
    %v3630 = vld [vmem:[#allocation2 + $0x330] sm:$0xff]
    %v3631 = vld [vmem:[#allocation2 + $0x338] sm:$0xff]
    %v3632 = vld [vmem:[#allocation2 + $0x340] sm:$0xff]
    %v3633 = vld [vmem:[#allocation2 + $0x348] sm:$0xff]
    %v3634 = vld [vmem:[#allocation2 + $0x350] sm:$0xff]
    %v3635 = vld [vmem:[#allocation2 + $0x358] sm:$0xff]
    %v3636 = vld [vmem:[#allocation2 + $0x360] sm:$0xff]
    %v3637 = vld [vmem:[#allocation2 + $0x368] sm:$0xff]
    %v3638 = vld [vmem:[#allocation2 + $0x370] sm:$0xff]
    %v3639 = vld [vmem:[#allocation2 + $0x378] sm:$0xff]
    %v3640 = vld [vmem:[#allocation2 + $0x380] sm:$0xff]
    %v3641 = vld [vmem:[#allocation2 + $0x388] sm:$0xff]
    %v3642 = vld [vmem:[#allocation2 + $0x390] sm:$0xff]
    %v3643 = vld [vmem:[#allocation2 + $0x398] sm:$0xff]
    %v3644 = vld [vmem:[#allocation2 + $0x3a0] sm:$0xff]
    %v3645 = vld [vmem:[#allocation2 + $0x3a8] sm:$0xff]
    %v3646 = vld [vmem:[#allocation2 + $0x3b0] sm:$0xff]
    %v3647 = vld [vmem:[#allocation2 + $0x3b8] sm:$0xff]
    %v3648 = vld [vmem:[#allocation2 + $0x3c0] sm:$0xff]
    %v3649 = vld [vmem:[#allocation2 + $0x3c8] sm:$0xff]
    %v3650 = vld [vmem:[#allocation2 + $0x3d0] sm:$0xff]
    %v3651 = vld [vmem:[#allocation2 + $0x3d8] sm:$0xff]
    %v3652 = vld [vmem:[#allocation2 + $0x3e0] sm:$0xff]
    %v3653 = vld [vmem:[#allocation2 + $0x3e8] sm:$0xff]
    %v3654 = vld [vmem:[#allocation2 + $0x3f0] sm:$0xff]
    %v3655 = vld [vmem:[#allocation2 + $0x3f8] sm:$0xff]
    %v3656 = vld [vmem:[#allocation2 + $0x400] sm:$0xff]
    %v3657 = vld [vmem:[#allocation2 + $0x408] sm:$0xff]
    %v3658 = vld [vmem:[#allocation2 + $0x410] sm:$0xff]
    %v3659 = vld [vmem:[#allocation2 + $0x418] sm:$0xff]
    %v3660 = vld [vmem:[#allocation2 + $0x420] sm:$0xff]
    %v3661 = vld [vmem:[#allocation2 + $0x428] sm:$0xff]
    %v3662 = vld [vmem:[#allocation2 + $0x430] sm:$0xff]
    %v3663 = vld [vmem:[#allocation2 + $0x438] sm:$0xff]
    %v3664 = vld [vmem:[#allocation2 + $0x440] sm:$0xff]
    %v3665 = vld [vmem:[#allocation2 + $0x448] sm:$0xff]
    %v3666 = vld [vmem:[#allocation2 + $0x450] sm:$0xff]
    %v3667 = vld [vmem:[#allocation2 + $0x458] sm:$0xff]
    %v3668 = vld [vmem:[#allocation2 + $0x460] sm:$0xff]
    %v3669 = vld [vmem:[#allocation2 + $0x468] sm:$0xff]
    %v3670 = vld [vmem:[#allocation2 + $0x470] sm:$0xff]
    %v3671 = vld [vmem:[#allocation2 + $0x478] sm:$0xff]
    %v3673 = vsel %vm1039, %v2862, 0
    %v3676 = vsel %vm1039, %v2865, 0
    %v3679 = vsel %vm1039, %v2868, 0
    %v3682 = vsel %vm1039, %v2871, 0
    %3684 = vmatprep.subr.mxu0 %v3589
    %3685 = vmatpush1.msra.mxu0 %v3588
    %3686 = vmatprep.subr.mxu0 %v3585
    %3687 = vmatpush1.msra.mxu0 %v3584
    %3688 = vmatprep.subr.mxu0 %v3581
    %3689 = vmatpush1.msra.mxu0 %v3580
    %3690 = vmatprep.subr.mxu0 %v3577
    %3691 = vmatpush1.msra.mxu0 %v3576
    %3692 = vmatprep.subr.mxu0 %v3573
    %3693 = vmatpush1.msra.mxu0 %v3572
    %3694 = vmatprep.subr.mxu0 %v3569
    %3695 = vmatpush1.msra.mxu0 %v3568
    %3696 = vmatprep.subr.mxu0 %v3565
    %3697 = vmatpush1.msra.mxu0 %v3564
    %3698 = vmatprep.subr.mxu0 %v3561
    %3699 = vmatpush1.msra.mxu0 %v3560
    %3700 = vmatprep.subr.mxu0 %v3557
    %3701 = vmatpush1.msra.mxu0 %v3556
    %3702 = vmatprep.subr.mxu0 %v3553
    %3703 = vmatpush1.msra.mxu0 %v3552
    %3704 = vmatprep.subr.mxu0 %v3549
    %3705 = vmatpush1.msra.mxu0 %v3548
    %3706 = vmatprep.subr.mxu0 %v3545
    %3707 = vmatpush1.msra.mxu0 %v3544
    %3708 = vmatprep.subr.mxu0 %v3541
    %3709 = vmatpush1.msra.mxu0 %v3540
    %3710 = vmatprep.subr.mxu0 %v3537
    %3711 = vmatpush1.msra.mxu0 %v3536
    %3712 = vmatprep.subr.mxu0 %v3533
    %3713 = vmatpush1.msra.mxu0 %v3532
    %3714 = vmatprep.subr.mxu0 %v3529
    %3715 = vmatpush1.msra.mxu0 %v3528
    %3716 = vmatprep.subr.mxu0 %v3653
    %3717 = vmatpush2.msra.mxu0 %v3652
    %3718 = vmatprep.subr.mxu0 %v3649
    %3719 = vmatpush2.msra.mxu0 %v3648
    %3720 = vmatprep.subr.mxu0 %v3645
    %3721 = vmatpush2.msra.mxu0 %v3644
    %3722 = vmatprep.subr.mxu0 %v3641
    %3723 = vmatpush2.msra.mxu0 %v3640
    %3724 = vmatprep.subr.mxu0 %v3637
    %3725 = vmatpush2.msra.mxu0 %v3636
    %3726 = vmatprep.subr.mxu0 %v3633
    %3727 = vmatpush2.msra.mxu0 %v3632
    %3728 = vmatprep.subr.mxu0 %v3629
    %3729 = vmatpush2.msra.mxu0 %v3628
    %3730 = vmatprep.subr.mxu0 %v3625
    %3731 = vmatpush2.msra.mxu0 %v3624
    %3732 = vmatprep.subr.mxu0 %v3621
    %3733 = vmatpush2.msra.mxu0 %v3620
    %3734 = vmatprep.subr.mxu0 %v3617
    %3735 = vmatpush2.msra.mxu0 %v3616
    %3736 = vmatprep.subr.mxu0 %v3613
    %3737 = vmatpush2.msra.mxu0 %v3612
    %3738 = vmatprep.subr.mxu0 %v3609
    %3739 = vmatpush2.msra.mxu0 %v3608
    %3740 = vmatprep.subr.mxu0 %v3605
    %3741 = vmatpush2.msra.mxu0 %v3604
    %3742 = vmatprep.subr.mxu0 %v3601
    %3743 = vmatpush2.msra.mxu0 %v3600
    %3744 = vmatprep.subr.mxu0 %v3597
    %3745 = vmatpush2.msra.mxu0 %v3596
    %3746 = vmatprep.subr.mxu0 %v3593
    %3747 = vmatpush2.msra.mxu0 %v3592
    %3748 = vmatprep.mubr.f32.mxu0 %v2861
    %3749 = vmatmul.mubr.f32.gmra.mxu0 %v2860
    %v3750 = vpop.f32.mrf.mxu0
    %v3751 = vadd.f32 0.0, %v3750
    %v3752 = vpop.f32.mrf.mxu0
    %v3753 = vadd.f32 0.0, %v3752
    %3754 = vmatprep.mubr.f32.mxu0 %v2864
    %3755 = vmatmul.mubr.f32.gmra.mxu0 %v2863
    %v3756 = vpop.f32.mrf.mxu0
    %v3757 = vadd.f32 0.0, %v3756
    %v3758 = vpop.f32.mrf.mxu0
    %v3759 = vadd.f32 0.0, %v3758
    %3760 = vmatprep.mubr.f32.mxu0 %v2867
    %3761 = vmatmul.mubr.f32.gmra.mxu0 %v2866
    %v3762 = vpop.f32.mrf.mxu0
    %v3763 = vadd.f32 0.0, %v3762
    %v3764 = vpop.f32.mrf.mxu0
    %v3765 = vadd.f32 0.0, %v3764
    %3766 = vmatprep.mubr.f32.mxu0 %v2870
    %3767 = vmatmul.mubr.f32.gmra.mxu0 %v2869
    %v3768 = vpop.f32.mrf.mxu0
    %v3769 = vadd.f32 0.0, %v3768
    %v3770 = vpop.f32.mrf.mxu0
    %v3771 = vadd.f32 0.0, %v3770
    %3772 = vdwg.mxu0
    %3773 = vmatprep.subr.mxu0 0.0
    %3774 = vmatpush1.msra.mxu0 0.0
    %3775 = vmatprep.subr.mxu0 0.0
    %3776 = vmatpush1.msra.mxu0 0.0
    %3777 = vmatprep.subr.mxu0 0.0
    %3778 = vmatpush1.msra.mxu0 0.0
    %3779 = vmatprep.subr.mxu0 0.0
    %3780 = vmatpush1.msra.mxu0 0.0
    %3781 = vmatprep.subr.mxu0 0.0
    %3782 = vmatpush1.msra.mxu0 0.0
    %3783 = vmatprep.subr.mxu0 0.0
    %3784 = vmatpush1.msra.mxu0 0.0
    %3785 = vmatprep.subr.mxu0 0.0
    %3786 = vmatpush1.msra.mxu0 0.0
    %3787 = vmatprep.subr.mxu0 0.0
    %3788 = vmatpush1.msra.mxu0 0.0
    %3789 = vmatprep.subr.mxu0 0.0
    %3790 = vmatpush1.msra.mxu0 0.0
    %3791 = vmatprep.subr.mxu0 0.0
    %3792 = vmatpush1.msra.mxu0 0.0
    %3793 = vmatprep.subr.mxu0 0.0
    %3794 = vmatpush1.msra.mxu0 0.0
    %3795 = vmatprep.subr.mxu0 0.0
    %3796 = vmatpush1.msra.mxu0 0.0
    %3797 = vmatprep.subr.mxu0 %v3669
    %3798 = vmatpush1.msra.mxu0 %v3668
    %3799 = vmatprep.subr.mxu0 %v3665
    %3800 = vmatpush1.msra.mxu0 %v3664
    %3801 = vmatprep.subr.mxu0 %v3661
    %3802 = vmatpush1.msra.mxu0 %v3660
    %3803 = vmatprep.subr.mxu0 %v3657
    %3804 = vmatpush1.msra.mxu0 %v3656
    %3805 = vmatprep.subr.mxu0 0.0
    %3806 = vmatpush2.msra.mxu0 0.0
    %3807 = vmatprep.subr.mxu0 0.0
    %3808 = vmatpush2.msra.mxu0 0.0
    %3809 = vmatprep.subr.mxu0 0.0
    %3810 = vmatpush2.msra.mxu0 0.0
    %3811 = vmatprep.subr.mxu0 0.0
    %3812 = vmatpush2.msra.mxu0 0.0
    %3813 = vmatprep.subr.mxu0 0.0
    %3814 = vmatpush2.msra.mxu0 0.0
    %3815 = vmatprep.subr.mxu0 0.0
    %3816 = vmatpush2.msra.mxu0 0.0
    %3817 = vmatprep.subr.mxu0 0.0
    %3818 = vmatpush2.msra.mxu0 0.0
    %3819 = vmatprep.subr.mxu0 0.0
    %3820 = vmatpush2.msra.mxu0 0.0
    %3821 = vmatprep.subr.mxu0 0.0
    %3822 = vmatpush2.msra.mxu0 0.0
    %3823 = vmatprep.subr.mxu0 0.0
    %3824 = vmatpush2.msra.mxu0 0.0
    %3825 = vmatprep.subr.mxu0 0.0
    %3826 = vmatpush2.msra.mxu0 0.0
    %3827 = vmatprep.subr.mxu0 0.0
    %3828 = vmatpush2.msra.mxu0 0.0
    %3829 = vmatprep.subr.mxu0 0.0
    %3830 = vmatpush2.msra.mxu0 0.0
    %3831 = vmatprep.subr.mxu0 0.0
    %3832 = vmatpush2.msra.mxu0 0.0
    %3833 = vmatprep.subr.mxu0 0.0
    %3834 = vmatpush2.msra.mxu0 0.0
    %3835 = vmatprep.subr.mxu0 0.0
    %3836 = vmatpush2.msra.mxu0 0.0
    %3837 = vmatprep.mubr.f32.mxu0 0.0
    %3838 = vmatmul.mubr.f32.gmra.mxu0 %v3673
    %v3839 = vpop.f32.mrf.mxu0
    %v3840 = vadd.f32 %v3751, %v3839
    %v3841 = vpop.f32.mrf.mxu0
    %v3842 = vadd.f32 %v3753, %v3841
    %3843 = vmatprep.mubr.f32.mxu0 0.0
    %3844 = vmatmul.mubr.f32.gmra.mxu0 %v3676
    %v3845 = vpop.f32.mrf.mxu0
    %v3846 = vadd.f32 %v3757, %v3845
    %v3847 = vpop.f32.mrf.mxu0
    %v3848 = vadd.f32 %v3759, %v3847
    %3849 = vmatprep.mubr.f32.mxu0 0.0
    %3850 = vmatmul.mubr.f32.gmra.mxu0 %v3679
    %v3851 = vpop.f32.mrf.mxu0
    %v3852 = vadd.f32 %v3763, %v3851
    %v3853 = vpop.f32.mrf.mxu0
    %v3854 = vadd.f32 %v3765, %v3853
    %3855 = vmatprep.mubr.f32.mxu0 0.0
    %3856 = vmatmul.mubr.f32.gmra.mxu0 %v3682
    %v3857 = vpop.f32.mrf.mxu0
    %v3858 = vadd.f32 %v3769, %v3857
    %v3859 = vpop.f32.mrf.mxu0
    %v3860 = vadd.f32 %v3771, %v3859
    %3861 = vdwg.mxu0
    %3862 = vmatprep.subr.mxu0 %v3591
    %3863 = vmatpush1.msra.mxu0 %v3590
    %3864 = vmatprep.subr.mxu0 %v3587
    %3865 = vmatpush1.msra.mxu0 %v3586
    %3866 = vmatprep.subr.mxu0 %v3583
    %3867 = vmatpush1.msra.mxu0 %v3582
    %3868 = vmatprep.subr.mxu0 %v3579
    %3869 = vmatpush1.msra.mxu0 %v3578
    %3870 = vmatprep.subr.mxu0 %v3575
    %3871 = vmatpush1.msra.mxu0 %v3574
    %3872 = vmatprep.subr.mxu0 %v3571
    %3873 = vmatpush1.msra.mxu0 %v3570
    %3874 = vmatprep.subr.mxu0 %v3567
    %3875 = vmatpush1.msra.mxu0 %v3566
    %3876 = vmatprep.subr.mxu0 %v3563
    %3877 = vmatpush1.msra.mxu0 %v3562
    %3878 = vmatprep.subr.mxu0 %v3559
    %3879 = vmatpush1.msra.mxu0 %v3558
    %3880 = vmatprep.subr.mxu0 %v3555
    %3881 = vmatpush1.msra.mxu0 %v3554
    %3882 = vmatprep.subr.mxu0 %v3551
    %3883 = vmatpush1.msra.mxu0 %v3550
    %3884 = vmatprep.subr.mxu0 %v3547
    %3885 = vmatpush1.msra.mxu0 %v3546
    %3886 = vmatprep.subr.mxu0 %v3543
    %3887 = vmatpush1.msra.mxu0 %v3542
    %3888 = vmatprep.subr.mxu0 %v3539
    %3889 = vmatpush1.msra.mxu0 %v3538
    %3890 = vmatprep.subr.mxu0 %v3535
    %3891 = vmatpush1.msra.mxu0 %v3534
    %3892 = vmatprep.subr.mxu0 %v3531
    %3893 = vmatpush1.msra.mxu0 %v3530
    %3894 = vmatprep.subr.mxu0 %v3655
    %3895 = vmatpush2.msra.mxu0 %v3654
    %3896 = vmatprep.subr.mxu0 %v3651
    %3897 = vmatpush2.msra.mxu0 %v3650
    %3898 = vmatprep.subr.mxu0 %v3647
    %3899 = vmatpush2.msra.mxu0 %v3646
    %3900 = vmatprep.subr.mxu0 %v3643
    %3901 = vmatpush2.msra.mxu0 %v3642
    %3902 = vmatprep.subr.mxu0 %v3639
    %3903 = vmatpush2.msra.mxu0 %v3638
    %3904 = vmatprep.subr.mxu0 %v3635
    %3905 = vmatpush2.msra.mxu0 %v3634
    %3906 = vmatprep.subr.mxu0 %v3631
    %3907 = vmatpush2.msra.mxu0 %v3630
    %3908 = vmatprep.subr.mxu0 %v3627
    %3909 = vmatpush2.msra.mxu0 %v3626
    %3910 = vmatprep.subr.mxu0 %v3623
    %3911 = vmatpush2.msra.mxu0 %v3622
    %3912 = vmatprep.subr.mxu0 %v3619
    %3913 = vmatpush2.msra.mxu0 %v3618
    %3914 = vmatprep.subr.mxu0 %v3615
    %3915 = vmatpush2.msra.mxu0 %v3614
    %3916 = vmatprep.subr.mxu0 %v3611
    %3917 = vmatpush2.msra.mxu0 %v3610
    %3918 = vmatprep.subr.mxu0 %v3607
    %3919 = vmatpush2.msra.mxu0 %v3606
    %3920 = vmatprep.subr.mxu0 %v3603
    %3921 = vmatpush2.msra.mxu0 %v3602
    %3922 = vmatprep.subr.mxu0 %v3599
    %3923 = vmatpush2.msra.mxu0 %v3598
    %3924 = vmatprep.subr.mxu0 %v3595
    %3925 = vmatpush2.msra.mxu0 %v3594
    %3926 = vmatprep.mubr.f32.mxu0 %v2861
    %3927 = vmatmul.mubr.f32.gmra.mxu0 %v2860
    %v3928 = vpop.f32.mrf.mxu0
    %v3929 = vadd.f32 0.0, %v3928
    %v3930 = vpop.f32.mrf.mxu0
    %v3931 = vadd.f32 0.0, %v3930
    %3932 = vmatprep.mubr.f32.mxu0 %v2864
    %3933 = vmatmul.mubr.f32.gmra.mxu0 %v2863
    %v3934 = vpop.f32.mrf.mxu0
    %v3935 = vadd.f32 0.0, %v3934
    %v3936 = vpop.f32.mrf.mxu0
    %v3937 = vadd.f32 0.0, %v3936
    %3938 = vmatprep.mubr.f32.mxu0 %v2867
    %3939 = vmatmul.mubr.f32.gmra.mxu0 %v2866
    %v3940 = vpop.f32.mrf.mxu0
    %v3941 = vadd.f32 0.0, %v3940
    %v3942 = vpop.f32.mrf.mxu0
    %v3943 = vadd.f32 0.0, %v3942
    %3944 = vmatprep.mubr.f32.mxu0 %v2870
    %3945 = vmatmul.mubr.f32.gmra.mxu0 %v2869
    %v3946 = vpop.f32.mrf.mxu0
    %v3947 = vadd.f32 0.0, %v3946
    %v3948 = vpop.f32.mrf.mxu0
    %v3949 = vadd.f32 0.0, %v3948
    %3950 = vdwg.mxu0
    %3951 = vmatprep.subr.mxu0 0.0
    %3952 = vmatpush1.msra.mxu0 0.0
    %3953 = vmatprep.subr.mxu0 0.0
    %3954 = vmatpush1.msra.mxu0 0.0
    %3955 = vmatprep.subr.mxu0 0.0
    %3956 = vmatpush1.msra.mxu0 0.0
    %3957 = vmatprep.subr.mxu0 0.0
    %3958 = vmatpush1.msra.mxu0 0.0
    %3959 = vmatprep.subr.mxu0 0.0
    %3960 = vmatpush1.msra.mxu0 0.0
    %3961 = vmatprep.subr.mxu0 0.0
    %3962 = vmatpush1.msra.mxu0 0.0
    %3963 = vmatprep.subr.mxu0 0.0
    %3964 = vmatpush1.msra.mxu0 0.0
    %3965 = vmatprep.subr.mxu0 0.0
    %3966 = vmatpush1.msra.mxu0 0.0
    %3967 = vmatprep.subr.mxu0 0.0
    %3968 = vmatpush1.msra.mxu0 0.0
    %3969 = vmatprep.subr.mxu0 0.0
    %3970 = vmatpush1.msra.mxu0 0.0
    %3971 = vmatprep.subr.mxu0 0.0
    %3972 = vmatpush1.msra.mxu0 0.0
    %3973 = vmatprep.subr.mxu0 0.0
    %3974 = vmatpush1.msra.mxu0 0.0
    %3975 = vmatprep.subr.mxu0 %v3671
    %3976 = vmatpush1.msra.mxu0 %v3670
    %3977 = vmatprep.subr.mxu0 %v3667
    %3978 = vmatpush1.msra.mxu0 %v3666
    %3979 = vmatprep.subr.mxu0 %v3663
    %3980 = vmatpush1.msra.mxu0 %v3662
    %3981 = vmatprep.subr.mxu0 %v3659
    %3982 = vmatpush1.msra.mxu0 %v3658
    %3983 = vmatprep.subr.mxu0 0.0
    %3984 = vmatpush2.msra.mxu0 0.0
    %3985 = vmatprep.subr.mxu0 0.0
    %3986 = vmatpush2.msra.mxu0 0.0
    %3987 = vmatprep.subr.mxu0 0.0
    %3988 = vmatpush2.msra.mxu0 0.0
    %3989 = vmatprep.subr.mxu0 0.0
    %3990 = vmatpush2.msra.mxu0 0.0
    %3991 = vmatprep.subr.mxu0 0.0
    %3992 = vmatpush2.msra.mxu0 0.0
    %3993 = vmatprep.subr.mxu0 0.0
    %3994 = vmatpush2.msra.mxu0 0.0
    %3995 = vmatprep.subr.mxu0 0.0
    %3996 = vmatpush2.msra.mxu0 0.0
    %3997 = vmatprep.subr.mxu0 0.0
    %3998 = vmatpush2.msra.mxu0 0.0
    %3999 = vmatprep.subr.mxu0 0.0
    %4000 = vmatpush2.msra.mxu0 0.0
    %4001 = vmatprep.subr.mxu0 0.0
    %4002 = vmatpush2.msra.mxu0 0.0
    %4003 = vmatprep.subr.mxu0 0.0
    %4004 = vmatpush2.msra.mxu0 0.0
    %4005 = vmatprep.subr.mxu0 0.0
    %4006 = vmatpush2.msra.mxu0 0.0
    %4007 = vmatprep.subr.mxu0 0.0
    %4008 = vmatpush2.msra.mxu0 0.0
    %4009 = vmatprep.subr.mxu0 0.0
    %4010 = vmatpush2.msra.mxu0 0.0
    %4011 = vmatprep.subr.mxu0 0.0
    %4012 = vmatpush2.msra.mxu0 0.0
    %4013 = vmatprep.subr.mxu0 0.0
    %4014 = vmatpush2.msra.mxu0 0.0
    %4015 = vmatprep.mubr.f32.mxu0 0.0
    %4016 = vmatmul.mubr.f32.gmra.mxu0 %v3673
    %v4017 = vpop.f32.mrf.mxu0
    %v4018 = vadd.f32 %v3929, %v4017
    %v4019 = vpop.f32.mrf.mxu0
    %v4020 = vadd.f32 %v3931, %v4019
    %4021 = vmatprep.mubr.f32.mxu0 0.0
    %4022 = vmatmul.mubr.f32.gmra.mxu0 %v3676
    %v4023 = vpop.f32.mrf.mxu0
    %v4024 = vadd.f32 %v3935, %v4023
    %v4025 = vpop.f32.mrf.mxu0
    %v4026 = vadd.f32 %v3937, %v4025
    %4027 = vmatprep.mubr.f32.mxu0 0.0
    %4028 = vmatmul.mubr.f32.gmra.mxu0 %v3679
    %v4029 = vpop.f32.mrf.mxu0
    %v4030 = vadd.f32 %v3941, %v4029
    %v4031 = vpop.f32.mrf.mxu0
    %v4032 = vadd.f32 %v3943, %v4031
    %4033 = vmatprep.mubr.f32.mxu0 0.0
    %4034 = vmatmul.mubr.f32.gmra.mxu0 %v3682
    %v4035 = vpop.f32.mrf.mxu0
    %v4036 = vadd.f32 %v3947, %v4035
    %v4037 = vpop.f32.mrf.mxu0
    %v4038 = vadd.f32 %v3949, %v4037
    %4039 = vdwg.mxu0
    %4041 = vset.pattern.permute.xlu0 0
    %4042 = vperm.xlu0 %4041, %v108
    %v4043 = vpop.permute.xlu0 %4042
    %4046 = vset.pattern.permute.xlu0 0
    %4047 = vperm.xlu0 %4046, %v109
    %v4048 = vpop.permute.xlu0 %4047
    %4051 = vset.pattern.permute.xlu0 0
    %4052 = vperm.xlu0 %4051, %v110
    %v4053 = vpop.permute.xlu0 %4052
    %4056 = vset.pattern.permute.xlu0 0
    %4057 = vperm.xlu0 %4056, %v111
    %v4058 = vpop.permute.xlu0 %4057
    %v4060 = vadd.f32 %v3840, %v4043
    %v4061 = vadd.f32 %v3842, %v4043
    %v4062 = vadd.f32 %v3846, %v4048
    %v4063 = vadd.f32 %v3848, %v4048
    %v4064 = vadd.f32 %v3852, %v4053
    %v4065 = vadd.f32 %v3854, %v4053
    %v4066 = vadd.f32 %v3858, %v4058
    %v4067 = vadd.f32 %v3860, %v4058
    %vm4068 = vcmp.ge.f32.partialorder %v4060, 0.0
    %vm4069 = vcmp.ge.f32.partialorder %v4061, 0.0
    %vm4070 = vcmp.ge.f32.partialorder %v4062, 0.0
    %vm4071 = vcmp.ge.f32.partialorder %v4063, 0.0
    %vm4072 = vcmp.ge.f32.partialorder %v4064, 0.0
    %vm4073 = vcmp.ge.f32.partialorder %v4065, 0.0
    %vm4074 = vcmp.ge.f32.partialorder %v4066, 0.0
    %vm4075 = vcmp.ge.f32.partialorder %v4067, 0.0
    %v4076 = vmul.f32 %v4060, 0.2
    %v4077 = vmul.f32 %v4061, 0.2
    %v4078 = vmul.f32 %v4062, 0.2
    %v4079 = vmul.f32 %v4063, 0.2
    %v4080 = vmul.f32 %v4064, 0.2
    %v4081 = vmul.f32 %v4065, 0.2
    %v4082 = vmul.f32 %v4066, 0.2
    %v4083 = vmul.f32 %v4067, 0.2
    %v4084 = vsel %vm4068, %v4060, %v4076
    %v4085 = vsel %vm4069, %v4061, %v4077
    %v4086 = vsel %vm4070, %v4062, %v4078
    %v4087 = vsel %vm4071, %v4063, %v4079
    %v4088 = vsel %vm4072, %v4064, %v4080
    %v4089 = vsel %vm4073, %v4065, %v4081
    %v4090 = vsel %vm4074, %v4066, %v4082
    %v4091 = vsel %vm4075, %v4067, %v4083
    %4092 = vst [vmem:[#allocation9] sm:$0xff] %v4084
    %4093 = vst [vmem:[#allocation9 + $0x8] sm:$0xff] %v4085
    %4094 = vst [vmem:[#allocation9 + $0x10] sm:$0xff] %v4086
    %4095 = vst [vmem:[#allocation9 + $0x18] sm:$0xff] %v4087
    %4096 = vst [vmem:[#allocation9 + $0x20] sm:$0xff] %v4088
    %4097 = vst [vmem:[#allocation9 + $0x28] sm:$0xff] %v4089
    %4098 = vst [vmem:[#allocation9 + $0x30] sm:$0xff] %v4090
    %4099 = vst [vmem:[#allocation9 + $0x38] sm:$0xff] %v4091
    %v4100 = vadd.f32 %v4018, %v4043
    %v4101 = vadd.f32 %v4020, %v4043
    %v4102 = vadd.f32 %v4024, %v4048
    %v4103 = vadd.f32 %v4026, %v4048
    %v4104 = vadd.f32 %v4030, %v4053
    %v4105 = vadd.f32 %v4032, %v4053
    %v4106 = vadd.f32 %v4036, %v4058
    %v4107 = vadd.f32 %v4038, %v4058
    %vm4108 = vcmp.ge.f32.partialorder %v4100, 0.0
    %vm4109 = vcmp.ge.f32.partialorder %v4101, 0.0
    %vm4110 = vcmp.ge.f32.partialorder %v4102, 0.0
    %vm4111 = vcmp.ge.f32.partialorder %v4103, 0.0
    %vm4112 = vcmp.ge.f32.partialorder %v4104, 0.0
    %vm4113 = vcmp.ge.f32.partialorder %v4105, 0.0
    %vm4114 = vcmp.ge.f32.partialorder %v4106, 0.0
    %vm4115 = vcmp.ge.f32.partialorder %v4107, 0.0
    %v4116 = vmul.f32 %v4100, 0.2
    %v4117 = vmul.f32 %v4101, 0.2
    %v4118 = vmul.f32 %v4102, 0.2
    %v4119 = vmul.f32 %v4103, 0.2
    %v4120 = vmul.f32 %v4104, 0.2
    %v4121 = vmul.f32 %v4105, 0.2
    %v4122 = vmul.f32 %v4106, 0.2
    %v4123 = vmul.f32 %v4107, 0.2
    %v4124 = vsel %vm4108, %v4100, %v4116
    %v4125 = vsel %vm4109, %v4101, %v4117
    %v4126 = vsel %vm4110, %v4102, %v4118
    %v4127 = vsel %vm4111, %v4103, %v4119
    %v4128 = vsel %vm4112, %v4104, %v4120
    %v4129 = vsel %vm4113, %v4105, %v4121
    %v4130 = vsel %vm4114, %v4106, %v4122
    %v4131 = vsel %vm4115, %v4107, %v4123
    %s4132 = scalar_lea.vmem [#allocation9], 64
    %4133 = vst [vmem:[%s4132] sm:$0xff] %v4124
    %4134 = vst [vmem:[%s4132 + $0x8] sm:$0xff] %v4125
    %4135 = vst [vmem:[%s4132 + $0x10] sm:$0xff] %v4126
    %4136 = vst [vmem:[%s4132 + $0x18] sm:$0xff] %v4127
    %4137 = vst [vmem:[%s4132 + $0x20] sm:$0xff] %v4128
    %4138 = vst [vmem:[%s4132 + $0x28] sm:$0xff] %v4129
    %4139 = vst [vmem:[%s4132 + $0x30] sm:$0xff] %v4130
    %4140 = vst [vmem:[%s4132 + $0x38] sm:$0xff] %v4131
    // Predicated region
    $region54: #{tpu_custom_call.1} parent=1 // pred_check
      _
    $region55: #{tpu_custom_call.1} parent=1 // pred_check_branch
      %4142 = sbr.rel (0) target = $region57
    $region56: #{tpu_custom_call.1} parent=1 // pred_region
      %s4144 = ssub.s32 2048, 2048
      %4145 = vsyncadd [#allocation5], %s4144
      %s4146 = sshll.u32 [#allocation9], 4
      %s4147 = int_to_ptr.vmem [resolvable:$true] %s4146
      %4152 = dma.vmem_to_hbm [thread:$0]  %s4147, 2048, %s10, [#allocation5], 256, 256, 16
    $region57: #{tpu_custom_call.1} parent=1 // pred_fallthru
      _
    // Predicated region
    $region58: #{tpu_custom_call.1} parent=1 // pred_check
      _
    $region59: #{tpu_custom_call.1} parent=1 // pred_check_branch
      %4154 = sbr.rel (0) target = $region61
    $region60: #{tpu_custom_call.1} parent=1 // pred_region
      %4155 = dma.done [#allocation5], 2048
    $region61: #{tpu_custom_call.1} parent=1 // pred_fallthru
      _
    %4156 = vsyncpa [#allocation4], 1
    %4157 = vsyncpa [#allocation7], 1
    %4158 = vsyncpa [#allocation5], 1

</llo_original>
